<compile_context>
chip_gen: v6e
topology: v6e:2x2x1
jax: 0.10.0
libtpu: 0.0.40
codegen_flags: <defaults>
</compile_context>

<pallas_src>
import functools

import jax
import jax.numpy as jnp
import numpy as np
from jax.experimental import pallas as pl
from jax.experimental.pallas import tpu as pltpu


def _row_roll(x, shift):
    # Circular rotation along the row (sublane) axis with a NON-NEGATIVE shift.
    # Rows that wrap around the image are zeroed by the edge masks, so the
    # circular semantics never leak into the result.
    return jnp.roll(x, shift, axis=0)


def conv3x3_bn_stats_kernel(x_ref, w_ref, m_ref, scale_ref, shift_ref,
                            out_ref, sum_ref, ssq_ref,
                            *, height, width, fuse_bn_relu):
    # x_ref     : (H*W, Cin) f32   one image, channels on the lane axis
    # w_ref     : (9*Cin, Cout) bf16  per-tap weights, rows ordered (tap, ci)
    # m_ref     : (H*W, 9) f32     per-row tap validity masks (image borders)
    # scale_ref : (1, Cin) f32     BN scale of the PREVIOUS layer (if fused)
    # shift_ref : (1, Cin) f32     BN shift of the PREVIOUS layer (if fused)
    # out_ref   : (H*W, Cout) f32  un-normalized conv output
    # sum_ref   : (1, Cout) f32    per-image per-channel sum     (BN partial)
    # ssq_ref   : (1, Cout) f32    per-image per-channel sum sq  (BN partial)
    hw = height * width
    cin = x_ref.shape[-1]

    x = x_ref[...]                                          # (HW, Cin) f32
    if fuse_bn_relu:
        # BatchNorm affine (precomputed from batch stats) + ReLU of the
        # previous conv, fused in front of this conv.  f32 VPU math.
        x = jnp.maximum(x * scale_ref[...] + shift_ref[...], 0.0)

    acc = jnp.zeros(out_ref.shape, jnp.float32)             # (HW, Cout)
    k = 0
    for dy in (-1, 0, 1):
        for dx in (-1, 0, 1):
            off = dy * width + dx                           # flat row offset
            wk = w_ref[k * cin:(k + 1) * cin, :]            # (Cin, Cout) bf16
            if off == 0:
                sb = x.astype(jnp.bfloat16)                 # center tap: always valid
            else:
                shifted = _row_roll(x, (hw - off) % hw)     # shifted[r] = x[r + off]
                # Fold the per-row validity mask into the bf16 MXU operand:
                # rows whose tap reads outside the image contribute exactly 0.
                sb = (shifted * m_ref[:, k:k + 1]).astype(jnp.bfloat16)
            acc = acc + jnp.dot(sb, wk, preferred_element_type=jnp.float32)
            k += 1

    out_ref[...] = acc
    # Sum-then-fold BN statistics: channels are already the lane axis, so the
    # per-channel partials are plain column sums (no stats matmuls).
    sum_ref[...] = jnp.sum(acc, axis=0, keepdims=True)
    ssq_ref[...] = jnp.sum(acc * acc, axis=0, keepdims=True)


def bn_relu_kernel(x_ref, scale_ref, shift_ref, out_ref):
    out_ref[...] = jnp.maximum(x_ref[...] * scale_ref[...] + shift_ref[...], 0.0)


def _pack_taps(w_oihw):
    """OIHW 3x3 weight -> (9*Cin, Cout) bf16, rows ordered (ky, kx, ci)."""
    cout, cin = w_oihw.shape[0], w_oihw.shape[1]
    return (jnp.transpose(w_oihw, (2, 3, 1, 0))             # (ky, kx, ci, co)
            .reshape(9 * cin, cout).astype(jnp.bfloat16))


def _edge_masks(height, width):
    """(H*W, 9) f32: mask[r, tap] = 1 iff tap (dy,dx) stays inside the image."""
    r = np.arange(height * width)
    hh, ww = r // width, r % width
    cols = []
    for dy in (-1, 0, 1):
        for dx in (-1, 0, 1):
            ok = ((hh + dy >= 0) & (hh + dy < height) &
                  (ww + dx >= 0) & (ww + dx < width))
            cols.append(ok.astype(np.float32))
    return jnp.asarray(np.stack(cols, axis=1))


def _finalize_bn(sums, ssqs, gamma, beta, count, eps):
    """Tiny (N,1,C) -> (1,C) reduction + rsqrt in the XLA wrapper."""
    s = jnp.sum(sums, axis=0)                                # (1, C)
    q = jnp.sum(ssqs, axis=0)                                # (1, C)
    mean = s / count
    var = q / count - mean * mean                            # biased (training BN)
    scale = gamma.reshape(1, -1).astype(jnp.float32) * jax.lax.rsqrt(var + eps)
    shift = beta.reshape(1, -1).astype(jnp.float32) - mean * scale
    return scale, shift


def _conv_call(x_rows, w_taps, scale, shift, *, masks, n, height, width, cout,
               fuse_bn_relu):
    hw = height * width
    cin = x_rows.shape[-1]
    kern = functools.partial(conv3x3_bn_stats_kernel, height=height,
                             width=width, fuse_bn_relu=fuse_bn_relu)
    return pl.pallas_call(
        kern,
        grid=(n,),
        in_specs=[
            pl.BlockSpec((None, hw, cin), lambda i: (i, 0, 0)),   # per-image block
            pl.BlockSpec((9 * cin, cout), lambda i: (0, 0)),      # resident taps
            pl.BlockSpec((hw, 9), lambda i: (0, 0)),              # resident masks
            pl.BlockSpec((1, cin), lambda i: (0, 0)),             # resident BN scale
            pl.BlockSpec((1, cin), lambda i: (0, 0)),             # resident BN shift
        ],
        out_specs=(
            pl.BlockSpec((None, hw, cout), lambda i: (i, 0, 0)),
            pl.BlockSpec((None, 1, cout), lambda i: (i, 0, 0)),
            pl.BlockSpec((None, 1, cout), lambda i: (i, 0, 0)),
        ),
        out_shape=(
            jax.ShapeDtypeStruct((n, hw, cout), jnp.float32),
            jax.ShapeDtypeStruct((n, 1, cout), jnp.float32),
            jax.ShapeDtypeStruct((n, 1, cout), jnp.float32),
        ),
        compiler_params=pltpu.CompilerParams(
            dimension_semantics=("parallel",)),
    )(x_rows, w_taps, masks, scale, shift)


def double_conv(x_nchw, w1_oihw, w2_oihw, g1, b1, g2, b2, *, eps=1e-5):
    """Forward pass matching PyTorch DoubleConv (training-mode BatchNorm)."""
    N, Cin, H, W = x_nchw.shape
    Cout = w1_oihw.shape[0]
    HW = H * W
    count = float(N * HW)

    # NCHW -> (N, H*W, C) rows in (h, w) row-major order, channels on lanes.
    x_rows = (jnp.transpose(x_nchw, (0, 2, 3, 1))
              .reshape(N, HW, Cin).astype(jnp.float32))

    w1_taps = _pack_taps(w1_oihw)            # (9*Cin,  Cout) bf16
    w2_taps = _pack_taps(w2_oihw)            # (9*Cout, Cout) bf16
    masks = _edge_masks(H, W)                # (HW, 9) f32

    conv = functools.partial(_conv_call, masks=masks, n=N, height=H, width=W,
                             cout=Cout)

    # Pass 1: conv1 + per-image BN1 partial stats.
    c1, s1, q1 = conv(x_rows, w1_taps,
                      jnp.ones((1, Cin), jnp.float32),
                      jnp.zeros((1, Cin), jnp.float32),
                      fuse_bn_relu=False)
    scale1, shift1 = _finalize_bn(s1, q1, g1, b1, count, eps)

    # Pass 2: BN1+ReLU fused into conv2 + per-image BN2 partial stats.
    c2, s2, q2 = conv(c1, w2_taps, scale1, shift1, fuse_bn_relu=True)
    scale2, shift2 = _finalize_bn(s2, q2, g2, b2, count, eps)

    # Pass 3: final BN2 + ReLU (elementwise, pipelined over the batch).
    out_rows = pl.pallas_call(
        bn_relu_kernel,
        grid=(N,),
        in_specs=[pl.BlockSpec((None, HW, Cout), lambda i: (i, 0, 0)),
                  pl.BlockSpec((1, Cout), lambda i: (0, 0)),
                  pl.BlockSpec((1, Cout), lambda i: (0, 0))],
        out_specs=pl.BlockSpec((None, HW, Cout), lambda i: (i, 0, 0)),
        out_shape=jax.ShapeDtypeStruct((N, HW, Cout), jnp.float32),
        compiler_params=pltpu.CompilerParams(
            dimension_semantics=("parallel",)),
    )(c2, scale2, shift2)

    out_nhwc = out_rows.reshape(N, H, W, Cout)
    return jnp.transpose(out_nhwc, (0, 3, 1, 2))             # back to NCHW


def reference_double_conv(x_nchw, w1_oihw, w2_oihw, g1, b1, g2, b2, *, eps=1e-5):
    """Pure-JAX reference (lax.conv) with training-mode BatchNorm."""
    x = jnp.transpose(x_nchw, (0, 2, 3, 1))

    def conv(h, w_oihw):
        w_hwio = jnp.transpose(w_oihw, (2, 3, 1, 0))
        return jax.lax.conv_general_dilated(
            h, w_hwio, (1, 1), 'SAME',
            dimension_numbers=('NHWC', 'HWIO', 'NHWC'),
            precision=jax.lax.Precision.HIGHEST)

    def bn_relu(h, g, b):
        mu = jnp.mean(h, axis=(0, 1, 2), keepdims=True)
        var = jnp.mean((h - mu) ** 2, axis=(0, 1, 2), keepdims=True)
        return jnp.maximum((h - mu) * jax.lax.rsqrt(var + eps) * g + b, 0.0)

    h = bn_relu(conv(x, w1_oihw), g1, b1)
    h = bn_relu(conv(h, w2_oihw), g2, b2)
    return jnp.transpose(h, (0, 3, 1, 2))


if __name__ == "__main__":
    # small, deterministic synthetic setup
    N, Cin, Cout, H, W = 2, 4, 8, 16, 16
    key = jax.random.PRNGKey(0)
    kx, kw1, kw2 = jax.random.split(key, 3)

    x = jax.random.normal(kx, (N, Cin, H, W), jnp.float32)
    # Conv2d weights (OIHW), no bias; deterministic init
    w1 = jax.random.normal(kw1, (Cout, Cin, 3, 3), jnp.float32) * 0.2
    w2 = jax.random.normal(kw2, (Cout, Cout, 3, 3), jnp.float32) * 0.2
    # BatchNorm2d default affine init: gamma=1, beta=0
    g1 = jnp.ones((Cout,), jnp.float32)
    b1 = jnp.zeros((Cout,), jnp.float32)
    g2 = jnp.ones((Cout,), jnp.float32)
    b2 = jnp.zeros((Cout,), jnp.float32)

    out = jax.block_until_ready(double_conv(x, w1, w2, g1, b1, g2, b2))
    ref = jax.block_until_ready(reference_double_conv(x, w1, w2, g1, b1, g2, b2))

    assert out.shape == (N, Cout, H, W), out.shape
    # bf16 MXU operands in both convs (f32 accumulation) vs a pure-f32
    # HIGHEST-precision reference -> slightly relaxed tolerance.
    np.testing.assert_allclose(np.asarray(out), np.asarray(ref),
                               rtol=3e-2, atol=3e-2)
    print("KERNEL_OK")
</pallas_src>

<mosaic_0001>
module attributes {stable_mosaic.version = 11 : i64} {
  func.func @conv3x3_bn_stats_kernel(%arg0: i32, %arg1: memref<1x256x4xf32, #tpu.memory_space<vmem>>, %arg2: memref<36x8xbf16, #tpu.memory_space<vmem>>, %arg3: memref<256x9xf32, #tpu.memory_space<vmem>>, %arg4: memref<1x4xf32, #tpu.memory_space<vmem>>, %arg5: memref<1x4xf32, #tpu.memory_space<vmem>>, %arg6: memref<1x256x8xf32, #tpu.memory_space<vmem>>, %arg7: memref<1x1x8xf32, #tpu.memory_space<vmem>>, %arg8: memref<1x1x8xf32, #tpu.memory_space<vmem>>) attributes {dimension_semantics = [#tpu.dimension_semantics<parallel>], iteration_bounds = array<i64: 2>, scalar_prefetch = 0 : i64, scratch_operands = 0 : i64, tpu.core_type = #tpu.core_type<tc>, window_params = [{transform_indices = @transform_0, window_bounds = array<i64: 1, 256, 4>}, {pipeline_mode = #tpu.pipeline_mode<synchronous>, transform_indices = @transform_1, window_bounds = array<i64: 36, 8>}, {pipeline_mode = #tpu.pipeline_mode<synchronous>, transform_indices = @transform_2, window_bounds = array<i64: 256, 9>}, {pipeline_mode = #tpu.pipeline_mode<synchronous>, transform_indices = @transform_3, window_bounds = array<i64: 1, 4>}, {pipeline_mode = #tpu.pipeline_mode<synchronous>, transform_indices = @transform_4, window_bounds = array<i64: 1, 4>}, {transform_indices = @transform_5, window_bounds = array<i64: 1, 256, 8>}, {transform_indices = @transform_6, window_bounds = array<i64: 1, 1, 8>}, {transform_indices = @transform_7, window_bounds = array<i64: 1, 1, 8>}]} {
    %c0 = arith.constant 0 : index
    %c0_0 = arith.constant 0 : index
    %c0_1 = arith.constant 0 : index
    %0 = vector.load %arg1[%c0, %c0_0, %c0_1] : memref<1x256x4xf32, #tpu.memory_space<vmem>>, vector<1x256x4xf32>
    %1 = vector.shape_cast %0 : vector<1x256x4xf32> to vector<256x4xf32>
    %cst = arith.constant 0.000000e+00 : f32
    %2 = vector.broadcast %cst : f32 to vector<256x8xf32>
    %c0_2 = arith.constant 0 : index
    %c0_3 = arith.constant 0 : index
    %3 = vector.load %arg2[%c0_2, %c0_3] : memref<36x8xbf16, #tpu.memory_space<vmem>>, vector<4x8xbf16>
    %4 = vector.extract_strided_slice %1 {offsets = [239, 0], sizes = [17, 4], strides = [1, 1]} : vector<256x4xf32> to vector<17x4xf32>
    %5 = vector.extract_strided_slice %1 {offsets = [0, 0], sizes = [239, 4], strides = [1, 1]} : vector<256x4xf32> to vector<239x4xf32>
    %6 = tpu.concatenate %4, %5 in 0 : vector<17x4xf32>, vector<239x4xf32> -> vector<256x4xf32>
    %c0_4 = arith.constant 0 : index
    %c0_5 = arith.constant 0 : index
    %7 = vector.load %arg3[%c0_4, %c0_5] : memref<256x9xf32, #tpu.memory_space<vmem>>, vector<256x1xf32>
    %8 = vector.broadcast %7 : vector<256x1xf32> to vector<256x4xf32>
    %9 = arith.mulf %6, %8 : vector<256x4xf32>
    %10 = arith.truncf %9 : vector<256x4xf32> to vector<256x4xbf16>
    %cst_6 = arith.constant dense<0.000000e+00> : vector<256x8xf32>
    %11 = tpu.matmul %10, %3, %cst_6 {dimension_numbers = #tpu.dot_dimension_numbers<[1], [0], [0], [1], [0, 0, 1, 1], [], []>} : vector<256x4xbf16>, vector<4x8xbf16>, vector<256x8xf32> -> vector<256x8xf32>
    %12 = arith.addf %2, %11 : vector<256x8xf32>
    %c4 = arith.constant 4 : index
    %c0_7 = arith.constant 0 : index
    %13 = vector.load %arg2[%c4, %c0_7] : memref<36x8xbf16, #tpu.memory_space<vmem>>, vector<4x8xbf16>
    %14 = vector.extract_strided_slice %1 {offsets = [240, 0], sizes = [16, 4], strides = [1, 1]} : vector<256x4xf32> to vector<16x4xf32>
    %15 = vector.extract_strided_slice %1 {offsets = [0, 0], sizes = [240, 4], strides = [1, 1]} : vector<256x4xf32> to vector<240x4xf32>
    %16 = tpu.concatenate %14, %15 in 0 : vector<16x4xf32>, vector<240x4xf32> -> vector<256x4xf32>
    %c0_8 = arith.constant 0 : index
    %c1 = arith.constant 1 : index
    %17 = vector.load %arg3[%c0_8, %c1] : memref<256x9xf32, #tpu.memory_space<vmem>>, vector<256x1xf32>
    %18 = vector.broadcast %17 : vector<256x1xf32> to vector<256x4xf32>
    %19 = arith.mulf %16, %18 : vector<256x4xf32>
    %20 = arith.truncf %19 : vector<256x4xf32> to vector<256x4xbf16>
    %cst_9 = arith.constant dense<0.000000e+00> : vector<256x8xf32>
    %21 = tpu.matmul %20, %13, %cst_9 {dimension_numbers = #tpu.dot_dimension_numbers<[1], [0], [0], [1], [0, 0, 1, 1], [], []>} : vector<256x4xbf16>, vector<4x8xbf16>, vector<256x8xf32> -> vector<256x8xf32>
    %22 = arith.addf %12, %21 : vector<256x8xf32>
    %c8 = arith.constant 8 : index
    %c0_10 = arith.constant 0 : index
    %23 = vector.load %arg2[%c8, %c0_10] : memref<36x8xbf16, #tpu.memory_space<vmem>>, vector<4x8xbf16>
    %24 = vector.extract_strided_slice %1 {offsets = [241, 0], sizes = [15, 4], strides = [1, 1]} : vector<256x4xf32> to vector<15x4xf32>
    %25 = vector.extract_strided_slice %1 {offsets = [0, 0], sizes = [241, 4], strides = [1, 1]} : vector<256x4xf32> to vector<241x4xf32>
    %26 = tpu.concatenate %24, %25 in 0 : vector<15x4xf32>, vector<241x4xf32> -> vector<256x4xf32>
    %c0_11 = arith.constant 0 : index
    %c2 = arith.constant 2 : index
    %27 = vector.load %arg3[%c0_11, %c2] : memref<256x9xf32, #tpu.memory_space<vmem>>, vector<256x1xf32>
    %28 = vector.broadcast %27 : vector<256x1xf32> to vector<256x4xf32>
    %29 = arith.mulf %26, %28 : vector<256x4xf32>
    %30 = arith.truncf %29 : vector<256x4xf32> to vector<256x4xbf16>
    %cst_12 = arith.constant dense<0.000000e+00> : vector<256x8xf32>
    %31 = tpu.matmul %30, %23, %cst_12 {dimension_numbers = #tpu.dot_dimension_numbers<[1], [0], [0], [1], [0, 0, 1, 1], [], []>} : vector<256x4xbf16>, vector<4x8xbf16>, vector<256x8xf32> -> vector<256x8xf32>
    %32 = arith.addf %22, %31 : vector<256x8xf32>
    %c12 = arith.constant 12 : index
    %c0_13 = arith.constant 0 : index
    %33 = vector.load %arg2[%c12, %c0_13] : memref<36x8xbf16, #tpu.memory_space<vmem>>, vector<4x8xbf16>
    %34 = vector.extract_strided_slice %1 {offsets = [255, 0], sizes = [1, 4], strides = [1, 1]} : vector<256x4xf32> to vector<1x4xf32>
    %35 = vector.extract_strided_slice %1 {offsets = [0, 0], sizes = [255, 4], strides = [1, 1]} : vector<256x4xf32> to vector<255x4xf32>
    %36 = tpu.concatenate %34, %35 in 0 : vector<1x4xf32>, vector<255x4xf32> -> vector<256x4xf32>
    %c0_14 = arith.constant 0 : index
    %c3 = arith.constant 3 : index
    %37 = vector.load %arg3[%c0_14, %c3] : memref<256x9xf32, #tpu.memory_space<vmem>>, vector<256x1xf32>
    %38 = vector.broadcast %37 : vector<256x1xf32> to vector<256x4xf32>
    %39 = arith.mulf %36, %38 : vector<256x4xf32>
    %40 = arith.truncf %39 : vector<256x4xf32> to vector<256x4xbf16>
    %cst_15 = arith.constant dense<0.000000e+00> : vector<256x8xf32>
    %41 = tpu.matmul %40, %33, %cst_15 {dimension_numbers = #tpu.dot_dimension_numbers<[1], [0], [0], [1], [0, 0, 1, 1], [], []>} : vector<256x4xbf16>, vector<4x8xbf16>, vector<256x8xf32> -> vector<256x8xf32>
    %42 = arith.addf %32, %41 : vector<256x8xf32>
    %c16 = arith.constant 16 : index
    %c0_16 = arith.constant 0 : index
    %43 = vector.load %arg2[%c16, %c0_16] : memref<36x8xbf16, #tpu.memory_space<vmem>>, vector<4x8xbf16>
    %44 = arith.truncf %1 : vector<256x4xf32> to vector<256x4xbf16>
    %cst_17 = arith.constant dense<0.000000e+00> : vector<256x8xf32>
    %45 = tpu.matmul %44, %43, %cst_17 {dimension_numbers = #tpu.dot_dimension_numbers<[1], [0], [0], [1], [0, 0, 1, 1], [], []>} : vector<256x4xbf16>, vector<4x8xbf16>, vector<256x8xf32> -> vector<256x8xf32>
    %46 = arith.addf %42, %45 : vector<256x8xf32>
    %c20 = arith.constant 20 : index
    %c0_18 = arith.constant 0 : index
    %47 = vector.load %arg2[%c20, %c0_18] : memref<36x8xbf16, #tpu.memory_space<vmem>>, vector<4x8xbf16>
    %48 = vector.extract_strided_slice %1 {offsets = [1, 0], sizes = [255, 4], strides = [1, 1]} : vector<256x4xf32> to vector<255x4xf32>
    %49 = vector.extract_strided_slice %1 {offsets = [0, 0], sizes = [1, 4], strides = [1, 1]} : vector<256x4xf32> to vector<1x4xf32>
    %50 = tpu.concatenate %48, %49 in 0 : vector<255x4xf32>, vector<1x4xf32> -> vector<256x4xf32>
    %c0_19 = arith.constant 0 : index
    %c5 = arith.constant 5 : index
    %51 = vector.load %arg3[%c0_19, %c5] : memref<256x9xf32, #tpu.memory_space<vmem>>, vector<256x1xf32>
    %52 = vector.broadcast %51 : vector<256x1xf32> to vector<256x4xf32>
    %53 = arith.mulf %50, %52 : vector<256x4xf32>
    %54 = arith.truncf %53 : vector<256x4xf32> to vector<256x4xbf16>
    %cst_20 = arith.constant dense<0.000000e+00> : vector<256x8xf32>
    %55 = tpu.matmul %54, %47, %cst_20 {dimension_numbers = #tpu.dot_dimension_numbers<[1], [0], [0], [1], [0, 0, 1, 1], [], []>} : vector<256x4xbf16>, vector<4x8xbf16>, vector<256x8xf32> -> vector<256x8xf32>
    %56 = arith.addf %46, %55 : vector<256x8xf32>
    %c24 = arith.constant 24 : index
    %c0_21 = arith.constant 0 : index
    %57 = vector.load %arg2[%c24, %c0_21] : memref<36x8xbf16, #tpu.memory_space<vmem>>, vector<4x8xbf16>
    %58 = vector.extract_strided_slice %1 {offsets = [15, 0], sizes = [241, 4], strides = [1, 1]} : vector<256x4xf32> to vector<241x4xf32>
    %59 = vector.extract_strided_slice %1 {offsets = [0, 0], sizes = [15, 4], strides = [1, 1]} : vector<256x4xf32> to vector<15x4xf32>
    %60 = tpu.concatenate %58, %59 in 0 : vector<241x4xf32>, vector<15x4xf32> -> vector<256x4xf32>
    %c0_22 = arith.constant 0 : index
    %c6 = arith.constant 6 : index
    %61 = vector.load %arg3[%c0_22, %c6] : memref<256x9xf32, #tpu.memory_space<vmem>>, vector<256x1xf32>
    %62 = vector.broadcast %61 : vector<256x1xf32> to vector<256x4xf32>
    %63 = arith.mulf %60, %62 : vector<256x4xf32>
    %64 = arith.truncf %63 : vector<256x4xf32> to vector<256x4xbf16>
    %cst_23 = arith.constant dense<0.000000e+00> : vector<256x8xf32>
    %65 = tpu.matmul %64, %57, %cst_23 {dimension_numbers = #tpu.dot_dimension_numbers<[1], [0], [0], [1], [0, 0, 1, 1], [], []>} : vector<256x4xbf16>, vector<4x8xbf16>, vector<256x8xf32> -> vector<256x8xf32>
    %66 = arith.addf %56, %65 : vector<256x8xf32>
    %c28 = arith.constant 28 : index
    %c0_24 = arith.constant 0 : index
    %67 = vector.load %arg2[%c28, %c0_24] : memref<36x8xbf16, #tpu.memory_space<vmem>>, vector<4x8xbf16>
    %68 = vector.extract_strided_slice %1 {offsets = [16, 0], sizes = [240, 4], strides = [1, 1]} : vector<256x4xf32> to vector<240x4xf32>
    %69 = vector.extract_strided_slice %1 {offsets = [0, 0], sizes = [16, 4], strides = [1, 1]} : vector<256x4xf32> to vector<16x4xf32>
    %70 = tpu.concatenate %68, %69 in 0 : vector<240x4xf32>, vector<16x4xf32> -> vector<256x4xf32>
    %c0_25 = arith.constant 0 : index
    %c7 = arith.constant 7 : index
    %71 = vector.load %arg3[%c0_25, %c7] : memref<256x9xf32, #tpu.memory_space<vmem>>, vector<256x1xf32>
    %72 = vector.broadcast %71 : vector<256x1xf32> to vector<256x4xf32>
    %73 = arith.mulf %70, %72 : vector<256x4xf32>
    %74 = arith.truncf %73 : vector<256x4xf32> to vector<256x4xbf16>
    %cst_26 = arith.constant dense<0.000000e+00> : vector<256x8xf32>
    %75 = tpu.matmul %74, %67, %cst_26 {dimension_numbers = #tpu.dot_dimension_numbers<[1], [0], [0], [1], [0, 0, 1, 1], [], []>} : vector<256x4xbf16>, vector<4x8xbf16>, vector<256x8xf32> -> vector<256x8xf32>
    %76 = arith.addf %66, %75 : vector<256x8xf32>
    %c32 = arith.constant 32 : index
    %c0_27 = arith.constant 0 : index
    %77 = vector.load %arg2[%c32, %c0_27] : memref<36x8xbf16, #tpu.memory_space<vmem>>, vector<4x8xbf16>
    %78 = vector.extract_strided_slice %1 {offsets = [17, 0], sizes = [239, 4], strides = [1, 1]} : vector<256x4xf32> to vector<239x4xf32>
    %79 = vector.extract_strided_slice %1 {offsets = [0, 0], sizes = [17, 4], strides = [1, 1]} : vector<256x4xf32> to vector<17x4xf32>
    %80 = tpu.concatenate %78, %79 in 0 : vector<239x4xf32>, vector<17x4xf32> -> vector<256x4xf32>
    %c0_28 = arith.constant 0 : index
    %c8_29 = arith.constant 8 : index
    %81 = vector.load %arg3[%c0_28, %c8_29] : memref<256x9xf32, #tpu.memory_space<vmem>>, vector<256x1xf32>
    %82 = vector.broadcast %81 : vector<256x1xf32> to vector<256x4xf32>
    %83 = arith.mulf %80, %82 : vector<256x4xf32>
    %84 = arith.truncf %83 : vector<256x4xf32> to vector<256x4xbf16>
    %cst_30 = arith.constant dense<0.000000e+00> : vector<256x8xf32>
    %85 = tpu.matmul %84, %77, %cst_30 {dimension_numbers = #tpu.dot_dimension_numbers<[1], [0], [0], [1], [0, 0, 1, 1], [], []>} : vector<256x4xbf16>, vector<4x8xbf16>, vector<256x8xf32> -> vector<256x8xf32>
    %86 = arith.addf %76, %85 : vector<256x8xf32>
    %c0_31 = arith.constant 0 : index
    %c0_32 = arith.constant 0 : index
    %c0_33 = arith.constant 0 : index
    %87 = vector.load %arg6[%c0_31, %c0_32, %c0_33] : memref<1x256x8xf32, #tpu.memory_space<vmem>>, vector<1x256x8xf32>
    %88 = vector.shape_cast %87 : vector<1x256x8xf32> to vector<256x8xf32>
    %89 = vector.shape_cast %86 : vector<256x8xf32> to vector<1x256x8xf32>
    tpu.vector_store %arg6[%c0_31, %c0_32, %c0_33], %89 {strides = array<i32>} : memref<1x256x8xf32, #tpu.memory_space<vmem>>, vector<1x256x8xf32>,
    %cst_34 = arith.constant dense<0.000000e+00> : vector<8xf32>
    %90 = vector.multi_reduction <add>, %86, %cst_34 [0] : vector<256x8xf32> to vector<8xf32>
    %91 = vector.shape_cast %90 : vector<8xf32> to vector<1x8xf32>
    %c0_35 = arith.constant 0 : index
    %c0_36 = arith.constant 0 : index
    %c0_37 = arith.constant 0 : index
    %92 = vector.load %arg7[%c0_35, %c0_36, %c0_37] : memref<1x1x8xf32, #tpu.memory_space<vmem>>, vector<1x1x8xf32>
    %93 = vector.shape_cast %92 : vector<1x1x8xf32> to vector<1x8xf32>
    %94 = vector.shape_cast %91 : vector<1x8xf32> to vector<1x1x8xf32>
    tpu.vector_store %arg7[%c0_35, %c0_36, %c0_37], %94 {strides = array<i32>} : memref<1x1x8xf32, #tpu.memory_space<vmem>>, vector<1x1x8xf32>,
    %95 = arith.mulf %86, %86 : vector<256x8xf32>
    %cst_38 = arith.constant dense<0.000000e+00> : vector<8xf32>
    %96 = vector.multi_reduction <add>, %95, %cst_38 [0] : vector<256x8xf32> to vector<8xf32>
    %97 = vector.shape_cast %96 : vector<8xf32> to vector<1x8xf32>
    %c0_39 = arith.constant 0 : index
    %c0_40 = arith.constant 0 : index
    %c0_41 = arith.constant 0 : index
    %98 = vector.load %arg8[%c0_39, %c0_40, %c0_41] : memref<1x1x8xf32, #tpu.memory_space<vmem>>, vector<1x1x8xf32>
    %99 = vector.shape_cast %98 : vector<1x1x8xf32> to vector<1x8xf32>
    %100 = vector.shape_cast %97 : vector<1x8xf32> to vector<1x1x8xf32>
    tpu.vector_store %arg8[%c0_39, %c0_40, %c0_41], %100 {strides = array<i32>} : memref<1x1x8xf32, #tpu.memory_space<vmem>>, vector<1x1x8xf32>,
    return
  }
  func.func @transform_0(%arg0: i32) -> (i32, i32, i32) {
    %c0_i32 = arith.constant 0 : i32
    %c0_i32_0 = arith.constant 0 : i32
    %c0_i32_1 = arith.constant 0 : i32
    return %arg0, %c0_i32, %c0_i32_0 : i32, i32, i32
  }
  func.func @transform_1(%arg0: i32) -> (i32, i32) {
    %c0_i32 = arith.constant 0 : i32
    %c0_i32_0 = arith.constant 0 : i32
    %c0_i32_1 = arith.constant 0 : i32
    return %c0_i32, %c0_i32_0 : i32, i32
  }
  func.func @transform_2(%arg0: i32) -> (i32, i32) {
    %c0_i32 = arith.constant 0 : i32
    %c0_i32_0 = arith.constant 0 : i32
    %c0_i32_1 = arith.constant 0 : i32
    return %c0_i32, %c0_i32_0 : i32, i32
  }
  func.func @transform_3(%arg0: i32) -> (i32, i32) {
    %c0_i32 = arith.constant 0 : i32
    %c0_i32_0 = arith.constant 0 : i32
    %c0_i32_1 = arith.constant 0 : i32
    return %c0_i32, %c0_i32_0 : i32, i32
  }
  func.func @transform_4(%arg0: i32) -> (i32, i32) {
    %c0_i32 = arith.constant 0 : i32
    %c0_i32_0 = arith.constant 0 : i32
    %c0_i32_1 = arith.constant 0 : i32
    return %c0_i32, %c0_i32_0 : i32, i32
  }
  func.func @transform_5(%arg0: i32) -> (i32, i32, i32) {
    %c0_i32 = arith.constant 0 : i32
    %c0_i32_0 = arith.constant 0 : i32
    %c0_i32_1 = arith.constant 0 : i32
    return %arg0, %c0_i32, %c0_i32_0 : i32, i32, i32
  }
  func.func @transform_6(%arg0: i32) -> (i32, i32, i32) {
    %c0_i32 = arith.constant 0 : i32
    %c0_i32_0 = arith.constant 0 : i32
    %c0_i32_1 = arith.constant 0 : i32
    return %arg0, %c0_i32, %c0_i32_0 : i32, i32, i32
  }
  func.func @transform_7(%arg0: i32) -> (i32, i32, i32) {
    %c0_i32 = arith.constant 0 : i32
    %c0_i32_0 = arith.constant 0 : i32
    %c0_i32_1 = arith.constant 0 : i32
    return %arg0, %c0_i32, %c0_i32_0 : i32, i32, i32
  }
}

</mosaic_0001>

<llo_original>
// kernel: tpu_custom_call.1
$region0: #{tpu_custom_call.1}
  #allocation0 [shape = 'u32[]', space=smem, size = 0x4, offset = 0x4, fixed_abs, tag = 'smem constant byte address 0x4 - core index']
  #allocation1 [shape = 'u32[144,128]{1,0:T(1,128)}', space=vmem, size = 0x12000, scoped, tag = 'internal scratch']
  %s0 = inlined_call_operand.vmem [shape: f32[2,256,4], index: 0, kind: input, shape index: {}]
  %s1 = inlined_call_operand.vmem [shape: bf16[36,8], index: 1, kind: input, shape index: {}]
  %s2 = inlined_call_operand.vmem [shape: f32[256,9], index: 2, kind: input, shape index: {}]
  %s3 = inlined_call_operand.vmem [shape: f32[1,4], index: 3, kind: input, shape index: {}]
  %s4 = inlined_call_operand.vmem [shape: f32[1,4], index: 4, kind: input, shape index: {}]
  %s5 = inlined_call_operand.vmem [shape: f32[2,256,8], index: 5, kind: output, shape index: {0}]
  %s6 = inlined_call_operand.hbm [shape: f32[2,1,8], index: 6, kind: output, shape index: {1}]
  %s7 = inlined_call_operand.hbm [shape: f32[2,1,8], index: 7, kind: output, shape index: {2}]
  %8 = xla_tuple %s5, %s6, %s7
  %s9 = sld [smem:[#allocation0]]
  $region69: #{tpu_custom_call.1} parent=0
    _
  %s11 = ssub.s32 1, %s9
  %s12 = scalar_select 0, %s11, %s9
  $region1: #{tpu_custom_call.1} parent=0
    #allocation2 [shape = 'u8[1024]{0}', space=vmem, size = 0x400, scoped, tag = 'output window, operand 1']
    #allocation3 [shape = 's32[2]{0}', space=sflag, size = 0x8, scoped, tag = 'scoped memory for tpu_custom_call.1']
    #allocation4 [shape = 'u8[1024]{0}', space=vmem, size = 0x400, scoped, tag = 'output window, operand 2']
    #allocation5 [shape = 's32[2]{0}', space=sflag, size = 0x8, scoped, tag = 'scoped memory for tpu_custom_call.1']
    %13 = vsyncpa [#allocation3], 0
    %s14 = scalar_lea.sflag [#allocation3], 1
    %15 = vsyncpa %s14, 0
    %16 = vsyncpa [#allocation5], 0
    %s17 = scalar_lea.sflag [#allocation5], 1
    %18 = vsyncpa %s17, 0
    loop: start=0, step=1, limit=4
    $region2: #{tpu_custom_call.1} parent=1 // loop_pre_header
      _
    $region3: #{tpu_custom_call.1} parent=1 // loop_header
      %s20 = sphi 0, %s24
      %p21 = scmp.ge.s32.totalorder %s20, 4
      %s30 = sphi 0, %s32
      %s33 = sphi 0, %s30
      %s34 = sphi 0, %s33
      %s50 = sphi 0, %s34
      %s54 = sphi 0, %s54
      %s56 = sphi 0, %s54
      %s57 = sphi 0, %s56
      %s71 = sphi 0, %s57
      %s75 = sphi 0, %s75
      %s77 = sphi 0, %s75
      %s78 = sphi 0, %s77
      %s92 = sphi 0, %s78
      %s96 = sphi 0, %s96
      %s98 = sphi 0, %s96
      %s99 = sphi 0, %s98
      %s113 = sphi 0, %s99
      %s117 = sphi 0, %s117
      %s119 = sphi 0, %s117
      %s120 = sphi 0, %s119
      %s134 = sphi 0, %s120
      %s140 = sphi 0, %s142
      %s143 = sphi 0, %s140
      %s144 = sphi 0, %s143
      %s160 = sphi 0, %s144
      %s166 = sphi 0, %s168
      %s169 = sphi 0, %s166
      %s170 = sphi 0, %s169
      %s186 = sphi 0, %s170
      %s192 = sphi 0, %s194
      %s195 = sphi 0, %s192
      %s196 = sphi 0, %s195
      %s212 = sphi 0, %s196
    $region4: #{tpu_custom_call.1} parent=1 // loop_header_branch
      %23 = sbr.rel (%p21) target = $region8
    $region5: #{tpu_custom_call.1} parent=1 // loop_body
      %s25 = ssub.s32 %s20, 1
      %s26 = ssub.s32 %s20, 2
      %s27 = sadd.s32 %s20, 1
      %s28 = ssub.s32 %s20, %s27
      %p29 = scmp.eq.s32.totalorder %s28, 0
      %s31 = sadd.s32 %s30, 1
      %s32 = scalar_select %p29, %s30, %s31
      %p35 = pneg %p29
      %p36 = scmp.eq.s32.totalorder %s20, 1
      %p37 = por %p35, %p36
      %p38 = scmp.ne.s32.totalorder %s30, %s33
      %p39 = scmp.eq.s32.totalorder %s20, 0
      %p40 = por %p38, %p39
      %p41 = scmp.ne.s32.totalorder %s30, %s33
      %p42 = scmp.eq.s32.totalorder %s25, 1
      %p43 = por %p41, %p42
      %p44 = scmp.ne.s32.totalorder %s33, %s34
      %p45 = scmp.eq.s32.totalorder %s25, 0
      %p46 = por %p44, %p45
      %p47 = scmp.ne.s32.totalorder %s33, %s34
      %p48 = scmp.eq.s32.totalorder %s26, 1
      %p49 = por %p47, %p48
      %p51 = scmp.ne.s32.totalorder %s34, %s50
      %p52 = scmp.eq.s32.totalorder %s26, 0
      %p53 = por %p51, %p52
      %s55 = sadd.s32 %s54, 1
      %p58 = scmp.eq.s32.totalorder %s20, 1
      %p59 = scmp.ne.s32.totalorder %s54, %s56
      %p60 = scmp.eq.s32.totalorder %s20, 0
      %p61 = por %p59, %p60
      %p62 = scmp.ne.s32.totalorder %s54, %s56
      %p63 = scmp.eq.s32.totalorder %s25, 1
      %p64 = por %p62, %p63
      %p65 = scmp.ne.s32.totalorder %s56, %s57
      %p66 = scmp.eq.s32.totalorder %s25, 0
      %p67 = por %p65, %p66
      %p68 = scmp.ne.s32.totalorder %s56, %s57
      %p69 = scmp.eq.s32.totalorder %s26, 1
      %p70 = por %p68, %p69
      %p72 = scmp.ne.s32.totalorder %s57, %s71
      %p73 = scmp.eq.s32.totalorder %s26, 0
      %p74 = por %p72, %p73
      %s76 = sadd.s32 %s75, 1
      %p79 = scmp.eq.s32.totalorder %s20, 1
      %p80 = scmp.ne.s32.totalorder %s75, %s77
      %p81 = scmp.eq.s32.totalorder %s20, 0
      %p82 = por %p80, %p81
      %p83 = scmp.ne.s32.totalorder %s75, %s77
      %p84 = scmp.eq.s32.totalorder %s25, 1
      %p85 = por %p83, %p84
      %p86 = scmp.ne.s32.totalorder %s77, %s78
      %p87 = scmp.eq.s32.totalorder %s25, 0
      %p88 = por %p86, %p87
      %p89 = scmp.ne.s32.totalorder %s77, %s78
      %p90 = scmp.eq.s32.totalorder %s26, 1
      %p91 = por %p89, %p90
      %p93 = scmp.ne.s32.totalorder %s78, %s92
      %p94 = scmp.eq.s32.totalorder %s26, 0
      %p95 = por %p93, %p94
      %s97 = sadd.s32 %s96, 1
      %p100 = scmp.eq.s32.totalorder %s20, 1
      %p101 = scmp.ne.s32.totalorder %s96, %s98
      %p102 = scmp.eq.s32.totalorder %s20, 0
      %p103 = por %p101, %p102
      %p104 = scmp.ne.s32.totalorder %s96, %s98
      %p105 = scmp.eq.s32.totalorder %s25, 1
      %p106 = por %p104, %p105
      %p107 = scmp.ne.s32.totalorder %s98, %s99
      %p108 = scmp.eq.s32.totalorder %s25, 0
      %p109 = por %p107, %p108
      %p110 = scmp.ne.s32.totalorder %s98, %s99
      %p111 = scmp.eq.s32.totalorder %s26, 1
      %p112 = por %p110, %p111
      %p114 = scmp.ne.s32.totalorder %s99, %s113
      %p115 = scmp.eq.s32.totalorder %s26, 0
      %p116 = por %p114, %p115
      %s118 = sadd.s32 %s117, 1
      %p121 = scmp.eq.s32.totalorder %s20, 1
      %p122 = scmp.ne.s32.totalorder %s117, %s119
      %p123 = scmp.eq.s32.totalorder %s20, 0
      %p124 = por %p122, %p123
      %p125 = scmp.ne.s32.totalorder %s117, %s119
      %p126 = scmp.eq.s32.totalorder %s25, 1
      %p127 = por %p125, %p126
      %p128 = scmp.ne.s32.totalorder %s119, %s120
      %p129 = scmp.eq.s32.totalorder %s25, 0
      %p130 = por %p128, %p129
      %p131 = scmp.ne.s32.totalorder %s119, %s120
      %p132 = scmp.eq.s32.totalorder %s26, 1
      %p133 = por %p131, %p132
      %p135 = scmp.ne.s32.totalorder %s120, %s134
      %p136 = scmp.eq.s32.totalorder %s26, 0
      %p137 = por %p135, %p136
      %s138 = ssub.s32 %s20, %s27
      %p139 = scmp.eq.s32.totalorder %s138, 0
      %s141 = sadd.s32 %s140, 1
      %s142 = scalar_select %p139, %s140, %s141
      %p145 = pneg %p139
      %p146 = scmp.eq.s32.totalorder %s20, 1
      %p147 = por %p145, %p146
      %p148 = scmp.ne.s32.totalorder %s140, %s143
      %p149 = scmp.eq.s32.totalorder %s20, 0
      %p150 = por %p148, %p149
      %p151 = scmp.ne.s32.totalorder %s140, %s143
      %p152 = scmp.eq.s32.totalorder %s25, 1
      %p153 = por %p151, %p152
      %p154 = scmp.ne.s32.totalorder %s143, %s144
      %p155 = scmp.eq.s32.totalorder %s25, 0
      %p156 = por %p154, %p155
      %p157 = scmp.ne.s32.totalorder %s143, %s144
      %p158 = scmp.eq.s32.totalorder %s26, 1
      %p159 = por %p157, %p158
      %p161 = scmp.ne.s32.totalorder %s144, %s160
      %p162 = scmp.eq.s32.totalorder %s26, 0
      %p163 = por %p161, %p162
      %s164 = ssub.s32 %s20, %s27
      %p165 = scmp.eq.s32.totalorder %s164, 0
      %s167 = sadd.s32 %s166, 1
      %s168 = scalar_select %p165, %s166, %s167
      %p171 = pneg %p165
      %p172 = scmp.eq.s32.totalorder %s20, 1
      %p173 = por %p171, %p172
      %p174 = scmp.ne.s32.totalorder %s166, %s169
      %p175 = scmp.eq.s32.totalorder %s20, 0
      %p176 = por %p174, %p175
      %p177 = scmp.ne.s32.totalorder %s166, %s169
      %p178 = scmp.eq.s32.totalorder %s25, 1
      %p179 = por %p177, %p178
      %p180 = scmp.ne.s32.totalorder %s169, %s170
      %p181 = scmp.eq.s32.totalorder %s25, 0
      %p182 = por %p180, %p181
      %p183 = scmp.ne.s32.totalorder %s169, %s170
      %p184 = scmp.eq.s32.totalorder %s26, 1
      %p185 = por %p183, %p184
      %p187 = scmp.ne.s32.totalorder %s170, %s186
      %p188 = scmp.eq.s32.totalorder %s26, 0
      %p189 = por %p187, %p188
      %s190 = ssub.s32 %s20, %s27
      %p191 = scmp.eq.s32.totalorder %s190, 0
      %s193 = sadd.s32 %s192, 1
      %s194 = scalar_select %p191, %s192, %s193
      %p197 = pneg %p191
      %p198 = scmp.eq.s32.totalorder %s20, 1
      %p199 = por %p197, %p198
      %p200 = scmp.ne.s32.totalorder %s192, %s195
      %p201 = scmp.eq.s32.totalorder %s20, 0
      %p202 = por %p200, %p201
      %p203 = scmp.ne.s32.totalorder %s192, %s195
      %p204 = scmp.eq.s32.totalorder %s25, 1
      %p205 = por %p203, %p204
      %p206 = scmp.ne.s32.totalorder %s195, %s196
      %p207 = scmp.eq.s32.totalorder %s25, 0
      %p208 = por %p206, %p207
      %p209 = scmp.ne.s32.totalorder %s195, %s196
      %p210 = scmp.eq.s32.totalorder %s26, 1
      %p211 = por %p209, %p210
      %p213 = scmp.ne.s32.totalorder %s196, %s212
      %p214 = scmp.eq.s32.totalorder %s26, 0
      %p215 = por %p213, %p214
      %p216 = scmp.le.s32.totalorder 1, %s20
      %p217 = scmp.lt.s32.totalorder %s20, 3
      %p218 = pnand %p216, %p217
      %p219 = pneg %p218
      // Predicated region
      $region9: #{tpu_custom_call.1} parent=5 // pred_check
        _
      $region10: #{tpu_custom_call.1} parent=5 // pred_check_branch
        %221 = sbr.rel (%p218) target = $region12
      $region11: #{tpu_custom_call.1} parent=5 // pred_region
        %s222 = ssub.s32 %s20, 1
        // Predicated region
        $region13: #{tpu_custom_call.1} parent=11 // pred_check
          %p223 = pneg %p67
        $region14: #{tpu_custom_call.1} parent=11 // pred_check_branch
          %225 = sbr.rel (%p223) target = $region16
        $region15: #{tpu_custom_call.1} parent=11 // pred_region
          _
        $region16: #{tpu_custom_call.1} parent=11 // pred_fallthru
          _
        // Predicated region
        $region17: #{tpu_custom_call.1} parent=11 // pred_check
          %p226 = pneg %p88
        $region18: #{tpu_custom_call.1} parent=11 // pred_check_branch
          %228 = sbr.rel (%p226) target = $region20
        $region19: #{tpu_custom_call.1} parent=11 // pred_region
          _
        $region20: #{tpu_custom_call.1} parent=11 // pred_fallthru
          _
        // Predicated region
        $region21: #{tpu_custom_call.1} parent=11 // pred_check
          %p229 = pneg %p109
        $region22: #{tpu_custom_call.1} parent=11 // pred_check_branch
          %231 = sbr.rel (%p229) target = $region24
        $region23: #{tpu_custom_call.1} parent=11 // pred_region
          _
        $region24: #{tpu_custom_call.1} parent=11 // pred_fallthru
          _
        // Predicated region
        $region25: #{tpu_custom_call.1} parent=11 // pred_check
          %p232 = pneg %p130
        $region26: #{tpu_custom_call.1} parent=11 // pred_check_branch
          %234 = sbr.rel (%p232) target = $region28
        $region27: #{tpu_custom_call.1} parent=11 // pred_region
          _
        $region28: #{tpu_custom_call.1} parent=11 // pred_fallthru
          _
      $region12: #{tpu_custom_call.1} parent=5 // pred_fallthru
        _
      %p235 = scmp.lt.s32.totalorder %s20, 2
      // Predicated region
      $region29: #{tpu_custom_call.1} parent=5 // pred_check
        %p236 = pneg %p235
      $region30: #{tpu_custom_call.1} parent=5 // pred_check_branch
        %238 = sbr.rel (%p236) target = $region32
      $region31: #{tpu_custom_call.1} parent=5 // pred_region
        // Predicated region
        $region33: #{tpu_custom_call.1} parent=31 // pred_check
          %p239 = pneg %p40
        $region34: #{tpu_custom_call.1} parent=31 // pred_check_branch
          %241 = sbr.rel (%p239) target = $region36
        $region35: #{tpu_custom_call.1} parent=31 // pred_region
          %p242 = scmp.lt.s32.totalorder %s20, 1
          %s243 = scalar_select %p242, %s20, 1
          %s244 = smul.addr %s243, 32
          %s245 = smul.addr %s244, 8
          %s246 = scalar_lea.vmem %s0, %s245
        $region36: #{tpu_custom_call.1} parent=31 // pred_fallthru
          _
      $region32: #{tpu_custom_call.1} parent=5 // pred_fallthru
        _
      %p247 = scmp.le.s32.totalorder 1, %s20
      %p248 = scmp.lt.s32.totalorder %s20, 3
      %p249 = pnand %p247, %p248
      %p250 = pneg %p249
      // Predicated region
      $region37: #{tpu_custom_call.1} parent=5 // pred_check
        _
      $region38: #{tpu_custom_call.1} parent=5 // pred_check_branch
        %252 = sbr.rel (%p249) target = $region40
      $region39: #{tpu_custom_call.1} parent=5 // pred_region
        %s253 = ssub.s32 %s20, 1
        %p254 = scmp.lt.s32.totalorder %s25, 1
        %s255 = scalar_select %p254, %s25, 1
        %s256 = smul.addr %s255, 32
        %s257 = smul.addr %s256, 8
        %s258 = scalar_lea.vmem %s0, %s257
        %p259 = pneg %p46
        %p260 = pneg %p43
        %p261 = pneg %p67
        %p262 = pneg %p64
        %p263 = pneg %p88
        %p264 = pneg %p85
        %p265 = pneg %p109
        %p266 = pneg %p106
        %p267 = pneg %p130
        %p268 = pneg %p127
        %p269 = pneg %p156
        %p270 = pneg %p153
        %p271 = scmp.lt.s32.totalorder %s25, 1
        %s272 = scalar_select %p271, %s25, 1
        %s273 = smul.addr %s272, 32
        %s274 = smul.addr %s273, 8
        %s275 = scalar_lea.vmem %s5, %s274
        %p276 = pneg %p182
        %p277 = pneg %p179
        %s278 = sand.u32 %s169, 1
        %s279 = scalar_lea.sflag [#allocation3], %s278
        %s280 = sand.u32 %s169, 1
        %s281 = scalar_lea.vmem [#allocation2], %s280
        %p282 = pneg %p208
        %p283 = pneg %p205
        %s284 = sand.u32 %s195, 1
        %s285 = scalar_lea.sflag [#allocation5], %s284
        %s286 = sand.u32 %s195, 1
        %s287 = scalar_lea.vmem [#allocation4], %s286
        %p288 = scmp.lt.s32.totalorder %s25, 1
        %s289 = scalar_select %p288, %s25, 1
        %s290 = smul.addr %s289, 32
        %s291 = smul.addr %s290, 8
        %s292 = scalar_lea.vmem %s0, %s291
        %p293 = scmp.lt.s32.totalorder %s25, 1
        %s294 = scalar_select %p293, %s25, 1
        %s295 = smul.addr %s294, 32
        %s296 = smul.addr %s295, 8
        %s297 = scalar_lea.vmem %s5, %s296
        %v299 = vld [vmem:[%s292] sm:$0xff]
        %v300 = vld [vmem:[%s292 + $0x8] sm:$0xff]
        %v301 = vld [vmem:[%s292 + $0x10] sm:$0xff]
        %v302 = vld [vmem:[%s292 + $0x18] sm:$0xff]
        %v303 = vld [vmem:[%s292 + $0x20] sm:$0xff]
        %v304 = vld [vmem:[%s292 + $0x28] sm:$0xff]
        %v305 = vld [vmem:[%s292 + $0x30] sm:$0xff]
        %v306 = vld [vmem:[%s292 + $0x38] sm:$0xff]
        %v307 = vld [vmem:[%s292 + $0x40] sm:$0xff]
        %v308 = vld [vmem:[%s292 + $0x48] sm:$0xff]
        %v309 = vld [vmem:[%s292 + $0x50] sm:$0xff]
        %v310 = vld [vmem:[%s292 + $0x58] sm:$0xff]
        %v311 = vld [vmem:[%s292 + $0x60] sm:$0xff]
        %v312 = vld [vmem:[%s292 + $0x68] sm:$0xff]
        %v313 = vld [vmem:[%s292 + $0x70] sm:$0xff]
        %v314 = vld [vmem:[%s292 + $0x78] sm:$0xff]
        %v315 = vld [vmem:[%s292 + $0x80] sm:$0xff]
        %v316 = vld [vmem:[%s292 + $0x88] sm:$0xff]
        %v317 = vld [vmem:[%s292 + $0x90] sm:$0xff]
        %v318 = vld [vmem:[%s292 + $0x98] sm:$0xff]
        %v319 = vld [vmem:[%s292 + $0xa0] sm:$0xff]
        %v320 = vld [vmem:[%s292 + $0xa8] sm:$0xff]
        %v321 = vld [vmem:[%s292 + $0xb0] sm:$0xff]
        %v322 = vld [vmem:[%s292 + $0xb8] sm:$0xff]
        %v323 = vld [vmem:[%s292 + $0xc0] sm:$0xff]
        %v324 = vld [vmem:[%s292 + $0xc8] sm:$0xff]
        %v325 = vld [vmem:[%s292 + $0xd0] sm:$0xff]
        %v326 = vld [vmem:[%s292 + $0xd8] sm:$0xff]
        %v327 = vld [vmem:[%s292 + $0xe0] sm:$0xff]
        %v328 = vld [vmem:[%s292 + $0xe8] sm:$0xff]
        %v329 = vld [vmem:[%s292 + $0xf0] sm:$0xff]
        %v330 = vld [vmem:[%s292 + $0xf8] sm:$0xff]
        %v331 = vld [vmem:[%s1] sm:$0x3]
        %vm335 = vcmask 1040384
        %v336 = vrot.slane %v328, 7
        %v337 = vrot.slane %v329, 7
        %v338 = vsel %vm335, %v336, %v337
        %v339 = vrot.slane %v330, 7
        %v340 = vsel %vm335, %v337, %v339
        %v373 = vrot.slane %v299, 7
        %v374 = vrot.slane %v300, 7
        %v375 = vsel %vm335, %v373, %v374
        %v376 = vrot.slane %v301, 7
        %v377 = vsel %vm335, %v374, %v376
        %v378 = vrot.slane %v302, 7
        %v379 = vsel %vm335, %v376, %v378
        %v380 = vrot.slane %v303, 7
        %v381 = vsel %vm335, %v378, %v380
        %v382 = vrot.slane %v304, 7
        %v383 = vsel %vm335, %v380, %v382
        %v384 = vrot.slane %v305, 7
        %v385 = vsel %vm335, %v382, %v384
        %v386 = vrot.slane %v306, 7
        %v387 = vsel %vm335, %v384, %v386
        %v388 = vrot.slane %v307, 7
        %v389 = vsel %vm335, %v386, %v388
        %v390 = vrot.slane %v308, 7
        %v391 = vsel %vm335, %v388, %v390
        %v392 = vrot.slane %v309, 7
        %v393 = vsel %vm335, %v390, %v392
        %v394 = vrot.slane %v310, 7
        %v395 = vsel %vm335, %v392, %v394
        %v396 = vrot.slane %v311, 7
        %v397 = vsel %vm335, %v394, %v396
        %v398 = vrot.slane %v312, 7
        %v399 = vsel %vm335, %v396, %v398
        %v400 = vrot.slane %v313, 7
        %v401 = vsel %vm335, %v398, %v400
        %v402 = vrot.slane %v314, 7
        %v403 = vsel %vm335, %v400, %v402
        %v404 = vrot.slane %v315, 7
        %v405 = vsel %vm335, %v402, %v404
        %v406 = vrot.slane %v316, 7
        %v407 = vsel %vm335, %v404, %v406
        %v408 = vrot.slane %v317, 7
        %v409 = vsel %vm335, %v406, %v408
        %v410 = vrot.slane %v318, 7
        %v411 = vsel %vm335, %v408, %v410
        %v412 = vrot.slane %v319, 7
        %v413 = vsel %vm335, %v410, %v412
        %v414 = vrot.slane %v320, 7
        %v415 = vsel %vm335, %v412, %v414
        %v416 = vrot.slane %v321, 7
        %v417 = vsel %vm335, %v414, %v416
        %v418 = vrot.slane %v322, 7
        %v419 = vsel %vm335, %v416, %v418
        %v420 = vrot.slane %v323, 7
        %v421 = vsel %vm335, %v418, %v420
        %v422 = vrot.slane %v324, 7
        %v423 = vsel %vm335, %v420, %v422
        %v424 = vrot.slane %v325, 7
        %v425 = vsel %vm335, %v422, %v424
        %v426 = vrot.slane %v326, 7
        %v427 = vsel %vm335, %v424, %v426
        %v428 = vrot.slane %v327, 7
        %v429 = vsel %vm335, %v426, %v428
        %v430 = vsel %vm335, %v428, %v336
        %v461 = vsel %vm335, %v339, %v373
        %v462 = vld [vmem:[%s2] sm:$0xff]
        %v463 = vld [vmem:[%s2 + $0x8] sm:$0xff]
        %v464 = vld [vmem:[%s2 + $0x10] sm:$0xff]
        %v465 = vld [vmem:[%s2 + $0x18] sm:$0xff]
        %v466 = vld [vmem:[%s2 + $0x20] sm:$0xff]
        %v467 = vld [vmem:[%s2 + $0x28] sm:$0xff]
        %v468 = vld [vmem:[%s2 + $0x30] sm:$0xff]
        %v469 = vld [vmem:[%s2 + $0x38] sm:$0xff]
        %v470 = vld [vmem:[%s2 + $0x40] sm:$0xff]
        %v471 = vld [vmem:[%s2 + $0x48] sm:$0xff]
        %v472 = vld [vmem:[%s2 + $0x50] sm:$0xff]
        %v473 = vld [vmem:[%s2 + $0x58] sm:$0xff]
        %v474 = vld [vmem:[%s2 + $0x60] sm:$0xff]
        %v475 = vld [vmem:[%s2 + $0x68] sm:$0xff]
        %v476 = vld [vmem:[%s2 + $0x70] sm:$0xff]
        %v477 = vld [vmem:[%s2 + $0x78] sm:$0xff]
        %v478 = vld [vmem:[%s2 + $0x80] sm:$0xff]
        %v479 = vld [vmem:[%s2 + $0x88] sm:$0xff]
        %v480 = vld [vmem:[%s2 + $0x90] sm:$0xff]
        %v481 = vld [vmem:[%s2 + $0x98] sm:$0xff]
        %v482 = vld [vmem:[%s2 + $0xa0] sm:$0xff]
        %v483 = vld [vmem:[%s2 + $0xa8] sm:$0xff]
        %v484 = vld [vmem:[%s2 + $0xb0] sm:$0xff]
        %v485 = vld [vmem:[%s2 + $0xb8] sm:$0xff]
        %v486 = vld [vmem:[%s2 + $0xc0] sm:$0xff]
        %v487 = vld [vmem:[%s2 + $0xc8] sm:$0xff]
        %v488 = vld [vmem:[%s2 + $0xd0] sm:$0xff]
        %v489 = vld [vmem:[%s2 + $0xd8] sm:$0xff]
        %v490 = vld [vmem:[%s2 + $0xe0] sm:$0xff]
        %v491 = vld [vmem:[%s2 + $0xe8] sm:$0xff]
        %v492 = vld [vmem:[%s2 + $0xf0] sm:$0xff]
        %v493 = vld [vmem:[%s2 + $0xf8] sm:$0xff]
        %495 = vset.pattern.permute.xlu0 0
        %496 = vperm.xlu0 %495, %v462
        %v497 = vpop.permute.xlu0 %496
        %500 = vset.pattern.permute.xlu0 0
        %501 = vperm.xlu0 %500, %v463
        %v502 = vpop.permute.xlu0 %501
        %505 = vset.pattern.permute.xlu0 0
        %506 = vperm.xlu0 %505, %v464
        %v507 = vpop.permute.xlu0 %506
        %510 = vset.pattern.permute.xlu0 0
        %511 = vperm.xlu0 %510, %v465
        %v512 = vpop.permute.xlu0 %511
        %515 = vset.pattern.permute.xlu0 0
        %516 = vperm.xlu0 %515, %v466
        %v517 = vpop.permute.xlu0 %516
        %520 = vset.pattern.permute.xlu0 0
        %521 = vperm.xlu0 %520, %v467
        %v522 = vpop.permute.xlu0 %521
        %525 = vset.pattern.permute.xlu0 0
        %526 = vperm.xlu0 %525, %v468
        %v527 = vpop.permute.xlu0 %526
        %530 = vset.pattern.permute.xlu0 0
        %531 = vperm.xlu0 %530, %v469
        %v532 = vpop.permute.xlu0 %531
        %535 = vset.pattern.permute.xlu0 0
        %536 = vperm.xlu0 %535, %v470
        %v537 = vpop.permute.xlu0 %536
        %540 = vset.pattern.permute.xlu0 0
        %541 = vperm.xlu0 %540, %v471
        %v542 = vpop.permute.xlu0 %541
        %545 = vset.pattern.permute.xlu0 0
        %546 = vperm.xlu0 %545, %v472
        %v547 = vpop.permute.xlu0 %546
        %550 = vset.pattern.permute.xlu0 0
        %551 = vperm.xlu0 %550, %v473
        %v552 = vpop.permute.xlu0 %551
        %555 = vset.pattern.permute.xlu0 0
        %556 = vperm.xlu0 %555, %v474
        %v557 = vpop.permute.xlu0 %556
        %560 = vset.pattern.permute.xlu0 0
        %561 = vperm.xlu0 %560, %v475
        %v562 = vpop.permute.xlu0 %561
        %565 = vset.pattern.permute.xlu0 0
        %566 = vperm.xlu0 %565, %v476
        %v567 = vpop.permute.xlu0 %566
        %570 = vset.pattern.permute.xlu0 0
        %571 = vperm.xlu0 %570, %v477
        %v572 = vpop.permute.xlu0 %571
        %575 = vset.pattern.permute.xlu0 0
        %576 = vperm.xlu0 %575, %v478
        %v577 = vpop.permute.xlu0 %576
        %580 = vset.pattern.permute.xlu0 0
        %581 = vperm.xlu0 %580, %v479
        %v582 = vpop.permute.xlu0 %581
        %585 = vset.pattern.permute.xlu0 0
        %586 = vperm.xlu0 %585, %v480
        %v587 = vpop.permute.xlu0 %586
        %590 = vset.pattern.permute.xlu0 0
        %591 = vperm.xlu0 %590, %v481
        %v592 = vpop.permute.xlu0 %591
        %595 = vset.pattern.permute.xlu0 0
        %596 = vperm.xlu0 %595, %v482
        %v597 = vpop.permute.xlu0 %596
        %600 = vset.pattern.permute.xlu0 0
        %601 = vperm.xlu0 %600, %v483
        %v602 = vpop.permute.xlu0 %601
        %605 = vset.pattern.permute.xlu0 0
        %606 = vperm.xlu0 %605, %v484
        %v607 = vpop.permute.xlu0 %606
        %610 = vset.pattern.permute.xlu0 0
        %611 = vperm.xlu0 %610, %v485
        %v612 = vpop.permute.xlu0 %611
        %615 = vset.pattern.permute.xlu0 0
        %616 = vperm.xlu0 %615, %v486
        %v617 = vpop.permute.xlu0 %616
        %620 = vset.pattern.permute.xlu0 0
        %621 = vperm.xlu0 %620, %v487
        %v622 = vpop.permute.xlu0 %621
        %625 = vset.pattern.permute.xlu0 0
        %626 = vperm.xlu0 %625, %v488
        %v627 = vpop.permute.xlu0 %626
        %630 = vset.pattern.permute.xlu0 0
        %631 = vperm.xlu0 %630, %v489
        %v632 = vpop.permute.xlu0 %631
        %635 = vset.pattern.permute.xlu0 0
        %636 = vperm.xlu0 %635, %v490
        %v637 = vpop.permute.xlu0 %636
        %640 = vset.pattern.permute.xlu0 0
        %641 = vperm.xlu0 %640, %v491
        %v642 = vpop.permute.xlu0 %641
        %645 = vset.pattern.permute.xlu0 0
        %646 = vperm.xlu0 %645, %v492
        %v647 = vpop.permute.xlu0 %646
        %650 = vset.pattern.permute.xlu0 0
        %651 = vperm.xlu0 %650, %v493
        %v652 = vpop.permute.xlu0 %651
        %v654 = vmul.f32 %v338, %v497
        %v655 = vmul.f32 %v340, %v502
        %v656 = vmul.f32 %v461, %v507
        %v657 = vmul.f32 %v375, %v512
        %v658 = vmul.f32 %v377, %v517
        %v659 = vmul.f32 %v379, %v522
        %v660 = vmul.f32 %v381, %v527
        %v661 = vmul.f32 %v383, %v532
        %v662 = vmul.f32 %v385, %v537
        %v663 = vmul.f32 %v387, %v542
        %v664 = vmul.f32 %v389, %v547
        %v665 = vmul.f32 %v391, %v552
        %v666 = vmul.f32 %v393, %v557
        %v667 = vmul.f32 %v395, %v562
        %v668 = vmul.f32 %v397, %v567
        %v669 = vmul.f32 %v399, %v572
        %v670 = vmul.f32 %v401, %v577
        %v671 = vmul.f32 %v403, %v582
        %v672 = vmul.f32 %v405, %v587
        %v673 = vmul.f32 %v407, %v592
        %v674 = vmul.f32 %v409, %v597
        %v675 = vmul.f32 %v411, %v602
        %v676 = vmul.f32 %v413, %v607
        %v677 = vmul.f32 %v415, %v612
        %v678 = vmul.f32 %v417, %v617
        %v679 = vmul.f32 %v419, %v622
        %v680 = vmul.f32 %v421, %v627
        %v681 = vmul.f32 %v423, %v632
        %v682 = vmul.f32 %v425, %v637
        %v683 = vmul.f32 %v427, %v642
        %v684 = vmul.f32 %v429, %v647
        %v685 = vmul.f32 %v430, %v652
        %v686 = vpack.c.bf16 %v655, %v654
        %v687 = vpack.c.bf16 %v657, %v656
        %v688 = vpack.c.bf16 %v659, %v658
        %v689 = vpack.c.bf16 %v661, %v660
        %v690 = vpack.c.bf16 %v663, %v662
        %v691 = vpack.c.bf16 %v665, %v664
        %v692 = vpack.c.bf16 %v667, %v666
        %v693 = vpack.c.bf16 %v669, %v668
        %v694 = vpack.c.bf16 %v671, %v670
        %v695 = vpack.c.bf16 %v673, %v672
        %v696 = vpack.c.bf16 %v675, %v674
        %v697 = vpack.c.bf16 %v677, %v676
        %v698 = vpack.c.bf16 %v679, %v678
        %v699 = vpack.c.bf16 %v681, %v680
        %v700 = vpack.c.bf16 %v683, %v682
        %v701 = vpack.c.bf16 %v685, %v684
        %v702 = vld [vmem:[%s1] sm:$0xc]
        %703 = vset.pattern.permute.xlu0 1
        %704 = vperm.xlu0 %703, %v462
        %v705 = vpop.permute.xlu0 %704
        %707 = vset.pattern.permute.xlu0 1
        %708 = vperm.xlu0 %707, %v463
        %v709 = vpop.permute.xlu0 %708
        %711 = vset.pattern.permute.xlu0 1
        %712 = vperm.xlu0 %711, %v464
        %v713 = vpop.permute.xlu0 %712
        %715 = vset.pattern.permute.xlu0 1
        %716 = vperm.xlu0 %715, %v465
        %v717 = vpop.permute.xlu0 %716
        %719 = vset.pattern.permute.xlu0 1
        %720 = vperm.xlu0 %719, %v466
        %v721 = vpop.permute.xlu0 %720
        %723 = vset.pattern.permute.xlu0 1
        %724 = vperm.xlu0 %723, %v467
        %v725 = vpop.permute.xlu0 %724
        %727 = vset.pattern.permute.xlu0 1
        %728 = vperm.xlu0 %727, %v468
        %v729 = vpop.permute.xlu0 %728
        %731 = vset.pattern.permute.xlu0 1
        %732 = vperm.xlu0 %731, %v469
        %v733 = vpop.permute.xlu0 %732
        %735 = vset.pattern.permute.xlu0 1
        %736 = vperm.xlu0 %735, %v470
        %v737 = vpop.permute.xlu0 %736
        %739 = vset.pattern.permute.xlu0 1
        %740 = vperm.xlu0 %739, %v471
        %v741 = vpop.permute.xlu0 %740
        %743 = vset.pattern.permute.xlu0 1
        %744 = vperm.xlu0 %743, %v472
        %v745 = vpop.permute.xlu0 %744
        %747 = vset.pattern.permute.xlu0 1
        %748 = vperm.xlu0 %747, %v473
        %v749 = vpop.permute.xlu0 %748
        %751 = vset.pattern.permute.xlu0 1
        %752 = vperm.xlu0 %751, %v474
        %v753 = vpop.permute.xlu0 %752
        %755 = vset.pattern.permute.xlu0 1
        %756 = vperm.xlu0 %755, %v475
        %v757 = vpop.permute.xlu0 %756
        %759 = vset.pattern.permute.xlu0 1
        %760 = vperm.xlu0 %759, %v476
        %v761 = vpop.permute.xlu0 %760
        %763 = vset.pattern.permute.xlu0 1
        %764 = vperm.xlu0 %763, %v477
        %v765 = vpop.permute.xlu0 %764
        %767 = vset.pattern.permute.xlu0 1
        %768 = vperm.xlu0 %767, %v478
        %v769 = vpop.permute.xlu0 %768
        %771 = vset.pattern.permute.xlu0 1
        %772 = vperm.xlu0 %771, %v479
        %v773 = vpop.permute.xlu0 %772
        %775 = vset.pattern.permute.xlu0 1
        %776 = vperm.xlu0 %775, %v480
        %v777 = vpop.permute.xlu0 %776
        %779 = vset.pattern.permute.xlu0 1
        %780 = vperm.xlu0 %779, %v481
        %v781 = vpop.permute.xlu0 %780
        %783 = vset.pattern.permute.xlu0 1
        %784 = vperm.xlu0 %783, %v482
        %v785 = vpop.permute.xlu0 %784
        %787 = vset.pattern.permute.xlu0 1
        %788 = vperm.xlu0 %787, %v483
        %v789 = vpop.permute.xlu0 %788
        %791 = vset.pattern.permute.xlu0 1
        %792 = vperm.xlu0 %791, %v484
        %v793 = vpop.permute.xlu0 %792
        %795 = vset.pattern.permute.xlu0 1
        %796 = vperm.xlu0 %795, %v485
        %v797 = vpop.permute.xlu0 %796
        %799 = vset.pattern.permute.xlu0 1
        %800 = vperm.xlu0 %799, %v486
        %v801 = vpop.permute.xlu0 %800
        %803 = vset.pattern.permute.xlu0 1
        %804 = vperm.xlu0 %803, %v487
        %v805 = vpop.permute.xlu0 %804
        %807 = vset.pattern.permute.xlu0 1
        %808 = vperm.xlu0 %807, %v488
        %v809 = vpop.permute.xlu0 %808
        %811 = vset.pattern.permute.xlu0 1
        %812 = vperm.xlu0 %811, %v489
        %v813 = vpop.permute.xlu0 %812
        %815 = vset.pattern.permute.xlu0 1
        %816 = vperm.xlu0 %815, %v490
        %v817 = vpop.permute.xlu0 %816
        %819 = vset.pattern.permute.xlu0 1
        %820 = vperm.xlu0 %819, %v491
        %v821 = vpop.permute.xlu0 %820
        %823 = vset.pattern.permute.xlu0 1
        %824 = vperm.xlu0 %823, %v492
        %v825 = vpop.permute.xlu0 %824
        %827 = vset.pattern.permute.xlu0 1
        %828 = vperm.xlu0 %827, %v493
        %v829 = vpop.permute.xlu0 %828
        %v831 = vmul.f32 %v329, %v705
        %v832 = vmul.f32 %v330, %v709
        %v833 = vmul.f32 %v299, %v713
        %v834 = vmul.f32 %v300, %v717
        %v835 = vmul.f32 %v301, %v721
        %v836 = vmul.f32 %v302, %v725
        %v837 = vmul.f32 %v303, %v729
        %v838 = vmul.f32 %v304, %v733
        %v839 = vmul.f32 %v305, %v737
        %v840 = vmul.f32 %v306, %v741
        %v841 = vmul.f32 %v307, %v745
        %v842 = vmul.f32 %v308, %v749
        %v843 = vmul.f32 %v309, %v753
        %v844 = vmul.f32 %v310, %v757
        %v845 = vmul.f32 %v311, %v761
        %v846 = vmul.f32 %v312, %v765
        %v847 = vmul.f32 %v313, %v769
        %v848 = vmul.f32 %v314, %v773
        %v849 = vmul.f32 %v315, %v777
        %v850 = vmul.f32 %v316, %v781
        %v851 = vmul.f32 %v317, %v785
        %v852 = vmul.f32 %v318, %v789
        %v853 = vmul.f32 %v319, %v793
        %v854 = vmul.f32 %v320, %v797
        %v855 = vmul.f32 %v321, %v801
        %v856 = vmul.f32 %v322, %v805
        %v857 = vmul.f32 %v323, %v809
        %v858 = vmul.f32 %v324, %v813
        %v859 = vmul.f32 %v325, %v817
        %v860 = vmul.f32 %v326, %v821
        %v861 = vmul.f32 %v327, %v825
        %v862 = vmul.f32 %v328, %v829
        %v863 = vpack.c.bf16 %v832, %v831
        %v864 = vpack.c.bf16 %v834, %v833
        %v865 = vpack.c.bf16 %v836, %v835
        %v866 = vpack.c.bf16 %v838, %v837
        %v867 = vpack.c.bf16 %v840, %v839
        %v868 = vpack.c.bf16 %v842, %v841
        %v869 = vpack.c.bf16 %v844, %v843
        %v870 = vpack.c.bf16 %v846, %v845
        %v871 = vpack.c.bf16 %v848, %v847
        %v872 = vpack.c.bf16 %v850, %v849
        %v873 = vpack.c.bf16 %v852, %v851
        %v874 = vpack.c.bf16 %v854, %v853
        %v875 = vpack.c.bf16 %v856, %v855
        %v876 = vpack.c.bf16 %v858, %v857
        %v877 = vpack.c.bf16 %v860, %v859
        %v878 = vpack.c.bf16 %v862, %v861
        %v880 = vunpack.c.l.b16 %v702
        %v881 = vpack.c.b16 %v880, %v880
        %v882 = vrot.slane %v881, 2
        %vm883 = vcmask 31744
        %v885 = vsel %vm883, %v863, 0
        %v888 = vsel %vm883, %v864, 0
        %v891 = vsel %vm883, %v865, 0
        %v894 = vsel %vm883, %v866, 0
        %v897 = vsel %vm883, %v867, 0
        %v900 = vsel %vm883, %v868, 0
        %v903 = vsel %vm883, %v869, 0
        %v906 = vsel %vm883, %v870, 0
        %v909 = vsel %vm883, %v871, 0
        %v912 = vsel %vm883, %v872, 0
        %v915 = vsel %vm883, %v873, 0
        %v918 = vsel %vm883, %v874, 0
        %v921 = vsel %vm883, %v875, 0
        %v924 = vsel %vm883, %v876, 0
        %v927 = vsel %vm883, %v877, 0
        %v930 = vsel %vm883, %v878, 0
        %vm932 = vcmask 1041408
        %v934 = vsel %vm932, %v882, 0
        %936 = vmatprep.subr.bf16.mxu0 0
        %937 = vmatpush1.bf16.msra.mxu0 0
        %938 = vmatprep.subr.bf16.mxu0 0
        %939 = vmatpush1.bf16.msra.mxu0 0
        %940 = vmatprep.subr.bf16.mxu0 0
        %941 = vmatpush1.bf16.msra.mxu0 0
        %942 = vmatprep.subr.bf16.mxu0 0
        %943 = vmatpush1.bf16.msra.mxu0 0
        %944 = vmatprep.subr.bf16.mxu0 0
        %945 = vmatpush1.bf16.msra.mxu0 0
        %946 = vmatprep.subr.bf16.mxu0 0
        %947 = vmatpush1.bf16.msra.mxu0 0
        %948 = vmatprep.subr.bf16.mxu0 0
        %949 = vmatpush1.bf16.msra.mxu0 0
        %950 = vmatprep.subr.bf16.mxu0 0
        %951 = vmatpush1.bf16.msra.mxu0 %v934
        %952 = vmatprep.subr.bf16.mxu0 0
        %953 = vmatpush2.bf16.msra.mxu0 0
        %954 = vmatprep.subr.bf16.mxu0 0
        %955 = vmatpush2.bf16.msra.mxu0 0
        %956 = vmatprep.subr.bf16.mxu0 0
        %957 = vmatpush2.bf16.msra.mxu0 0
        %958 = vmatprep.subr.bf16.mxu0 0
        %959 = vmatpush2.bf16.msra.mxu0 0
        %960 = vmatprep.subr.bf16.mxu0 0
        %961 = vmatpush2.bf16.msra.mxu0 0
        %962 = vmatprep.subr.bf16.mxu0 0
        %963 = vmatpush2.bf16.msra.mxu0 0
        %964 = vmatprep.subr.bf16.mxu0 0
        %965 = vmatpush2.bf16.msra.mxu0 0
        %966 = vmatprep.subr.bf16.mxu0 0
        %967 = vmatpush2.bf16.msra.mxu0 0
        %968 = vmatprep.mubr.bf16.mxu0 0
        %969 = vmatmul.mubr.bf16.gmra.mxu0 %v885
        %v970 = vpop.f32.mrf.mxu0
        %v971 = vadd.f32 0.0, %v970
        %v972 = vpop.f32.mrf.mxu0
        %v973 = vpop.f32.mrf.mxu0
        %v974 = vadd.f32 0.0, %v973
        %v975 = vpop.f32.mrf.mxu0
        %976 = vmatprep.mubr.bf16.mxu0 0
        %977 = vmatmul.mubr.bf16.gmra.mxu0 %v888
        %v978 = vpop.f32.mrf.mxu0
        %v979 = vadd.f32 0.0, %v978
        %v980 = vpop.f32.mrf.mxu0
        %v981 = vpop.f32.mrf.mxu0
        %v982 = vadd.f32 0.0, %v981
        %v983 = vpop.f32.mrf.mxu0
        %984 = vmatprep.mubr.bf16.mxu0 0
        %985 = vmatmul.mubr.bf16.gmra.mxu0 %v891
        %v986 = vpop.f32.mrf.mxu0
        %v987 = vadd.f32 0.0, %v986
        %v988 = vpop.f32.mrf.mxu0
        %v989 = vpop.f32.mrf.mxu0
        %v990 = vadd.f32 0.0, %v989
        %v991 = vpop.f32.mrf.mxu0
        %992 = vmatprep.mubr.bf16.mxu0 0
        %993 = vmatmul.mubr.bf16.gmra.mxu0 %v894
        %v994 = vpop.f32.mrf.mxu0
        %v995 = vadd.f32 0.0, %v994
        %v996 = vpop.f32.mrf.mxu0
        %v997 = vpop.f32.mrf.mxu0
        %v998 = vadd.f32 0.0, %v997
        %v999 = vpop.f32.mrf.mxu0
        %1000 = vmatprep.mubr.bf16.mxu0 0
        %1001 = vmatmul.mubr.bf16.gmra.mxu0 %v897
        %v1002 = vpop.f32.mrf.mxu0
        %v1003 = vadd.f32 0.0, %v1002
        %v1004 = vpop.f32.mrf.mxu0
        %v1005 = vpop.f32.mrf.mxu0
        %v1006 = vadd.f32 0.0, %v1005
        %v1007 = vpop.f32.mrf.mxu0
        %1008 = vmatprep.mubr.bf16.mxu0 0
        %1009 = vmatmul.mubr.bf16.gmra.mxu0 %v900
        %v1010 = vpop.f32.mrf.mxu0
        %v1011 = vadd.f32 0.0, %v1010
        %v1012 = vpop.f32.mrf.mxu0
        %v1013 = vpop.f32.mrf.mxu0
        %v1014 = vadd.f32 0.0, %v1013
        %v1015 = vpop.f32.mrf.mxu0
        %1016 = vmatprep.mubr.bf16.mxu0 0
        %1017 = vmatmul.mubr.bf16.gmra.mxu0 %v903
        %v1018 = vpop.f32.mrf.mxu0
        %v1019 = vadd.f32 0.0, %v1018
        %v1020 = vpop.f32.mrf.mxu0
        %v1021 = vpop.f32.mrf.mxu0
        %v1022 = vadd.f32 0.0, %v1021
        %v1023 = vpop.f32.mrf.mxu0
        %1024 = vmatprep.mubr.bf16.mxu0 0
        %1025 = vmatmul.mubr.bf16.gmra.mxu0 %v906
        %v1026 = vpop.f32.mrf.mxu0
        %v1027 = vadd.f32 0.0, %v1026
        %v1028 = vpop.f32.mrf.mxu0
        %v1029 = vpop.f32.mrf.mxu0
        %v1030 = vadd.f32 0.0, %v1029
        %v1031 = vpop.f32.mrf.mxu0
        %1032 = vmatprep.mubr.bf16.mxu0 0
        %1033 = vmatmul.mubr.bf16.gmra.mxu0 %v909
        %v1034 = vpop.f32.mrf.mxu0
        %v1035 = vadd.f32 0.0, %v1034
        %v1036 = vpop.f32.mrf.mxu0
        %v1037 = vpop.f32.mrf.mxu0
        %v1038 = vadd.f32 0.0, %v1037
        %v1039 = vpop.f32.mrf.mxu0
        %1040 = vmatprep.mubr.bf16.mxu0 0
        %1041 = vmatmul.mubr.bf16.gmra.mxu0 %v912
        %v1042 = vpop.f32.mrf.mxu0
        %v1043 = vadd.f32 0.0, %v1042
        %v1044 = vpop.f32.mrf.mxu0
        %v1045 = vpop.f32.mrf.mxu0
        %v1046 = vadd.f32 0.0, %v1045
        %v1047 = vpop.f32.mrf.mxu0
        %1048 = vmatprep.mubr.bf16.mxu0 0
        %1049 = vmatmul.mubr.bf16.gmra.mxu0 %v915
        %v1050 = vpop.f32.mrf.mxu0
        %v1051 = vadd.f32 0.0, %v1050
        %v1052 = vpop.f32.mrf.mxu0
        %v1053 = vpop.f32.mrf.mxu0
        %v1054 = vadd.f32 0.0, %v1053
        %v1055 = vpop.f32.mrf.mxu0
        %1056 = vmatprep.mubr.bf16.mxu0 0
        %1057 = vmatmul.mubr.bf16.gmra.mxu0 %v918
        %v1058 = vpop.f32.mrf.mxu0
        %v1059 = vadd.f32 0.0, %v1058
        %v1060 = vpop.f32.mrf.mxu0
        %v1061 = vpop.f32.mrf.mxu0
        %v1062 = vadd.f32 0.0, %v1061
        %v1063 = vpop.f32.mrf.mxu0
        %1064 = vmatprep.mubr.bf16.mxu0 0
        %1065 = vmatmul.mubr.bf16.gmra.mxu0 %v921
        %v1066 = vpop.f32.mrf.mxu0
        %v1067 = vadd.f32 0.0, %v1066
        %v1068 = vpop.f32.mrf.mxu0
        %v1069 = vpop.f32.mrf.mxu0
        %v1070 = vadd.f32 0.0, %v1069
        %v1071 = vpop.f32.mrf.mxu0
        %1072 = vmatprep.mubr.bf16.mxu0 0
        %1073 = vmatmul.mubr.bf16.gmra.mxu0 %v924
        %v1074 = vpop.f32.mrf.mxu0
        %v1075 = vadd.f32 0.0, %v1074
        %v1076 = vpop.f32.mrf.mxu0
        %v1077 = vpop.f32.mrf.mxu0
        %v1078 = vadd.f32 0.0, %v1077
        %v1079 = vpop.f32.mrf.mxu0
        %1080 = vmatprep.mubr.bf16.mxu0 0
        %1081 = vmatmul.mubr.bf16.gmra.mxu0 %v927
        %v1082 = vpop.f32.mrf.mxu0
        %v1083 = vadd.f32 0.0, %v1082
        %v1084 = vpop.f32.mrf.mxu0
        %v1085 = vpop.f32.mrf.mxu0
        %v1086 = vadd.f32 0.0, %v1085
        %v1087 = vpop.f32.mrf.mxu0
        %1088 = vmatprep.mubr.bf16.mxu0 0
        %1089 = vmatmul.mubr.bf16.gmra.mxu0 %v930
        %v1090 = vpop.f32.mrf.mxu0
        %v1091 = vadd.f32 0.0, %v1090
        %v1092 = vpop.f32.mrf.mxu0
        %v1093 = vpop.f32.mrf.mxu0
        %v1094 = vadd.f32 0.0, %v1093
        %v1095 = vpop.f32.mrf.mxu0
        %1096 = vdwg.mxu0
        %v1098 = vsel %vm883, %v686, 0
        %v1101 = vsel %vm883, %v687, 0
        %v1104 = vsel %vm883, %v688, 0
        %v1107 = vsel %vm883, %v689, 0
        %v1110 = vsel %vm883, %v690, 0
        %v1113 = vsel %vm883, %v691, 0
        %v1116 = vsel %vm883, %v692, 0
        %v1119 = vsel %vm883, %v693, 0
        %v1122 = vsel %vm883, %v694, 0
        %v1125 = vsel %vm883, %v695, 0
        %v1128 = vsel %vm883, %v696, 0
        %v1131 = vsel %vm883, %v697, 0
        %v1134 = vsel %vm883, %v698, 0
        %v1137 = vsel %vm883, %v699, 0
        %v1140 = vsel %vm883, %v700, 0
        %v1143 = vsel %vm883, %v701, 0
        %v1146 = vsel %vm932, %v331, 0
        %1148 = vmatprep.subr.bf16.mxu0 0
        %1149 = vmatpush1.bf16.msra.mxu0 0
        %1150 = vmatprep.subr.bf16.mxu0 0
        %1151 = vmatpush1.bf16.msra.mxu0 0
        %1152 = vmatprep.subr.bf16.mxu0 0
        %1153 = vmatpush1.bf16.msra.mxu0 0
        %1154 = vmatprep.subr.bf16.mxu0 0
        %1155 = vmatpush1.bf16.msra.mxu0 0
        %1156 = vmatprep.subr.bf16.mxu0 0
        %1157 = vmatpush1.bf16.msra.mxu0 0
        %1158 = vmatprep.subr.bf16.mxu0 0
        %1159 = vmatpush1.bf16.msra.mxu0 0
        %1160 = vmatprep.subr.bf16.mxu0 0
        %1161 = vmatpush1.bf16.msra.mxu0 0
        %1162 = vmatprep.subr.bf16.mxu0 0
        %1163 = vmatpush1.bf16.msra.mxu0 %v1146
        %1164 = vmatprep.subr.bf16.mxu0 0
        %1165 = vmatpush2.bf16.msra.mxu0 0
        %1166 = vmatprep.subr.bf16.mxu0 0
        %1167 = vmatpush2.bf16.msra.mxu0 0
        %1168 = vmatprep.subr.bf16.mxu0 0
        %1169 = vmatpush2.bf16.msra.mxu0 0
        %1170 = vmatprep.subr.bf16.mxu0 0
        %1171 = vmatpush2.bf16.msra.mxu0 0
        %1172 = vmatprep.subr.bf16.mxu0 0
        %1173 = vmatpush2.bf16.msra.mxu0 0
        %1174 = vmatprep.subr.bf16.mxu0 0
        %1175 = vmatpush2.bf16.msra.mxu0 0
        %1176 = vmatprep.subr.bf16.mxu0 0
        %1177 = vmatpush2.bf16.msra.mxu0 0
        %1178 = vmatprep.subr.bf16.mxu0 0
        %1179 = vmatpush2.bf16.msra.mxu0 0
        %1180 = vmatprep.mubr.bf16.mxu0 0
        %1181 = vmatmul.mubr.bf16.gmra.mxu0 %v1098
        %v1182 = vpop.f32.mrf.mxu0
        %v1183 = vadd.f32 %v971, %v1182
        %v1184 = vpop.f32.mrf.mxu0
        %v1185 = vpop.f32.mrf.mxu0
        %v1186 = vadd.f32 %v974, %v1185
        %v1187 = vpop.f32.mrf.mxu0
        %1188 = vmatprep.mubr.bf16.mxu0 0
        %1189 = vmatmul.mubr.bf16.gmra.mxu0 %v1101
        %v1190 = vpop.f32.mrf.mxu0
        %v1191 = vadd.f32 %v979, %v1190
        %v1192 = vpop.f32.mrf.mxu0
        %v1193 = vpop.f32.mrf.mxu0
        %v1194 = vadd.f32 %v982, %v1193
        %v1195 = vpop.f32.mrf.mxu0
        %1196 = vmatprep.mubr.bf16.mxu0 0
        %1197 = vmatmul.mubr.bf16.gmra.mxu0 %v1104
        %v1198 = vpop.f32.mrf.mxu0
        %v1199 = vadd.f32 %v987, %v1198
        %v1200 = vpop.f32.mrf.mxu0
        %v1201 = vpop.f32.mrf.mxu0
        %v1202 = vadd.f32 %v990, %v1201
        %v1203 = vpop.f32.mrf.mxu0
        %1204 = vmatprep.mubr.bf16.mxu0 0
        %1205 = vmatmul.mubr.bf16.gmra.mxu0 %v1107
        %v1206 = vpop.f32.mrf.mxu0
        %v1207 = vadd.f32 %v995, %v1206
        %v1208 = vpop.f32.mrf.mxu0
        %v1209 = vpop.f32.mrf.mxu0
        %v1210 = vadd.f32 %v998, %v1209
        %v1211 = vpop.f32.mrf.mxu0
        %1212 = vmatprep.mubr.bf16.mxu0 0
        %1213 = vmatmul.mubr.bf16.gmra.mxu0 %v1110
        %v1214 = vpop.f32.mrf.mxu0
        %v1215 = vadd.f32 %v1003, %v1214
        %v1216 = vpop.f32.mrf.mxu0
        %v1217 = vpop.f32.mrf.mxu0
        %v1218 = vadd.f32 %v1006, %v1217
        %v1219 = vpop.f32.mrf.mxu0
        %1220 = vmatprep.mubr.bf16.mxu0 0
        %1221 = vmatmul.mubr.bf16.gmra.mxu0 %v1113
        %v1222 = vpop.f32.mrf.mxu0
        %v1223 = vadd.f32 %v1011, %v1222
        %v1224 = vpop.f32.mrf.mxu0
        %v1225 = vpop.f32.mrf.mxu0
        %v1226 = vadd.f32 %v1014, %v1225
        %v1227 = vpop.f32.mrf.mxu0
        %1228 = vmatprep.mubr.bf16.mxu0 0
        %1229 = vmatmul.mubr.bf16.gmra.mxu0 %v1116
        %v1230 = vpop.f32.mrf.mxu0
        %v1231 = vadd.f32 %v1019, %v1230
        %v1232 = vpop.f32.mrf.mxu0
        %v1233 = vpop.f32.mrf.mxu0
        %v1234 = vadd.f32 %v1022, %v1233
        %v1235 = vpop.f32.mrf.mxu0
        %1236 = vmatprep.mubr.bf16.mxu0 0
        %1237 = vmatmul.mubr.bf16.gmra.mxu0 %v1119
        %v1238 = vpop.f32.mrf.mxu0
        %v1239 = vadd.f32 %v1027, %v1238
        %v1240 = vpop.f32.mrf.mxu0
        %v1241 = vpop.f32.mrf.mxu0
        %v1242 = vadd.f32 %v1030, %v1241
        %v1243 = vpop.f32.mrf.mxu0
        %1244 = vmatprep.mubr.bf16.mxu0 0
        %1245 = vmatmul.mubr.bf16.gmra.mxu0 %v1122
        %v1246 = vpop.f32.mrf.mxu0
        %v1247 = vadd.f32 %v1035, %v1246
        %v1248 = vpop.f32.mrf.mxu0
        %v1249 = vpop.f32.mrf.mxu0
        %v1250 = vadd.f32 %v1038, %v1249
        %v1251 = vpop.f32.mrf.mxu0
        %1252 = vmatprep.mubr.bf16.mxu0 0
        %1253 = vmatmul.mubr.bf16.gmra.mxu0 %v1125
        %v1254 = vpop.f32.mrf.mxu0
        %v1255 = vadd.f32 %v1043, %v1254
        %v1256 = vpop.f32.mrf.mxu0
        %v1257 = vpop.f32.mrf.mxu0
        %v1258 = vadd.f32 %v1046, %v1257
        %v1259 = vpop.f32.mrf.mxu0
        %1260 = vmatprep.mubr.bf16.mxu0 0
        %1261 = vmatmul.mubr.bf16.gmra.mxu0 %v1128
        %v1262 = vpop.f32.mrf.mxu0
        %v1263 = vadd.f32 %v1051, %v1262
        %v1264 = vpop.f32.mrf.mxu0
        %v1265 = vpop.f32.mrf.mxu0
        %v1266 = vadd.f32 %v1054, %v1265
        %v1267 = vpop.f32.mrf.mxu0
        %1268 = vmatprep.mubr.bf16.mxu0 0
        %1269 = vmatmul.mubr.bf16.gmra.mxu0 %v1131
        %v1270 = vpop.f32.mrf.mxu0
        %v1271 = vadd.f32 %v1059, %v1270
        %v1272 = vpop.f32.mrf.mxu0
        %v1273 = vpop.f32.mrf.mxu0
        %v1274 = vadd.f32 %v1062, %v1273
        %v1275 = vpop.f32.mrf.mxu0
        %1276 = vmatprep.mubr.bf16.mxu0 0
        %1277 = vmatmul.mubr.bf16.gmra.mxu0 %v1134
        %v1278 = vpop.f32.mrf.mxu0
        %v1279 = vadd.f32 %v1067, %v1278
        %v1280 = vpop.f32.mrf.mxu0
        %v1281 = vpop.f32.mrf.mxu0
        %v1282 = vadd.f32 %v1070, %v1281
        %v1283 = vpop.f32.mrf.mxu0
        %1284 = vmatprep.mubr.bf16.mxu0 0
        %1285 = vmatmul.mubr.bf16.gmra.mxu0 %v1137
        %v1286 = vpop.f32.mrf.mxu0
        %v1287 = vadd.f32 %v1075, %v1286
        %v1288 = vpop.f32.mrf.mxu0
        %v1289 = vpop.f32.mrf.mxu0
        %v1290 = vadd.f32 %v1078, %v1289
        %v1291 = vpop.f32.mrf.mxu0
        %1292 = vmatprep.mubr.bf16.mxu0 0
        %1293 = vmatmul.mubr.bf16.gmra.mxu0 %v1140
        %v1294 = vpop.f32.mrf.mxu0
        %v1295 = vadd.f32 %v1083, %v1294
        %v1296 = vpop.f32.mrf.mxu0
        %v1297 = vpop.f32.mrf.mxu0
        %v1298 = vadd.f32 %v1086, %v1297
        %v1299 = vpop.f32.mrf.mxu0
        %1300 = vmatprep.mubr.bf16.mxu0 0
        %1301 = vmatmul.mubr.bf16.gmra.mxu0 %v1143
        %v1302 = vpop.f32.mrf.mxu0
        %v1303 = vadd.f32 %v1091, %v1302
        %v1304 = vpop.f32.mrf.mxu0
        %v1305 = vpop.f32.mrf.mxu0
        %v1306 = vadd.f32 %v1094, %v1305
        %v1307 = vpop.f32.mrf.mxu0
        %1308 = vdwg.mxu0
        %v1309 = vld [vmem:[%s1 + $0x4] sm:$0x3]
        %vm1310 = vcmask 1046528
        %v1311 = vrot.slane %v329, 1
        %v1312 = vrot.slane %v330, 1
        %v1313 = vsel %vm1310, %v1311, %v1312
        %v1316 = vrot.slane %v299, 1
        %v1317 = vrot.slane %v300, 1
        %v1318 = vsel %vm1310, %v1316, %v1317
        %v1319 = vrot.slane %v301, 1
        %v1320 = vsel %vm1310, %v1317, %v1319
        %v1321 = vrot.slane %v302, 1
        %v1322 = vsel %vm1310, %v1319, %v1321
        %v1323 = vrot.slane %v303, 1
        %v1324 = vsel %vm1310, %v1321, %v1323
        %v1325 = vrot.slane %v304, 1
        %v1326 = vsel %vm1310, %v1323, %v1325
        %v1327 = vrot.slane %v305, 1
        %v1328 = vsel %vm1310, %v1325, %v1327
        %v1329 = vrot.slane %v306, 1
        %v1330 = vsel %vm1310, %v1327, %v1329
        %v1331 = vrot.slane %v307, 1
        %v1332 = vsel %vm1310, %v1329, %v1331
        %v1333 = vrot.slane %v308, 1
        %v1334 = vsel %vm1310, %v1331, %v1333
        %v1335 = vrot.slane %v309, 1
        %v1336 = vsel %vm1310, %v1333, %v1335
        %v1337 = vrot.slane %v310, 1
        %v1338 = vsel %vm1310, %v1335, %v1337
        %v1339 = vrot.slane %v311, 1
        %v1340 = vsel %vm1310, %v1337, %v1339
        %v1341 = vrot.slane %v312, 1
        %v1342 = vsel %vm1310, %v1339, %v1341
        %v1343 = vrot.slane %v313, 1
        %v1344 = vsel %vm1310, %v1341, %v1343
        %v1345 = vrot.slane %v314, 1
        %v1346 = vsel %vm1310, %v1343, %v1345
        %v1347 = vrot.slane %v315, 1
        %v1348 = vsel %vm1310, %v1345, %v1347
        %v1349 = vrot.slane %v316, 1
        %v1350 = vsel %vm1310, %v1347, %v1349
        %v1351 = vrot.slane %v317, 1
        %v1352 = vsel %vm1310, %v1349, %v1351
        %v1353 = vrot.slane %v318, 1
        %v1354 = vsel %vm1310, %v1351, %v1353
        %v1355 = vrot.slane %v319, 1
        %v1356 = vsel %vm1310, %v1353, %v1355
        %v1357 = vrot.slane %v320, 1
        %v1358 = vsel %vm1310, %v1355, %v1357
        %v1359 = vrot.slane %v321, 1
        %v1360 = vsel %vm1310, %v1357, %v1359
        %v1361 = vrot.slane %v322, 1
        %v1362 = vsel %vm1310, %v1359, %v1361
        %v1363 = vrot.slane %v323, 1
        %v1364 = vsel %vm1310, %v1361, %v1363
        %v1365 = vrot.slane %v324, 1
        %v1366 = vsel %vm1310, %v1363, %v1365
        %v1367 = vrot.slane %v325, 1
        %v1368 = vsel %vm1310, %v1365, %v1367
        %v1369 = vrot.slane %v326, 1
        %v1370 = vsel %vm1310, %v1367, %v1369
        %v1371 = vrot.slane %v327, 1
        %v1372 = vsel %vm1310, %v1369, %v1371
        %v1373 = vrot.slane %v328, 1
        %v1374 = vsel %vm1310, %v1371, %v1373
        %v1375 = vsel %vm1310, %v1373, %v1311
        %v1407 = vsel %vm1310, %v1312, %v1316
        %1408 = vset.pattern.permute.xlu0 2
        %1409 = vperm.xlu0 %1408, %v462
        %v1410 = vpop.permute.xlu0 %1409
        %1412 = vset.pattern.permute.xlu0 2
        %1413 = vperm.xlu0 %1412, %v463
        %v1414 = vpop.permute.xlu0 %1413
        %1416 = vset.pattern.permute.xlu0 2
        %1417 = vperm.xlu0 %1416, %v464
        %v1418 = vpop.permute.xlu0 %1417
        %1420 = vset.pattern.permute.xlu0 2
        %1421 = vperm.xlu0 %1420, %v465
        %v1422 = vpop.permute.xlu0 %1421
        %1424 = vset.pattern.permute.xlu0 2
        %1425 = vperm.xlu0 %1424, %v466
        %v1426 = vpop.permute.xlu0 %1425
        %1428 = vset.pattern.permute.xlu0 2
        %1429 = vperm.xlu0 %1428, %v467
        %v1430 = vpop.permute.xlu0 %1429
        %1432 = vset.pattern.permute.xlu0 2
        %1433 = vperm.xlu0 %1432, %v468
        %v1434 = vpop.permute.xlu0 %1433
        %1436 = vset.pattern.permute.xlu0 2
        %1437 = vperm.xlu0 %1436, %v469
        %v1438 = vpop.permute.xlu0 %1437
        %1440 = vset.pattern.permute.xlu0 2
        %1441 = vperm.xlu0 %1440, %v470
        %v1442 = vpop.permute.xlu0 %1441
        %1444 = vset.pattern.permute.xlu0 2
        %1445 = vperm.xlu0 %1444, %v471
        %v1446 = vpop.permute.xlu0 %1445
        %1448 = vset.pattern.permute.xlu0 2
        %1449 = vperm.xlu0 %1448, %v472
        %v1450 = vpop.permute.xlu0 %1449
        %1452 = vset.pattern.permute.xlu0 2
        %1453 = vperm.xlu0 %1452, %v473
        %v1454 = vpop.permute.xlu0 %1453
        %1456 = vset.pattern.permute.xlu0 2
        %1457 = vperm.xlu0 %1456, %v474
        %v1458 = vpop.permute.xlu0 %1457
        %1460 = vset.pattern.permute.xlu0 2
        %1461 = vperm.xlu0 %1460, %v475
        %v1462 = vpop.permute.xlu0 %1461
        %1464 = vset.pattern.permute.xlu0 2
        %1465 = vperm.xlu0 %1464, %v476
        %v1466 = vpop.permute.xlu0 %1465
        %1468 = vset.pattern.permute.xlu0 2
        %1469 = vperm.xlu0 %1468, %v477
        %v1470 = vpop.permute.xlu0 %1469
        %1472 = vset.pattern.permute.xlu0 2
        %1473 = vperm.xlu0 %1472, %v478
        %v1474 = vpop.permute.xlu0 %1473
        %1476 = vset.pattern.permute.xlu0 2
        %1477 = vperm.xlu0 %1476, %v479
        %v1478 = vpop.permute.xlu0 %1477
        %1480 = vset.pattern.permute.xlu0 2
        %1481 = vperm.xlu0 %1480, %v480
        %v1482 = vpop.permute.xlu0 %1481
        %1484 = vset.pattern.permute.xlu0 2
        %1485 = vperm.xlu0 %1484, %v481
        %v1486 = vpop.permute.xlu0 %1485
        %1488 = vset.pattern.permute.xlu0 2
        %1489 = vperm.xlu0 %1488, %v482
        %v1490 = vpop.permute.xlu0 %1489
        %1492 = vset.pattern.permute.xlu0 2
        %1493 = vperm.xlu0 %1492, %v483
        %v1494 = vpop.permute.xlu0 %1493
        %1496 = vset.pattern.permute.xlu0 2
        %1497 = vperm.xlu0 %1496, %v484
        %v1498 = vpop.permute.xlu0 %1497
        %1500 = vset.pattern.permute.xlu0 2
        %1501 = vperm.xlu0 %1500, %v485
        %v1502 = vpop.permute.xlu0 %1501
        %1504 = vset.pattern.permute.xlu0 2
        %1505 = vperm.xlu0 %1504, %v486
        %v1506 = vpop.permute.xlu0 %1505
        %1508 = vset.pattern.permute.xlu0 2
        %1509 = vperm.xlu0 %1508, %v487
        %v1510 = vpop.permute.xlu0 %1509
        %1512 = vset.pattern.permute.xlu0 2
        %1513 = vperm.xlu0 %1512, %v488
        %v1514 = vpop.permute.xlu0 %1513
        %1516 = vset.pattern.permute.xlu0 2
        %1517 = vperm.xlu0 %1516, %v489
        %v1518 = vpop.permute.xlu0 %1517
        %1520 = vset.pattern.permute.xlu0 2
        %1521 = vperm.xlu0 %1520, %v490
        %v1522 = vpop.permute.xlu0 %1521
        %1524 = vset.pattern.permute.xlu0 2
        %1525 = vperm.xlu0 %1524, %v491
        %v1526 = vpop.permute.xlu0 %1525
        %1528 = vset.pattern.permute.xlu0 2
        %1529 = vperm.xlu0 %1528, %v492
        %v1530 = vpop.permute.xlu0 %1529
        %1532 = vset.pattern.permute.xlu0 2
        %1533 = vperm.xlu0 %1532, %v493
        %v1534 = vpop.permute.xlu0 %1533
        %v1536 = vmul.f32 %v1313, %v1410
        %v1537 = vmul.f32 %v1407, %v1414
        %v1538 = vmul.f32 %v1318, %v1418
        %v1539 = vmul.f32 %v1320, %v1422
        %v1540 = vmul.f32 %v1322, %v1426
        %v1541 = vmul.f32 %v1324, %v1430
        %v1542 = vmul.f32 %v1326, %v1434
        %v1543 = vmul.f32 %v1328, %v1438
        %v1544 = vmul.f32 %v1330, %v1442
        %v1545 = vmul.f32 %v1332, %v1446
        %v1546 = vmul.f32 %v1334, %v1450
        %v1547 = vmul.f32 %v1336, %v1454
        %v1548 = vmul.f32 %v1338, %v1458
        %v1549 = vmul.f32 %v1340, %v1462
        %v1550 = vmul.f32 %v1342, %v1466
        %v1551 = vmul.f32 %v1344, %v1470
        %v1552 = vmul.f32 %v1346, %v1474
        %v1553 = vmul.f32 %v1348, %v1478
        %v1554 = vmul.f32 %v1350, %v1482
        %v1555 = vmul.f32 %v1352, %v1486
        %v1556 = vmul.f32 %v1354, %v1490
        %v1557 = vmul.f32 %v1356, %v1494
        %v1558 = vmul.f32 %v1358, %v1498
        %v1559 = vmul.f32 %v1360, %v1502
        %v1560 = vmul.f32 %v1362, %v1506
        %v1561 = vmul.f32 %v1364, %v1510
        %v1562 = vmul.f32 %v1366, %v1514
        %v1563 = vmul.f32 %v1368, %v1518
        %v1564 = vmul.f32 %v1370, %v1522
        %v1565 = vmul.f32 %v1372, %v1526
        %v1566 = vmul.f32 %v1374, %v1530
        %v1567 = vmul.f32 %v1375, %v1534
        %v1568 = vpack.c.bf16 %v1537, %v1536
        %v1569 = vpack.c.bf16 %v1539, %v1538
        %v1570 = vpack.c.bf16 %v1541, %v1540
        %v1571 = vpack.c.bf16 %v1543, %v1542
        %v1572 = vpack.c.bf16 %v1545, %v1544
        %v1573 = vpack.c.bf16 %v1547, %v1546
        %v1574 = vpack.c.bf16 %v1549, %v1548
        %v1575 = vpack.c.bf16 %v1551, %v1550
        %v1576 = vpack.c.bf16 %v1553, %v1552
        %v1577 = vpack.c.bf16 %v1555, %v1554
        %v1578 = vpack.c.bf16 %v1557, %v1556
        %v1579 = vpack.c.bf16 %v1559, %v1558
        %v1580 = vpack.c.bf16 %v1561, %v1560
        %v1581 = vpack.c.bf16 %v1563, %v1562
        %v1582 = vpack.c.bf16 %v1565, %v1564
        %v1583 = vpack.c.bf16 %v1567, %v1566
        %v1585 = vsel %vm883, %v1568, 0
        %v1588 = vsel %vm883, %v1569, 0
        %v1591 = vsel %vm883, %v1570, 0
        %v1594 = vsel %vm883, %v1571, 0
        %v1597 = vsel %vm883, %v1572, 0
        %v1600 = vsel %vm883, %v1573, 0
        %v1603 = vsel %vm883, %v1574, 0
        %v1606 = vsel %vm883, %v1575, 0
        %v1609 = vsel %vm883, %v1576, 0
        %v1612 = vsel %vm883, %v1577, 0
        %v1615 = vsel %vm883, %v1578, 0
        %v1618 = vsel %vm883, %v1579, 0
        %v1621 = vsel %vm883, %v1580, 0
        %v1624 = vsel %vm883, %v1581, 0
        %v1627 = vsel %vm883, %v1582, 0
        %v1630 = vsel %vm883, %v1583, 0
        %v1633 = vsel %vm932, %v1309, 0
        %1635 = vmatprep.subr.bf16.mxu0 0
        %1636 = vmatpush1.bf16.msra.mxu0 0
        %1637 = vmatprep.subr.bf16.mxu0 0
        %1638 = vmatpush1.bf16.msra.mxu0 0
        %1639 = vmatprep.subr.bf16.mxu0 0
        %1640 = vmatpush1.bf16.msra.mxu0 0
        %1641 = vmatprep.subr.bf16.mxu0 0
        %1642 = vmatpush1.bf16.msra.mxu0 0
        %1643 = vmatprep.subr.bf16.mxu0 0
        %1644 = vmatpush1.bf16.msra.mxu0 0
        %1645 = vmatprep.subr.bf16.mxu0 0
        %1646 = vmatpush1.bf16.msra.mxu0 0
        %1647 = vmatprep.subr.bf16.mxu0 0
        %1648 = vmatpush1.bf16.msra.mxu0 0
        %1649 = vmatprep.subr.bf16.mxu0 0
        %1650 = vmatpush1.bf16.msra.mxu0 %v1633
        %1651 = vmatprep.subr.bf16.mxu0 0
        %1652 = vmatpush2.bf16.msra.mxu0 0
        %1653 = vmatprep.subr.bf16.mxu0 0
        %1654 = vmatpush2.bf16.msra.mxu0 0
        %1655 = vmatprep.subr.bf16.mxu0 0
        %1656 = vmatpush2.bf16.msra.mxu0 0
        %1657 = vmatprep.subr.bf16.mxu0 0
        %1658 = vmatpush2.bf16.msra.mxu0 0
        %1659 = vmatprep.subr.bf16.mxu0 0
        %1660 = vmatpush2.bf16.msra.mxu0 0
        %1661 = vmatprep.subr.bf16.mxu0 0
        %1662 = vmatpush2.bf16.msra.mxu0 0
        %1663 = vmatprep.subr.bf16.mxu0 0
        %1664 = vmatpush2.bf16.msra.mxu0 0
        %1665 = vmatprep.subr.bf16.mxu0 0
        %1666 = vmatpush2.bf16.msra.mxu0 0
        %1667 = vmatprep.mubr.bf16.mxu0 0
        %1668 = vmatmul.mubr.bf16.gmra.mxu0 %v1585
        %v1669 = vpop.f32.mrf.mxu0
        %v1670 = vadd.f32 0.0, %v1669
        %v1671 = vpop.f32.mrf.mxu0
        %v1672 = vpop.f32.mrf.mxu0
        %v1673 = vadd.f32 0.0, %v1672
        %v1674 = vpop.f32.mrf.mxu0
        %1675 = vmatprep.mubr.bf16.mxu0 0
        %1676 = vmatmul.mubr.bf16.gmra.mxu0 %v1588
        %v1677 = vpop.f32.mrf.mxu0
        %v1678 = vadd.f32 0.0, %v1677
        %v1679 = vpop.f32.mrf.mxu0
        %v1680 = vpop.f32.mrf.mxu0
        %v1681 = vadd.f32 0.0, %v1680
        %v1682 = vpop.f32.mrf.mxu0
        %1683 = vmatprep.mubr.bf16.mxu0 0
        %1684 = vmatmul.mubr.bf16.gmra.mxu0 %v1591
        %v1685 = vpop.f32.mrf.mxu0
        %v1686 = vadd.f32 0.0, %v1685
        %v1687 = vpop.f32.mrf.mxu0
        %v1688 = vpop.f32.mrf.mxu0
        %v1689 = vadd.f32 0.0, %v1688
        %v1690 = vpop.f32.mrf.mxu0
        %1691 = vmatprep.mubr.bf16.mxu0 0
        %1692 = vmatmul.mubr.bf16.gmra.mxu0 %v1594
        %v1693 = vpop.f32.mrf.mxu0
        %v1694 = vadd.f32 0.0, %v1693
        %v1695 = vpop.f32.mrf.mxu0
        %v1696 = vpop.f32.mrf.mxu0
        %v1697 = vadd.f32 0.0, %v1696
        %v1698 = vpop.f32.mrf.mxu0
        %1699 = vmatprep.mubr.bf16.mxu0 0
        %1700 = vmatmul.mubr.bf16.gmra.mxu0 %v1597
        %v1701 = vpop.f32.mrf.mxu0
        %v1702 = vadd.f32 0.0, %v1701
        %v1703 = vpop.f32.mrf.mxu0
        %v1704 = vpop.f32.mrf.mxu0
        %v1705 = vadd.f32 0.0, %v1704
        %v1706 = vpop.f32.mrf.mxu0
        %1707 = vmatprep.mubr.bf16.mxu0 0
        %1708 = vmatmul.mubr.bf16.gmra.mxu0 %v1600
        %v1709 = vpop.f32.mrf.mxu0
        %v1710 = vadd.f32 0.0, %v1709
        %v1711 = vpop.f32.mrf.mxu0
        %v1712 = vpop.f32.mrf.mxu0
        %v1713 = vadd.f32 0.0, %v1712
        %v1714 = vpop.f32.mrf.mxu0
        %1715 = vmatprep.mubr.bf16.mxu0 0
        %1716 = vmatmul.mubr.bf16.gmra.mxu0 %v1603
        %v1717 = vpop.f32.mrf.mxu0
        %v1718 = vadd.f32 0.0, %v1717
        %v1719 = vpop.f32.mrf.mxu0
        %v1720 = vpop.f32.mrf.mxu0
        %v1721 = vadd.f32 0.0, %v1720
        %v1722 = vpop.f32.mrf.mxu0
        %1723 = vmatprep.mubr.bf16.mxu0 0
        %1724 = vmatmul.mubr.bf16.gmra.mxu0 %v1606
        %v1725 = vpop.f32.mrf.mxu0
        %v1726 = vadd.f32 0.0, %v1725
        %v1727 = vpop.f32.mrf.mxu0
        %v1728 = vpop.f32.mrf.mxu0
        %v1729 = vadd.f32 0.0, %v1728
        %v1730 = vpop.f32.mrf.mxu0
        %1731 = vmatprep.mubr.bf16.mxu0 0
        %1732 = vmatmul.mubr.bf16.gmra.mxu0 %v1609
        %v1733 = vpop.f32.mrf.mxu0
        %v1734 = vadd.f32 0.0, %v1733
        %v1735 = vpop.f32.mrf.mxu0
        %v1736 = vpop.f32.mrf.mxu0
        %v1737 = vadd.f32 0.0, %v1736
        %v1738 = vpop.f32.mrf.mxu0
        %1739 = vmatprep.mubr.bf16.mxu0 0
        %1740 = vmatmul.mubr.bf16.gmra.mxu0 %v1612
        %v1741 = vpop.f32.mrf.mxu0
        %v1742 = vadd.f32 0.0, %v1741
        %v1743 = vpop.f32.mrf.mxu0
        %v1744 = vpop.f32.mrf.mxu0
        %v1745 = vadd.f32 0.0, %v1744
        %v1746 = vpop.f32.mrf.mxu0
        %1747 = vmatprep.mubr.bf16.mxu0 0
        %1748 = vmatmul.mubr.bf16.gmra.mxu0 %v1615
        %v1749 = vpop.f32.mrf.mxu0
        %v1750 = vadd.f32 0.0, %v1749
        %v1751 = vpop.f32.mrf.mxu0
        %v1752 = vpop.f32.mrf.mxu0
        %v1753 = vadd.f32 0.0, %v1752
        %v1754 = vpop.f32.mrf.mxu0
        %1755 = vmatprep.mubr.bf16.mxu0 0
        %1756 = vmatmul.mubr.bf16.gmra.mxu0 %v1618
        %v1757 = vpop.f32.mrf.mxu0
        %v1758 = vadd.f32 0.0, %v1757
        %v1759 = vpop.f32.mrf.mxu0
        %v1760 = vpop.f32.mrf.mxu0
        %v1761 = vadd.f32 0.0, %v1760
        %v1762 = vpop.f32.mrf.mxu0
        %1763 = vmatprep.mubr.bf16.mxu0 0
        %1764 = vmatmul.mubr.bf16.gmra.mxu0 %v1621
        %v1765 = vpop.f32.mrf.mxu0
        %v1766 = vadd.f32 0.0, %v1765
        %v1767 = vpop.f32.mrf.mxu0
        %v1768 = vpop.f32.mrf.mxu0
        %v1769 = vadd.f32 0.0, %v1768
        %v1770 = vpop.f32.mrf.mxu0
        %1771 = vmatprep.mubr.bf16.mxu0 0
        %1772 = vmatmul.mubr.bf16.gmra.mxu0 %v1624
        %v1773 = vpop.f32.mrf.mxu0
        %v1774 = vadd.f32 0.0, %v1773
        %v1775 = vpop.f32.mrf.mxu0
        %v1776 = vpop.f32.mrf.mxu0
        %v1777 = vadd.f32 0.0, %v1776
        %v1778 = vpop.f32.mrf.mxu0
        %1779 = vmatprep.mubr.bf16.mxu0 0
        %1780 = vmatmul.mubr.bf16.gmra.mxu0 %v1627
        %v1781 = vpop.f32.mrf.mxu0
        %v1782 = vadd.f32 0.0, %v1781
        %v1783 = vpop.f32.mrf.mxu0
        %v1784 = vpop.f32.mrf.mxu0
        %v1785 = vadd.f32 0.0, %v1784
        %v1786 = vpop.f32.mrf.mxu0
        %1787 = vmatprep.mubr.bf16.mxu0 0
        %1788 = vmatmul.mubr.bf16.gmra.mxu0 %v1630
        %v1789 = vpop.f32.mrf.mxu0
        %v1790 = vadd.f32 0.0, %v1789
        %v1791 = vpop.f32.mrf.mxu0
        %v1792 = vpop.f32.mrf.mxu0
        %v1793 = vadd.f32 0.0, %v1792
        %v1794 = vpop.f32.mrf.mxu0
        %1795 = vdwg.mxu0
        %v1796 = vadd.f32 %v1183, %v1670
        %v1797 = vadd.f32 %v1186, %v1673
        %v1798 = vadd.f32 %v1191, %v1678
        %v1799 = vadd.f32 %v1194, %v1681
        %v1800 = vadd.f32 %v1199, %v1686
        %v1801 = vadd.f32 %v1202, %v1689
        %v1802 = vadd.f32 %v1207, %v1694
        %v1803 = vadd.f32 %v1210, %v1697
        %v1804 = vadd.f32 %v1215, %v1702
        %v1805 = vadd.f32 %v1218, %v1705
        %v1806 = vadd.f32 %v1223, %v1710
        %v1807 = vadd.f32 %v1226, %v1713
        %v1808 = vadd.f32 %v1231, %v1718
        %v1809 = vadd.f32 %v1234, %v1721
        %v1810 = vadd.f32 %v1239, %v1726
        %v1811 = vadd.f32 %v1242, %v1729
        %v1812 = vadd.f32 %v1247, %v1734
        %v1813 = vadd.f32 %v1250, %v1737
        %v1814 = vadd.f32 %v1255, %v1742
        %v1815 = vadd.f32 %v1258, %v1745
        %v1816 = vadd.f32 %v1263, %v1750
        %v1817 = vadd.f32 %v1266, %v1753
        %v1818 = vadd.f32 %v1271, %v1758
        %v1819 = vadd.f32 %v1274, %v1761
        %v1820 = vadd.f32 %v1279, %v1766
        %v1821 = vadd.f32 %v1282, %v1769
        %v1822 = vadd.f32 %v1287, %v1774
        %v1823 = vadd.f32 %v1290, %v1777
        %v1824 = vadd.f32 %v1295, %v1782
        %v1825 = vadd.f32 %v1298, %v1785
        %v1826 = vadd.f32 %v1303, %v1790
        %v1827 = vadd.f32 %v1306, %v1793
        %v1828 = vld [vmem:[%s1 + $0x4] sm:$0xc]
        %1829 = vset.pattern.permute.xlu0 3
        %1830 = vperm.xlu0 %1829, %v462
        %v1831 = vpop.permute.xlu0 %1830
        %1833 = vset.pattern.permute.xlu0 3
        %1834 = vperm.xlu0 %1833, %v463
        %v1835 = vpop.permute.xlu0 %1834
        %1837 = vset.pattern.permute.xlu0 3
        %1838 = vperm.xlu0 %1837, %v464
        %v1839 = vpop.permute.xlu0 %1838
        %1841 = vset.pattern.permute.xlu0 3
        %1842 = vperm.xlu0 %1841, %v465
        %v1843 = vpop.permute.xlu0 %1842
        %1845 = vset.pattern.permute.xlu0 3
        %1846 = vperm.xlu0 %1845, %v466
        %v1847 = vpop.permute.xlu0 %1846
        %1849 = vset.pattern.permute.xlu0 3
        %1850 = vperm.xlu0 %1849, %v467
        %v1851 = vpop.permute.xlu0 %1850
        %1853 = vset.pattern.permute.xlu0 3
        %1854 = vperm.xlu0 %1853, %v468
        %v1855 = vpop.permute.xlu0 %1854
        %1857 = vset.pattern.permute.xlu0 3
        %1858 = vperm.xlu0 %1857, %v469
        %v1859 = vpop.permute.xlu0 %1858
        %1861 = vset.pattern.permute.xlu0 3
        %1862 = vperm.xlu0 %1861, %v470
        %v1863 = vpop.permute.xlu0 %1862
        %1865 = vset.pattern.permute.xlu0 3
        %1866 = vperm.xlu0 %1865, %v471
        %v1867 = vpop.permute.xlu0 %1866
        %1869 = vset.pattern.permute.xlu0 3
        %1870 = vperm.xlu0 %1869, %v472
        %v1871 = vpop.permute.xlu0 %1870
        %1873 = vset.pattern.permute.xlu0 3
        %1874 = vperm.xlu0 %1873, %v473
        %v1875 = vpop.permute.xlu0 %1874
        %1877 = vset.pattern.permute.xlu0 3
        %1878 = vperm.xlu0 %1877, %v474
        %v1879 = vpop.permute.xlu0 %1878
        %1881 = vset.pattern.permute.xlu0 3
        %1882 = vperm.xlu0 %1881, %v475
        %v1883 = vpop.permute.xlu0 %1882
        %1885 = vset.pattern.permute.xlu0 3
        %1886 = vperm.xlu0 %1885, %v476
        %v1887 = vpop.permute.xlu0 %1886
        %1889 = vset.pattern.permute.xlu0 3
        %1890 = vperm.xlu0 %1889, %v477
        %v1891 = vpop.permute.xlu0 %1890
        %1893 = vset.pattern.permute.xlu0 3
        %1894 = vperm.xlu0 %1893, %v478
        %v1895 = vpop.permute.xlu0 %1894
        %1897 = vset.pattern.permute.xlu0 3
        %1898 = vperm.xlu0 %1897, %v479
        %v1899 = vpop.permute.xlu0 %1898
        %1901 = vset.pattern.permute.xlu0 3
        %1902 = vperm.xlu0 %1901, %v480
        %v1903 = vpop.permute.xlu0 %1902
        %1905 = vset.pattern.permute.xlu0 3
        %1906 = vperm.xlu0 %1905, %v481
        %v1907 = vpop.permute.xlu0 %1906
        %1909 = vset.pattern.permute.xlu0 3
        %1910 = vperm.xlu0 %1909, %v482
        %v1911 = vpop.permute.xlu0 %1910
        %1913 = vset.pattern.permute.xlu0 3
        %1914 = vperm.xlu0 %1913, %v483
        %v1915 = vpop.permute.xlu0 %1914
        %1917 = vset.pattern.permute.xlu0 3
        %1918 = vperm.xlu0 %1917, %v484
        %v1919 = vpop.permute.xlu0 %1918
        %1921 = vset.pattern.permute.xlu0 3
        %1922 = vperm.xlu0 %1921, %v485
        %v1923 = vpop.permute.xlu0 %1922
        %1925 = vset.pattern.permute.xlu0 3
        %1926 = vperm.xlu0 %1925, %v486
        %v1927 = vpop.permute.xlu0 %1926
        %1929 = vset.pattern.permute.xlu0 3
        %1930 = vperm.xlu0 %1929, %v487
        %v1931 = vpop.permute.xlu0 %1930
        %1933 = vset.pattern.permute.xlu0 3
        %1934 = vperm.xlu0 %1933, %v488
        %v1935 = vpop.permute.xlu0 %1934
        %1937 = vset.pattern.permute.xlu0 3
        %1938 = vperm.xlu0 %1937, %v489
        %v1939 = vpop.permute.xlu0 %1938
        %1941 = vset.pattern.permute.xlu0 3
        %1942 = vperm.xlu0 %1941, %v490
        %v1943 = vpop.permute.xlu0 %1942
        %1945 = vset.pattern.permute.xlu0 3
        %1946 = vperm.xlu0 %1945, %v491
        %v1947 = vpop.permute.xlu0 %1946
        %1949 = vset.pattern.permute.xlu0 3
        %1950 = vperm.xlu0 %1949, %v492
        %v1951 = vpop.permute.xlu0 %1950
        %1953 = vset.pattern.permute.xlu0 3
        %1954 = vperm.xlu0 %1953, %v493
        %v1955 = vpop.permute.xlu0 %1954
        %v1957 = vmul.f32 %v461, %v1831
        %v1958 = vmul.f32 %v375, %v1835
        %v1959 = vmul.f32 %v377, %v1839
        %v1960 = vmul.f32 %v379, %v1843
        %v1961 = vmul.f32 %v381, %v1847
        %v1962 = vmul.f32 %v383, %v1851
        %v1963 = vmul.f32 %v385, %v1855
        %v1964 = vmul.f32 %v387, %v1859
        %v1965 = vmul.f32 %v389, %v1863
        %v1966 = vmul.f32 %v391, %v1867
        %v1967 = vmul.f32 %v393, %v1871
        %v1968 = vmul.f32 %v395, %v1875
        %v1969 = vmul.f32 %v397, %v1879
        %v1970 = vmul.f32 %v399, %v1883
        %v1971 = vmul.f32 %v401, %v1887
        %v1972 = vmul.f32 %v403, %v1891
        %v1973 = vmul.f32 %v405, %v1895
        %v1974 = vmul.f32 %v407, %v1899
        %v1975 = vmul.f32 %v409, %v1903
        %v1976 = vmul.f32 %v411, %v1907
        %v1977 = vmul.f32 %v413, %v1911
        %v1978 = vmul.f32 %v415, %v1915
        %v1979 = vmul.f32 %v417, %v1919
        %v1980 = vmul.f32 %v419, %v1923
        %v1981 = vmul.f32 %v421, %v1927
        %v1982 = vmul.f32 %v423, %v1931
        %v1983 = vmul.f32 %v425, %v1935
        %v1984 = vmul.f32 %v427, %v1939
        %v1985 = vmul.f32 %v429, %v1943
        %v1986 = vmul.f32 %v430, %v1947
        %v1987 = vmul.f32 %v338, %v1951
        %v1988 = vmul.f32 %v340, %v1955
        %v1989 = vpack.c.bf16 %v1958, %v1957
        %v1990 = vpack.c.bf16 %v1960, %v1959
        %v1991 = vpack.c.bf16 %v1962, %v1961
        %v1992 = vpack.c.bf16 %v1964, %v1963
        %v1993 = vpack.c.bf16 %v1966, %v1965
        %v1994 = vpack.c.bf16 %v1968, %v1967
        %v1995 = vpack.c.bf16 %v1970, %v1969
        %v1996 = vpack.c.bf16 %v1972, %v1971
        %v1997 = vpack.c.bf16 %v1974, %v1973
        %v1998 = vpack.c.bf16 %v1976, %v1975
        %v1999 = vpack.c.bf16 %v1978, %v1977
        %v2000 = vpack.c.bf16 %v1980, %v1979
        %v2001 = vpack.c.bf16 %v1982, %v1981
        %v2002 = vpack.c.bf16 %v1984, %v1983
        %v2003 = vpack.c.bf16 %v1986, %v1985
        %v2004 = vpack.c.bf16 %v1988, %v1987
        %v2006 = vunpack.c.l.b16 %v1828
        %v2007 = vpack.c.b16 %v2006, %v2006
        %v2008 = vrot.slane %v2007, 2
        %v2010 = vsel %vm883, %v1989, 0
        %v2013 = vsel %vm883, %v1990, 0
        %v2016 = vsel %vm883, %v1991, 0
        %v2019 = vsel %vm883, %v1992, 0
        %v2022 = vsel %vm883, %v1993, 0
        %v2025 = vsel %vm883, %v1994, 0
        %v2028 = vsel %vm883, %v1995, 0
        %v2031 = vsel %vm883, %v1996, 0
        %v2034 = vsel %vm883, %v1997, 0
        %v2037 = vsel %vm883, %v1998, 0
        %v2040 = vsel %vm883, %v1999, 0
        %v2043 = vsel %vm883, %v2000, 0
        %v2046 = vsel %vm883, %v2001, 0
        %v2049 = vsel %vm883, %v2002, 0
        %v2052 = vsel %vm883, %v2003, 0
        %v2055 = vsel %vm883, %v2004, 0
        %v2058 = vsel %vm932, %v2008, 0
        %2060 = vmatprep.subr.bf16.mxu0 0
        %2061 = vmatpush1.bf16.msra.mxu0 0
        %2062 = vmatprep.subr.bf16.mxu0 0
        %2063 = vmatpush1.bf16.msra.mxu0 0
        %2064 = vmatprep.subr.bf16.mxu0 0
        %2065 = vmatpush1.bf16.msra.mxu0 0
        %2066 = vmatprep.subr.bf16.mxu0 0
        %2067 = vmatpush1.bf16.msra.mxu0 0
        %2068 = vmatprep.subr.bf16.mxu0 0
        %2069 = vmatpush1.bf16.msra.mxu0 0
        %2070 = vmatprep.subr.bf16.mxu0 0
        %2071 = vmatpush1.bf16.msra.mxu0 0
        %2072 = vmatprep.subr.bf16.mxu0 0
        %2073 = vmatpush1.bf16.msra.mxu0 0
        %2074 = vmatprep.subr.bf16.mxu0 0
        %2075 = vmatpush1.bf16.msra.mxu0 %v2058
        %2076 = vmatprep.subr.bf16.mxu0 0
        %2077 = vmatpush2.bf16.msra.mxu0 0
        %2078 = vmatprep.subr.bf16.mxu0 0
        %2079 = vmatpush2.bf16.msra.mxu0 0
        %2080 = vmatprep.subr.bf16.mxu0 0
        %2081 = vmatpush2.bf16.msra.mxu0 0
        %2082 = vmatprep.subr.bf16.mxu0 0
        %2083 = vmatpush2.bf16.msra.mxu0 0
        %2084 = vmatprep.subr.bf16.mxu0 0
        %2085 = vmatpush2.bf16.msra.mxu0 0
        %2086 = vmatprep.subr.bf16.mxu0 0
        %2087 = vmatpush2.bf16.msra.mxu0 0
        %2088 = vmatprep.subr.bf16.mxu0 0
        %2089 = vmatpush2.bf16.msra.mxu0 0
        %2090 = vmatprep.subr.bf16.mxu0 0
        %2091 = vmatpush2.bf16.msra.mxu0 0
        %2092 = vmatprep.mubr.bf16.mxu0 0
        %2093 = vmatmul.mubr.bf16.gmra.mxu0 %v2010
        %v2094 = vpop.f32.mrf.mxu0
        %v2095 = vadd.f32 0.0, %v2094
        %v2096 = vpop.f32.mrf.mxu0
        %v2097 = vpop.f32.mrf.mxu0
        %v2098 = vadd.f32 0.0, %v2097
        %v2099 = vpop.f32.mrf.mxu0
        %2100 = vmatprep.mubr.bf16.mxu0 0
        %2101 = vmatmul.mubr.bf16.gmra.mxu0 %v2013
        %v2102 = vpop.f32.mrf.mxu0
        %v2103 = vadd.f32 0.0, %v2102
        %v2104 = vpop.f32.mrf.mxu0
        %v2105 = vpop.f32.mrf.mxu0
        %v2106 = vadd.f32 0.0, %v2105
        %v2107 = vpop.f32.mrf.mxu0
        %2108 = vmatprep.mubr.bf16.mxu0 0
        %2109 = vmatmul.mubr.bf16.gmra.mxu0 %v2016
        %v2110 = vpop.f32.mrf.mxu0
        %v2111 = vadd.f32 0.0, %v2110
        %v2112 = vpop.f32.mrf.mxu0
        %v2113 = vpop.f32.mrf.mxu0
        %v2114 = vadd.f32 0.0, %v2113
        %v2115 = vpop.f32.mrf.mxu0
        %2116 = vmatprep.mubr.bf16.mxu0 0
        %2117 = vmatmul.mubr.bf16.gmra.mxu0 %v2019
        %v2118 = vpop.f32.mrf.mxu0
        %v2119 = vadd.f32 0.0, %v2118
        %v2120 = vpop.f32.mrf.mxu0
        %v2121 = vpop.f32.mrf.mxu0
        %v2122 = vadd.f32 0.0, %v2121
        %v2123 = vpop.f32.mrf.mxu0
        %2124 = vmatprep.mubr.bf16.mxu0 0
        %2125 = vmatmul.mubr.bf16.gmra.mxu0 %v2022
        %v2126 = vpop.f32.mrf.mxu0
        %v2127 = vadd.f32 0.0, %v2126
        %v2128 = vpop.f32.mrf.mxu0
        %v2129 = vpop.f32.mrf.mxu0
        %v2130 = vadd.f32 0.0, %v2129
        %v2131 = vpop.f32.mrf.mxu0
        %2132 = vmatprep.mubr.bf16.mxu0 0
        %2133 = vmatmul.mubr.bf16.gmra.mxu0 %v2025
        %v2134 = vpop.f32.mrf.mxu0
        %v2135 = vadd.f32 0.0, %v2134
        %v2136 = vpop.f32.mrf.mxu0
        %v2137 = vpop.f32.mrf.mxu0
        %v2138 = vadd.f32 0.0, %v2137
        %v2139 = vpop.f32.mrf.mxu0
        %2140 = vmatprep.mubr.bf16.mxu0 0
        %2141 = vmatmul.mubr.bf16.gmra.mxu0 %v2028
        %v2142 = vpop.f32.mrf.mxu0
        %v2143 = vadd.f32 0.0, %v2142
        %v2144 = vpop.f32.mrf.mxu0
        %v2145 = vpop.f32.mrf.mxu0
        %v2146 = vadd.f32 0.0, %v2145
        %v2147 = vpop.f32.mrf.mxu0
        %2148 = vmatprep.mubr.bf16.mxu0 0
        %2149 = vmatmul.mubr.bf16.gmra.mxu0 %v2031
        %v2150 = vpop.f32.mrf.mxu0
        %v2151 = vadd.f32 0.0, %v2150
        %v2152 = vpop.f32.mrf.mxu0
        %v2153 = vpop.f32.mrf.mxu0
        %v2154 = vadd.f32 0.0, %v2153
        %v2155 = vpop.f32.mrf.mxu0
        %2156 = vmatprep.mubr.bf16.mxu0 0
        %2157 = vmatmul.mubr.bf16.gmra.mxu0 %v2034
        %v2158 = vpop.f32.mrf.mxu0
        %v2159 = vadd.f32 0.0, %v2158
        %v2160 = vpop.f32.mrf.mxu0
        %v2161 = vpop.f32.mrf.mxu0
        %v2162 = vadd.f32 0.0, %v2161
        %v2163 = vpop.f32.mrf.mxu0
        %2164 = vmatprep.mubr.bf16.mxu0 0
        %2165 = vmatmul.mubr.bf16.gmra.mxu0 %v2037
        %v2166 = vpop.f32.mrf.mxu0
        %v2167 = vadd.f32 0.0, %v2166
        %v2168 = vpop.f32.mrf.mxu0
        %v2169 = vpop.f32.mrf.mxu0
        %v2170 = vadd.f32 0.0, %v2169
        %v2171 = vpop.f32.mrf.mxu0
        %2172 = vmatprep.mubr.bf16.mxu0 0
        %2173 = vmatmul.mubr.bf16.gmra.mxu0 %v2040
        %v2174 = vpop.f32.mrf.mxu0
        %v2175 = vadd.f32 0.0, %v2174
        %v2176 = vpop.f32.mrf.mxu0
        %v2177 = vpop.f32.mrf.mxu0
        %v2178 = vadd.f32 0.0, %v2177
        %v2179 = vpop.f32.mrf.mxu0
        %2180 = vmatprep.mubr.bf16.mxu0 0
        %2181 = vmatmul.mubr.bf16.gmra.mxu0 %v2043
        %v2182 = vpop.f32.mrf.mxu0
        %v2183 = vadd.f32 0.0, %v2182
        %v2184 = vpop.f32.mrf.mxu0
        %v2185 = vpop.f32.mrf.mxu0
        %v2186 = vadd.f32 0.0, %v2185
        %v2187 = vpop.f32.mrf.mxu0
        %2188 = vmatprep.mubr.bf16.mxu0 0
        %2189 = vmatmul.mubr.bf16.gmra.mxu0 %v2046
        %v2190 = vpop.f32.mrf.mxu0
        %v2191 = vadd.f32 0.0, %v2190
        %v2192 = vpop.f32.mrf.mxu0
        %v2193 = vpop.f32.mrf.mxu0
        %v2194 = vadd.f32 0.0, %v2193
        %v2195 = vpop.f32.mrf.mxu0
        %2196 = vmatprep.mubr.bf16.mxu0 0
        %2197 = vmatmul.mubr.bf16.gmra.mxu0 %v2049
        %v2198 = vpop.f32.mrf.mxu0
        %v2199 = vadd.f32 0.0, %v2198
        %v2200 = vpop.f32.mrf.mxu0
        %v2201 = vpop.f32.mrf.mxu0
        %v2202 = vadd.f32 0.0, %v2201
        %v2203 = vpop.f32.mrf.mxu0
        %2204 = vmatprep.mubr.bf16.mxu0 0
        %2205 = vmatmul.mubr.bf16.gmra.mxu0 %v2052
        %v2206 = vpop.f32.mrf.mxu0
        %v2207 = vadd.f32 0.0, %v2206
        %v2208 = vpop.f32.mrf.mxu0
        %v2209 = vpop.f32.mrf.mxu0
        %v2210 = vadd.f32 0.0, %v2209
        %v2211 = vpop.f32.mrf.mxu0
        %2212 = vmatprep.mubr.bf16.mxu0 0
        %2213 = vmatmul.mubr.bf16.gmra.mxu0 %v2055
        %v2214 = vpop.f32.mrf.mxu0
        %v2215 = vadd.f32 0.0, %v2214
        %v2216 = vpop.f32.mrf.mxu0
        %v2217 = vpop.f32.mrf.mxu0
        %v2218 = vadd.f32 0.0, %v2217
        %v2219 = vpop.f32.mrf.mxu0
        %2220 = vdwg.mxu0
        %v2221 = vadd.f32 %v1796, %v2095
        %v2222 = vadd.f32 %v1797, %v2098
        %v2223 = vadd.f32 %v1798, %v2103
        %v2224 = vadd.f32 %v1799, %v2106
        %v2225 = vadd.f32 %v1800, %v2111
        %v2226 = vadd.f32 %v1801, %v2114
        %v2227 = vadd.f32 %v1802, %v2119
        %v2228 = vadd.f32 %v1803, %v2122
        %v2229 = vadd.f32 %v1804, %v2127
        %v2230 = vadd.f32 %v1805, %v2130
        %v2231 = vadd.f32 %v1806, %v2135
        %v2232 = vadd.f32 %v1807, %v2138
        %v2233 = vadd.f32 %v1808, %v2143
        %v2234 = vadd.f32 %v1809, %v2146
        %v2235 = vadd.f32 %v1810, %v2151
        %v2236 = vadd.f32 %v1811, %v2154
        %v2237 = vadd.f32 %v1812, %v2159
        %v2238 = vadd.f32 %v1813, %v2162
        %v2239 = vadd.f32 %v1814, %v2167
        %v2240 = vadd.f32 %v1815, %v2170
        %v2241 = vadd.f32 %v1816, %v2175
        %v2242 = vadd.f32 %v1817, %v2178
        %v2243 = vadd.f32 %v1818, %v2183
        %v2244 = vadd.f32 %v1819, %v2186
        %v2245 = vadd.f32 %v1820, %v2191
        %v2246 = vadd.f32 %v1821, %v2194
        %v2247 = vadd.f32 %v1822, %v2199
        %v2248 = vadd.f32 %v1823, %v2202
        %v2249 = vadd.f32 %v1824, %v2207
        %v2250 = vadd.f32 %v1825, %v2210
        %v2251 = vadd.f32 %v1826, %v2215
        %v2252 = vadd.f32 %v1827, %v2218
        %v2253 = vld [vmem:[%s1 + $0x8] sm:$0x3]
        %v2254 = vpack.c.bf16 %v300, %v299
        %v2255 = vpack.c.bf16 %v302, %v301
        %v2256 = vpack.c.bf16 %v304, %v303
        %v2257 = vpack.c.bf16 %v306, %v305
        %v2258 = vpack.c.bf16 %v308, %v307
        %v2259 = vpack.c.bf16 %v310, %v309
        %v2260 = vpack.c.bf16 %v312, %v311
        %v2261 = vpack.c.bf16 %v314, %v313
        %v2262 = vpack.c.bf16 %v316, %v315
        %v2263 = vpack.c.bf16 %v318, %v317
        %v2264 = vpack.c.bf16 %v320, %v319
        %v2265 = vpack.c.bf16 %v322, %v321
        %v2266 = vpack.c.bf16 %v324, %v323
        %v2267 = vpack.c.bf16 %v326, %v325
        %v2268 = vpack.c.bf16 %v328, %v327
        %v2269 = vpack.c.bf16 %v330, %v329
        %v2271 = vsel %vm883, %v2254, 0
        %v2274 = vsel %vm883, %v2255, 0
        %v2277 = vsel %vm883, %v2256, 0
        %v2280 = vsel %vm883, %v2257, 0
        %v2283 = vsel %vm883, %v2258, 0
        %v2286 = vsel %vm883, %v2259, 0
        %v2289 = vsel %vm883, %v2260, 0
        %v2292 = vsel %vm883, %v2261, 0
        %v2295 = vsel %vm883, %v2262, 0
        %v2298 = vsel %vm883, %v2263, 0
        %v2301 = vsel %vm883, %v2264, 0
        %v2304 = vsel %vm883, %v2265, 0
        %v2307 = vsel %vm883, %v2266, 0
        %v2310 = vsel %vm883, %v2267, 0
        %v2313 = vsel %vm883, %v2268, 0
        %v2316 = vsel %vm883, %v2269, 0
        %v2319 = vsel %vm932, %v2253, 0
        %2321 = vmatprep.subr.bf16.mxu0 0
        %2322 = vmatpush1.bf16.msra.mxu0 0
        %2323 = vmatprep.subr.bf16.mxu0 0
        %2324 = vmatpush1.bf16.msra.mxu0 0
        %2325 = vmatprep.subr.bf16.mxu0 0
        %2326 = vmatpush1.bf16.msra.mxu0 0
        %2327 = vmatprep.subr.bf16.mxu0 0
        %2328 = vmatpush1.bf16.msra.mxu0 0
        %2329 = vmatprep.subr.bf16.mxu0 0
        %2330 = vmatpush1.bf16.msra.mxu0 0
        %2331 = vmatprep.subr.bf16.mxu0 0
        %2332 = vmatpush1.bf16.msra.mxu0 0
        %2333 = vmatprep.subr.bf16.mxu0 0
        %2334 = vmatpush1.bf16.msra.mxu0 0
        %2335 = vmatprep.subr.bf16.mxu0 0
        %2336 = vmatpush1.bf16.msra.mxu0 %v2319
        %2337 = vmatprep.subr.bf16.mxu0 0
        %2338 = vmatpush2.bf16.msra.mxu0 0
        %2339 = vmatprep.subr.bf16.mxu0 0
        %2340 = vmatpush2.bf16.msra.mxu0 0
        %2341 = vmatprep.subr.bf16.mxu0 0
        %2342 = vmatpush2.bf16.msra.mxu0 0
        %2343 = vmatprep.subr.bf16.mxu0 0
        %2344 = vmatpush2.bf16.msra.mxu0 0
        %2345 = vmatprep.subr.bf16.mxu0 0
        %2346 = vmatpush2.bf16.msra.mxu0 0
        %2347 = vmatprep.subr.bf16.mxu0 0
        %2348 = vmatpush2.bf16.msra.mxu0 0
        %2349 = vmatprep.subr.bf16.mxu0 0
        %2350 = vmatpush2.bf16.msra.mxu0 0
        %2351 = vmatprep.subr.bf16.mxu0 0
        %2352 = vmatpush2.bf16.msra.mxu0 0
        %2353 = vmatprep.mubr.bf16.mxu0 0
        %2354 = vmatmul.mubr.bf16.gmra.mxu0 %v2271
        %v2355 = vpop.f32.mrf.mxu0
        %v2356 = vadd.f32 0.0, %v2355
        %v2357 = vpop.f32.mrf.mxu0
        %v2358 = vpop.f32.mrf.mxu0
        %v2359 = vadd.f32 0.0, %v2358
        %v2360 = vpop.f32.mrf.mxu0
        %2361 = vmatprep.mubr.bf16.mxu0 0
        %2362 = vmatmul.mubr.bf16.gmra.mxu0 %v2274
        %v2363 = vpop.f32.mrf.mxu0
        %v2364 = vadd.f32 0.0, %v2363
        %v2365 = vpop.f32.mrf.mxu0
        %v2366 = vpop.f32.mrf.mxu0
        %v2367 = vadd.f32 0.0, %v2366
        %v2368 = vpop.f32.mrf.mxu0
        %2369 = vmatprep.mubr.bf16.mxu0 0
        %2370 = vmatmul.mubr.bf16.gmra.mxu0 %v2277
        %v2371 = vpop.f32.mrf.mxu0
        %v2372 = vadd.f32 0.0, %v2371
        %v2373 = vpop.f32.mrf.mxu0
        %v2374 = vpop.f32.mrf.mxu0
        %v2375 = vadd.f32 0.0, %v2374
        %v2376 = vpop.f32.mrf.mxu0
        %2377 = vmatprep.mubr.bf16.mxu0 0
        %2378 = vmatmul.mubr.bf16.gmra.mxu0 %v2280
        %v2379 = vpop.f32.mrf.mxu0
        %v2380 = vadd.f32 0.0, %v2379
        %v2381 = vpop.f32.mrf.mxu0
        %v2382 = vpop.f32.mrf.mxu0
        %v2383 = vadd.f32 0.0, %v2382
        %v2384 = vpop.f32.mrf.mxu0
        %2385 = vmatprep.mubr.bf16.mxu0 0
        %2386 = vmatmul.mubr.bf16.gmra.mxu0 %v2283
        %v2387 = vpop.f32.mrf.mxu0
        %v2388 = vadd.f32 0.0, %v2387
        %v2389 = vpop.f32.mrf.mxu0
        %v2390 = vpop.f32.mrf.mxu0
        %v2391 = vadd.f32 0.0, %v2390
        %v2392 = vpop.f32.mrf.mxu0
        %2393 = vmatprep.mubr.bf16.mxu0 0
        %2394 = vmatmul.mubr.bf16.gmra.mxu0 %v2286
        %v2395 = vpop.f32.mrf.mxu0
        %v2396 = vadd.f32 0.0, %v2395
        %v2397 = vpop.f32.mrf.mxu0
        %v2398 = vpop.f32.mrf.mxu0
        %v2399 = vadd.f32 0.0, %v2398
        %v2400 = vpop.f32.mrf.mxu0
        %2401 = vmatprep.mubr.bf16.mxu0 0
        %2402 = vmatmul.mubr.bf16.gmra.mxu0 %v2289
        %v2403 = vpop.f32.mrf.mxu0
        %v2404 = vadd.f32 0.0, %v2403
        %v2405 = vpop.f32.mrf.mxu0
        %v2406 = vpop.f32.mrf.mxu0
        %v2407 = vadd.f32 0.0, %v2406
        %v2408 = vpop.f32.mrf.mxu0
        %2409 = vmatprep.mubr.bf16.mxu0 0
        %2410 = vmatmul.mubr.bf16.gmra.mxu0 %v2292
        %v2411 = vpop.f32.mrf.mxu0
        %v2412 = vadd.f32 0.0, %v2411
        %v2413 = vpop.f32.mrf.mxu0
        %v2414 = vpop.f32.mrf.mxu0
        %v2415 = vadd.f32 0.0, %v2414
        %v2416 = vpop.f32.mrf.mxu0
        %2417 = vmatprep.mubr.bf16.mxu0 0
        %2418 = vmatmul.mubr.bf16.gmra.mxu0 %v2295
        %v2419 = vpop.f32.mrf.mxu0
        %v2420 = vadd.f32 0.0, %v2419
        %v2421 = vpop.f32.mrf.mxu0
        %v2422 = vpop.f32.mrf.mxu0
        %v2423 = vadd.f32 0.0, %v2422
        %v2424 = vpop.f32.mrf.mxu0
        %2425 = vmatprep.mubr.bf16.mxu0 0
        %2426 = vmatmul.mubr.bf16.gmra.mxu0 %v2298
        %v2427 = vpop.f32.mrf.mxu0
        %v2428 = vadd.f32 0.0, %v2427
        %v2429 = vpop.f32.mrf.mxu0
        %v2430 = vpop.f32.mrf.mxu0
        %v2431 = vadd.f32 0.0, %v2430
        %v2432 = vpop.f32.mrf.mxu0
        %2433 = vmatprep.mubr.bf16.mxu0 0
        %2434 = vmatmul.mubr.bf16.gmra.mxu0 %v2301
        %v2435 = vpop.f32.mrf.mxu0
        %v2436 = vadd.f32 0.0, %v2435
        %v2437 = vpop.f32.mrf.mxu0
        %v2438 = vpop.f32.mrf.mxu0
        %v2439 = vadd.f32 0.0, %v2438
        %v2440 = vpop.f32.mrf.mxu0
        %2441 = vmatprep.mubr.bf16.mxu0 0
        %2442 = vmatmul.mubr.bf16.gmra.mxu0 %v2304
        %v2443 = vpop.f32.mrf.mxu0
        %v2444 = vadd.f32 0.0, %v2443
        %v2445 = vpop.f32.mrf.mxu0
        %v2446 = vpop.f32.mrf.mxu0
        %v2447 = vadd.f32 0.0, %v2446
        %v2448 = vpop.f32.mrf.mxu0
        %2449 = vmatprep.mubr.bf16.mxu0 0
        %2450 = vmatmul.mubr.bf16.gmra.mxu0 %v2307
        %v2451 = vpop.f32.mrf.mxu0
        %v2452 = vadd.f32 0.0, %v2451
        %v2453 = vpop.f32.mrf.mxu0
        %v2454 = vpop.f32.mrf.mxu0
        %v2455 = vadd.f32 0.0, %v2454
        %v2456 = vpop.f32.mrf.mxu0
        %2457 = vmatprep.mubr.bf16.mxu0 0
        %2458 = vmatmul.mubr.bf16.gmra.mxu0 %v2310
        %v2459 = vpop.f32.mrf.mxu0
        %v2460 = vadd.f32 0.0, %v2459
        %v2461 = vpop.f32.mrf.mxu0
        %v2462 = vpop.f32.mrf.mxu0
        %v2463 = vadd.f32 0.0, %v2462
        %v2464 = vpop.f32.mrf.mxu0
        %2465 = vmatprep.mubr.bf16.mxu0 0
        %2466 = vmatmul.mubr.bf16.gmra.mxu0 %v2313
        %v2467 = vpop.f32.mrf.mxu0
        %v2468 = vadd.f32 0.0, %v2467
        %v2469 = vpop.f32.mrf.mxu0
        %v2470 = vpop.f32.mrf.mxu0
        %v2471 = vadd.f32 0.0, %v2470
        %v2472 = vpop.f32.mrf.mxu0
        %2473 = vmatprep.mubr.bf16.mxu0 0
        %2474 = vmatmul.mubr.bf16.gmra.mxu0 %v2316
        %v2475 = vpop.f32.mrf.mxu0
        %v2476 = vadd.f32 0.0, %v2475
        %v2477 = vpop.f32.mrf.mxu0
        %v2478 = vpop.f32.mrf.mxu0
        %v2479 = vadd.f32 0.0, %v2478
        %v2480 = vpop.f32.mrf.mxu0
        %2481 = vdwg.mxu0
        %v2482 = vadd.f32 %v2221, %v2356
        %v2483 = vadd.f32 %v2222, %v2359
        %v2484 = vadd.f32 %v2223, %v2364
        %v2485 = vadd.f32 %v2224, %v2367
        %v2486 = vadd.f32 %v2225, %v2372
        %v2487 = vadd.f32 %v2226, %v2375
        %v2488 = vadd.f32 %v2227, %v2380
        %v2489 = vadd.f32 %v2228, %v2383
        %v2490 = vadd.f32 %v2229, %v2388
        %v2491 = vadd.f32 %v2230, %v2391
        %v2492 = vadd.f32 %v2231, %v2396
        %v2493 = vadd.f32 %v2232, %v2399
        %v2494 = vadd.f32 %v2233, %v2404
        %v2495 = vadd.f32 %v2234, %v2407
        %v2496 = vadd.f32 %v2235, %v2412
        %v2497 = vadd.f32 %v2236, %v2415
        %v2498 = vadd.f32 %v2237, %v2420
        %v2499 = vadd.f32 %v2238, %v2423
        %v2500 = vadd.f32 %v2239, %v2428
        %v2501 = vadd.f32 %v2240, %v2431
        %v2502 = vadd.f32 %v2241, %v2436
        %v2503 = vadd.f32 %v2242, %v2439
        %v2504 = vadd.f32 %v2243, %v2444
        %v2505 = vadd.f32 %v2244, %v2447
        %v2506 = vadd.f32 %v2245, %v2452
        %v2507 = vadd.f32 %v2246, %v2455
        %v2508 = vadd.f32 %v2247, %v2460
        %v2509 = vadd.f32 %v2248, %v2463
        %v2510 = vadd.f32 %v2249, %v2468
        %v2511 = vadd.f32 %v2250, %v2471
        %v2512 = vadd.f32 %v2251, %v2476
        %v2513 = vadd.f32 %v2252, %v2479
        %v2514 = vld [vmem:[%s1 + $0x8] sm:$0xc]
        %2515 = vset.pattern.permute.xlu0 5
        %2516 = vperm.xlu0 %2515, %v462
        %v2517 = vpop.permute.xlu0 %2516
        %2519 = vset.pattern.permute.xlu0 5
        %2520 = vperm.xlu0 %2519, %v463
        %v2521 = vpop.permute.xlu0 %2520
        %2523 = vset.pattern.permute.xlu0 5
        %2524 = vperm.xlu0 %2523, %v464
        %v2525 = vpop.permute.xlu0 %2524
        %2527 = vset.pattern.permute.xlu0 5
        %2528 = vperm.xlu0 %2527, %v465
        %v2529 = vpop.permute.xlu0 %2528
        %2531 = vset.pattern.permute.xlu0 5
        %2532 = vperm.xlu0 %2531, %v466
        %v2533 = vpop.permute.xlu0 %2532
        %2535 = vset.pattern.permute.xlu0 5
        %2536 = vperm.xlu0 %2535, %v467
        %v2537 = vpop.permute.xlu0 %2536
        %2539 = vset.pattern.permute.xlu0 5
        %2540 = vperm.xlu0 %2539, %v468
        %v2541 = vpop.permute.xlu0 %2540
        %2543 = vset.pattern.permute.xlu0 5
        %2544 = vperm.xlu0 %2543, %v469
        %v2545 = vpop.permute.xlu0 %2544
        %2547 = vset.pattern.permute.xlu0 5
        %2548 = vperm.xlu0 %2547, %v470
        %v2549 = vpop.permute.xlu0 %2548
        %2551 = vset.pattern.permute.xlu0 5
        %2552 = vperm.xlu0 %2551, %v471
        %v2553 = vpop.permute.xlu0 %2552
        %2555 = vset.pattern.permute.xlu0 5
        %2556 = vperm.xlu0 %2555, %v472
        %v2557 = vpop.permute.xlu0 %2556
        %2559 = vset.pattern.permute.xlu0 5
        %2560 = vperm.xlu0 %2559, %v473
        %v2561 = vpop.permute.xlu0 %2560
        %2563 = vset.pattern.permute.xlu0 5
        %2564 = vperm.xlu0 %2563, %v474
        %v2565 = vpop.permute.xlu0 %2564
        %2567 = vset.pattern.permute.xlu0 5
        %2568 = vperm.xlu0 %2567, %v475
        %v2569 = vpop.permute.xlu0 %2568
        %2571 = vset.pattern.permute.xlu0 5
        %2572 = vperm.xlu0 %2571, %v476
        %v2573 = vpop.permute.xlu0 %2572
        %2575 = vset.pattern.permute.xlu0 5
        %2576 = vperm.xlu0 %2575, %v477
        %v2577 = vpop.permute.xlu0 %2576
        %2579 = vset.pattern.permute.xlu0 5
        %2580 = vperm.xlu0 %2579, %v478
        %v2581 = vpop.permute.xlu0 %2580
        %2583 = vset.pattern.permute.xlu0 5
        %2584 = vperm.xlu0 %2583, %v479
        %v2585 = vpop.permute.xlu0 %2584
        %2587 = vset.pattern.permute.xlu0 5
        %2588 = vperm.xlu0 %2587, %v480
        %v2589 = vpop.permute.xlu0 %2588
        %2591 = vset.pattern.permute.xlu0 5
        %2592 = vperm.xlu0 %2591, %v481
        %v2593 = vpop.permute.xlu0 %2592
        %2595 = vset.pattern.permute.xlu0 5
        %2596 = vperm.xlu0 %2595, %v482
        %v2597 = vpop.permute.xlu0 %2596
        %2599 = vset.pattern.permute.xlu0 5
        %2600 = vperm.xlu0 %2599, %v483
        %v2601 = vpop.permute.xlu0 %2600
        %2603 = vset.pattern.permute.xlu0 5
        %2604 = vperm.xlu0 %2603, %v484
        %v2605 = vpop.permute.xlu0 %2604
        %2607 = vset.pattern.permute.xlu0 5
        %2608 = vperm.xlu0 %2607, %v485
        %v2609 = vpop.permute.xlu0 %2608
        %2611 = vset.pattern.permute.xlu0 5
        %2612 = vperm.xlu0 %2611, %v486
        %v2613 = vpop.permute.xlu0 %2612
        %2615 = vset.pattern.permute.xlu0 5
        %2616 = vperm.xlu0 %2615, %v487
        %v2617 = vpop.permute.xlu0 %2616
        %2619 = vset.pattern.permute.xlu0 5
        %2620 = vperm.xlu0 %2619, %v488
        %v2621 = vpop.permute.xlu0 %2620
        %2623 = vset.pattern.permute.xlu0 5
        %2624 = vperm.xlu0 %2623, %v489
        %v2625 = vpop.permute.xlu0 %2624
        %2627 = vset.pattern.permute.xlu0 5
        %2628 = vperm.xlu0 %2627, %v490
        %v2629 = vpop.permute.xlu0 %2628
        %2631 = vset.pattern.permute.xlu0 5
        %2632 = vperm.xlu0 %2631, %v491
        %v2633 = vpop.permute.xlu0 %2632
        %2635 = vset.pattern.permute.xlu0 5
        %2636 = vperm.xlu0 %2635, %v492
        %v2637 = vpop.permute.xlu0 %2636
        %2639 = vset.pattern.permute.xlu0 5
        %2640 = vperm.xlu0 %2639, %v493
        %v2641 = vpop.permute.xlu0 %2640
        %v2643 = vmul.f32 %v1318, %v2517
        %v2644 = vmul.f32 %v1320, %v2521
        %v2645 = vmul.f32 %v1322, %v2525
        %v2646 = vmul.f32 %v1324, %v2529
        %v2647 = vmul.f32 %v1326, %v2533
        %v2648 = vmul.f32 %v1328, %v2537
        %v2649 = vmul.f32 %v1330, %v2541
        %v2650 = vmul.f32 %v1332, %v2545
        %v2651 = vmul.f32 %v1334, %v2549
        %v2652 = vmul.f32 %v1336, %v2553
        %v2653 = vmul.f32 %v1338, %v2557
        %v2654 = vmul.f32 %v1340, %v2561
        %v2655 = vmul.f32 %v1342, %v2565
        %v2656 = vmul.f32 %v1344, %v2569
        %v2657 = vmul.f32 %v1346, %v2573
        %v2658 = vmul.f32 %v1348, %v2577
        %v2659 = vmul.f32 %v1350, %v2581
        %v2660 = vmul.f32 %v1352, %v2585
        %v2661 = vmul.f32 %v1354, %v2589
        %v2662 = vmul.f32 %v1356, %v2593
        %v2663 = vmul.f32 %v1358, %v2597
        %v2664 = vmul.f32 %v1360, %v2601
        %v2665 = vmul.f32 %v1362, %v2605
        %v2666 = vmul.f32 %v1364, %v2609
        %v2667 = vmul.f32 %v1366, %v2613
        %v2668 = vmul.f32 %v1368, %v2617
        %v2669 = vmul.f32 %v1370, %v2621
        %v2670 = vmul.f32 %v1372, %v2625
        %v2671 = vmul.f32 %v1374, %v2629
        %v2672 = vmul.f32 %v1375, %v2633
        %v2673 = vmul.f32 %v1313, %v2637
        %v2674 = vmul.f32 %v1407, %v2641
        %v2675 = vpack.c.bf16 %v2644, %v2643
        %v2676 = vpack.c.bf16 %v2646, %v2645
        %v2677 = vpack.c.bf16 %v2648, %v2647
        %v2678 = vpack.c.bf16 %v2650, %v2649
        %v2679 = vpack.c.bf16 %v2652, %v2651
        %v2680 = vpack.c.bf16 %v2654, %v2653
        %v2681 = vpack.c.bf16 %v2656, %v2655
        %v2682 = vpack.c.bf16 %v2658, %v2657
        %v2683 = vpack.c.bf16 %v2660, %v2659
        %v2684 = vpack.c.bf16 %v2662, %v2661
        %v2685 = vpack.c.bf16 %v2664, %v2663
        %v2686 = vpack.c.bf16 %v2666, %v2665
        %v2687 = vpack.c.bf16 %v2668, %v2667
        %v2688 = vpack.c.bf16 %v2670, %v2669
        %v2689 = vpack.c.bf16 %v2672, %v2671
        %v2690 = vpack.c.bf16 %v2674, %v2673
        %v2692 = vunpack.c.l.b16 %v2514
        %v2693 = vpack.c.b16 %v2692, %v2692
        %v2694 = vrot.slane %v2693, 2
        %v2696 = vsel %vm883, %v2675, 0
        %v2699 = vsel %vm883, %v2676, 0
        %v2702 = vsel %vm883, %v2677, 0
        %v2705 = vsel %vm883, %v2678, 0
        %v2708 = vsel %vm883, %v2679, 0
        %v2711 = vsel %vm883, %v2680, 0
        %v2714 = vsel %vm883, %v2681, 0
        %v2717 = vsel %vm883, %v2682, 0
        %v2720 = vsel %vm883, %v2683, 0
        %v2723 = vsel %vm883, %v2684, 0
        %v2726 = vsel %vm883, %v2685, 0
        %v2729 = vsel %vm883, %v2686, 0
        %v2732 = vsel %vm883, %v2687, 0
        %v2735 = vsel %vm883, %v2688, 0
        %v2738 = vsel %vm883, %v2689, 0
        %v2741 = vsel %vm883, %v2690, 0
        %v2744 = vsel %vm932, %v2694, 0
        %2746 = vmatprep.subr.bf16.mxu0 0
        %2747 = vmatpush1.bf16.msra.mxu0 0
        %2748 = vmatprep.subr.bf16.mxu0 0
        %2749 = vmatpush1.bf16.msra.mxu0 0
        %2750 = vmatprep.subr.bf16.mxu0 0
        %2751 = vmatpush1.bf16.msra.mxu0 0
        %2752 = vmatprep.subr.bf16.mxu0 0
        %2753 = vmatpush1.bf16.msra.mxu0 0
        %2754 = vmatprep.subr.bf16.mxu0 0
        %2755 = vmatpush1.bf16.msra.mxu0 0
        %2756 = vmatprep.subr.bf16.mxu0 0
        %2757 = vmatpush1.bf16.msra.mxu0 0
        %2758 = vmatprep.subr.bf16.mxu0 0
        %2759 = vmatpush1.bf16.msra.mxu0 0
        %2760 = vmatprep.subr.bf16.mxu0 0
        %2761 = vmatpush1.bf16.msra.mxu0 %v2744
        %2762 = vmatprep.subr.bf16.mxu0 0
        %2763 = vmatpush2.bf16.msra.mxu0 0
        %2764 = vmatprep.subr.bf16.mxu0 0
        %2765 = vmatpush2.bf16.msra.mxu0 0
        %2766 = vmatprep.subr.bf16.mxu0 0
        %2767 = vmatpush2.bf16.msra.mxu0 0
        %2768 = vmatprep.subr.bf16.mxu0 0
        %2769 = vmatpush2.bf16.msra.mxu0 0
        %2770 = vmatprep.subr.bf16.mxu0 0
        %2771 = vmatpush2.bf16.msra.mxu0 0
        %2772 = vmatprep.subr.bf16.mxu0 0
        %2773 = vmatpush2.bf16.msra.mxu0 0
        %2774 = vmatprep.subr.bf16.mxu0 0
        %2775 = vmatpush2.bf16.msra.mxu0 0
        %2776 = vmatprep.subr.bf16.mxu0 0
        %2777 = vmatpush2.bf16.msra.mxu0 0
        %2778 = vmatprep.mubr.bf16.mxu0 0
        %2779 = vmatmul.mubr.bf16.gmra.mxu0 %v2696
        %v2780 = vpop.f32.mrf.mxu0
        %v2781 = vadd.f32 0.0, %v2780
        %v2782 = vpop.f32.mrf.mxu0
        %v2783 = vpop.f32.mrf.mxu0
        %v2784 = vadd.f32 0.0, %v2783
        %v2785 = vpop.f32.mrf.mxu0
        %2786 = vmatprep.mubr.bf16.mxu0 0
        %2787 = vmatmul.mubr.bf16.gmra.mxu0 %v2699
        %v2788 = vpop.f32.mrf.mxu0
        %v2789 = vadd.f32 0.0, %v2788
        %v2790 = vpop.f32.mrf.mxu0
        %v2791 = vpop.f32.mrf.mxu0
        %v2792 = vadd.f32 0.0, %v2791
        %v2793 = vpop.f32.mrf.mxu0
        %2794 = vmatprep.mubr.bf16.mxu0 0
        %2795 = vmatmul.mubr.bf16.gmra.mxu0 %v2702
        %v2796 = vpop.f32.mrf.mxu0
        %v2797 = vadd.f32 0.0, %v2796
        %v2798 = vpop.f32.mrf.mxu0
        %v2799 = vpop.f32.mrf.mxu0
        %v2800 = vadd.f32 0.0, %v2799
        %v2801 = vpop.f32.mrf.mxu0
        %2802 = vmatprep.mubr.bf16.mxu0 0
        %2803 = vmatmul.mubr.bf16.gmra.mxu0 %v2705
        %v2804 = vpop.f32.mrf.mxu0
        %v2805 = vadd.f32 0.0, %v2804
        %v2806 = vpop.f32.mrf.mxu0
        %v2807 = vpop.f32.mrf.mxu0
        %v2808 = vadd.f32 0.0, %v2807
        %v2809 = vpop.f32.mrf.mxu0
        %2810 = vmatprep.mubr.bf16.mxu0 0
        %2811 = vmatmul.mubr.bf16.gmra.mxu0 %v2708
        %v2812 = vpop.f32.mrf.mxu0
        %v2813 = vadd.f32 0.0, %v2812
        %v2814 = vpop.f32.mrf.mxu0
        %v2815 = vpop.f32.mrf.mxu0
        %v2816 = vadd.f32 0.0, %v2815
        %v2817 = vpop.f32.mrf.mxu0
        %2818 = vmatprep.mubr.bf16.mxu0 0
        %2819 = vmatmul.mubr.bf16.gmra.mxu0 %v2711
        %v2820 = vpop.f32.mrf.mxu0
        %v2821 = vadd.f32 0.0, %v2820
        %v2822 = vpop.f32.mrf.mxu0
        %v2823 = vpop.f32.mrf.mxu0
        %v2824 = vadd.f32 0.0, %v2823
        %v2825 = vpop.f32.mrf.mxu0
        %2826 = vmatprep.mubr.bf16.mxu0 0
        %2827 = vmatmul.mubr.bf16.gmra.mxu0 %v2714
        %v2828 = vpop.f32.mrf.mxu0
        %v2829 = vadd.f32 0.0, %v2828
        %v2830 = vpop.f32.mrf.mxu0
        %v2831 = vpop.f32.mrf.mxu0
        %v2832 = vadd.f32 0.0, %v2831
        %v2833 = vpop.f32.mrf.mxu0
        %2834 = vmatprep.mubr.bf16.mxu0 0
        %2835 = vmatmul.mubr.bf16.gmra.mxu0 %v2717
        %v2836 = vpop.f32.mrf.mxu0
        %v2837 = vadd.f32 0.0, %v2836
        %v2838 = vpop.f32.mrf.mxu0
        %v2839 = vpop.f32.mrf.mxu0
        %v2840 = vadd.f32 0.0, %v2839
        %v2841 = vpop.f32.mrf.mxu0
        %2842 = vmatprep.mubr.bf16.mxu0 0
        %2843 = vmatmul.mubr.bf16.gmra.mxu0 %v2720
        %v2844 = vpop.f32.mrf.mxu0
        %v2845 = vadd.f32 0.0, %v2844
        %v2846 = vpop.f32.mrf.mxu0
        %v2847 = vpop.f32.mrf.mxu0
        %v2848 = vadd.f32 0.0, %v2847
        %v2849 = vpop.f32.mrf.mxu0
        %2850 = vmatprep.mubr.bf16.mxu0 0
        %2851 = vmatmul.mubr.bf16.gmra.mxu0 %v2723
        %v2852 = vpop.f32.mrf.mxu0
        %v2853 = vadd.f32 0.0, %v2852
        %v2854 = vpop.f32.mrf.mxu0
        %v2855 = vpop.f32.mrf.mxu0
        %v2856 = vadd.f32 0.0, %v2855
        %v2857 = vpop.f32.mrf.mxu0
        %2858 = vmatprep.mubr.bf16.mxu0 0
        %2859 = vmatmul.mubr.bf16.gmra.mxu0 %v2726
        %v2860 = vpop.f32.mrf.mxu0
        %v2861 = vadd.f32 0.0, %v2860
        %v2862 = vpop.f32.mrf.mxu0
        %v2863 = vpop.f32.mrf.mxu0
        %v2864 = vadd.f32 0.0, %v2863
        %v2865 = vpop.f32.mrf.mxu0
        %2866 = vmatprep.mubr.bf16.mxu0 0
        %2867 = vmatmul.mubr.bf16.gmra.mxu0 %v2729
        %v2868 = vpop.f32.mrf.mxu0
        %v2869 = vadd.f32 0.0, %v2868
        %v2870 = vpop.f32.mrf.mxu0
        %v2871 = vpop.f32.mrf.mxu0
        %v2872 = vadd.f32 0.0, %v2871
        %v2873 = vpop.f32.mrf.mxu0
        %2874 = vmatprep.mubr.bf16.mxu0 0
        %2875 = vmatmul.mubr.bf16.gmra.mxu0 %v2732
        %v2876 = vpop.f32.mrf.mxu0
        %v2877 = vadd.f32 0.0, %v2876
        %v2878 = vpop.f32.mrf.mxu0
        %v2879 = vpop.f32.mrf.mxu0
        %v2880 = vadd.f32 0.0, %v2879
        %v2881 = vpop.f32.mrf.mxu0
        %2882 = vmatprep.mubr.bf16.mxu0 0
        %2883 = vmatmul.mubr.bf16.gmra.mxu0 %v2735
        %v2884 = vpop.f32.mrf.mxu0
        %v2885 = vadd.f32 0.0, %v2884
        %v2886 = vpop.f32.mrf.mxu0
        %v2887 = vpop.f32.mrf.mxu0
        %v2888 = vadd.f32 0.0, %v2887
        %v2889 = vpop.f32.mrf.mxu0
        %2890 = vmatprep.mubr.bf16.mxu0 0
        %2891 = vmatmul.mubr.bf16.gmra.mxu0 %v2738
        %v2892 = vpop.f32.mrf.mxu0
        %v2893 = vadd.f32 0.0, %v2892
        %v2894 = vpop.f32.mrf.mxu0
        %v2895 = vpop.f32.mrf.mxu0
        %v2896 = vadd.f32 0.0, %v2895
        %v2897 = vpop.f32.mrf.mxu0
        %2898 = vmatprep.mubr.bf16.mxu0 0
        %2899 = vmatmul.mubr.bf16.gmra.mxu0 %v2741
        %v2900 = vpop.f32.mrf.mxu0
        %v2901 = vadd.f32 0.0, %v2900
        %v2902 = vpop.f32.mrf.mxu0
        %v2903 = vpop.f32.mrf.mxu0
        %v2904 = vadd.f32 0.0, %v2903
        %v2905 = vpop.f32.mrf.mxu0
        %2906 = vdwg.mxu0
        %v2907 = vadd.f32 %v2482, %v2781
        %v2908 = vadd.f32 %v2483, %v2784
        %v2909 = vadd.f32 %v2484, %v2789
        %v2910 = vadd.f32 %v2485, %v2792
        %v2911 = vadd.f32 %v2486, %v2797
        %v2912 = vadd.f32 %v2487, %v2800
        %v2913 = vadd.f32 %v2488, %v2805
        %v2914 = vadd.f32 %v2489, %v2808
        %v2915 = vadd.f32 %v2490, %v2813
        %v2916 = vadd.f32 %v2491, %v2816
        %v2917 = vadd.f32 %v2492, %v2821
        %v2918 = vadd.f32 %v2493, %v2824
        %v2919 = vadd.f32 %v2494, %v2829
        %v2920 = vadd.f32 %v2495, %v2832
        %v2921 = vadd.f32 %v2496, %v2837
        %v2922 = vadd.f32 %v2497, %v2840
        %v2923 = vadd.f32 %v2498, %v2845
        %v2924 = vadd.f32 %v2499, %v2848
        %v2925 = vadd.f32 %v2500, %v2853
        %v2926 = vadd.f32 %v2501, %v2856
        %v2927 = vadd.f32 %v2502, %v2861
        %v2928 = vadd.f32 %v2503, %v2864
        %v2929 = vadd.f32 %v2504, %v2869
        %v2930 = vadd.f32 %v2505, %v2872
        %v2931 = vadd.f32 %v2506, %v2877
        %v2932 = vadd.f32 %v2507, %v2880
        %v2933 = vadd.f32 %v2508, %v2885
        %v2934 = vadd.f32 %v2509, %v2888
        %v2935 = vadd.f32 %v2510, %v2893
        %v2936 = vadd.f32 %v2511, %v2896
        %v2937 = vadd.f32 %v2512, %v2901
        %v2938 = vadd.f32 %v2513, %v2904
        %v2939 = vld [vmem:[%s1 + $0xc] sm:$0x3]
        %2940 = vset.pattern.permute.xlu0 6
        %2941 = vperm.xlu0 %2940, %v462
        %v2942 = vpop.permute.xlu0 %2941
        %2944 = vset.pattern.permute.xlu0 6
        %2945 = vperm.xlu0 %2944, %v463
        %v2946 = vpop.permute.xlu0 %2945
        %2948 = vset.pattern.permute.xlu0 6
        %2949 = vperm.xlu0 %2948, %v464
        %v2950 = vpop.permute.xlu0 %2949
        %2952 = vset.pattern.permute.xlu0 6
        %2953 = vperm.xlu0 %2952, %v465
        %v2954 = vpop.permute.xlu0 %2953
        %2956 = vset.pattern.permute.xlu0 6
        %2957 = vperm.xlu0 %2956, %v466
        %v2958 = vpop.permute.xlu0 %2957
        %2960 = vset.pattern.permute.xlu0 6
        %2961 = vperm.xlu0 %2960, %v467
        %v2962 = vpop.permute.xlu0 %2961
        %2964 = vset.pattern.permute.xlu0 6
        %2965 = vperm.xlu0 %2964, %v468
        %v2966 = vpop.permute.xlu0 %2965
        %2968 = vset.pattern.permute.xlu0 6
        %2969 = vperm.xlu0 %2968, %v469
        %v2970 = vpop.permute.xlu0 %2969
        %2972 = vset.pattern.permute.xlu0 6
        %2973 = vperm.xlu0 %2972, %v470
        %v2974 = vpop.permute.xlu0 %2973
        %2976 = vset.pattern.permute.xlu0 6
        %2977 = vperm.xlu0 %2976, %v471
        %v2978 = vpop.permute.xlu0 %2977
        %2980 = vset.pattern.permute.xlu0 6
        %2981 = vperm.xlu0 %2980, %v472
        %v2982 = vpop.permute.xlu0 %2981
        %2984 = vset.pattern.permute.xlu0 6
        %2985 = vperm.xlu0 %2984, %v473
        %v2986 = vpop.permute.xlu0 %2985
        %2988 = vset.pattern.permute.xlu0 6
        %2989 = vperm.xlu0 %2988, %v474
        %v2990 = vpop.permute.xlu0 %2989
        %2992 = vset.pattern.permute.xlu0 6
        %2993 = vperm.xlu0 %2992, %v475
        %v2994 = vpop.permute.xlu0 %2993
        %2996 = vset.pattern.permute.xlu0 6
        %2997 = vperm.xlu0 %2996, %v476
        %v2998 = vpop.permute.xlu0 %2997
        %3000 = vset.pattern.permute.xlu0 6
        %3001 = vperm.xlu0 %3000, %v477
        %v3002 = vpop.permute.xlu0 %3001
        %3004 = vset.pattern.permute.xlu0 6
        %3005 = vperm.xlu0 %3004, %v478
        %v3006 = vpop.permute.xlu0 %3005
        %3008 = vset.pattern.permute.xlu0 6
        %3009 = vperm.xlu0 %3008, %v479
        %v3010 = vpop.permute.xlu0 %3009
        %3012 = vset.pattern.permute.xlu0 6
        %3013 = vperm.xlu0 %3012, %v480
        %v3014 = vpop.permute.xlu0 %3013
        %3016 = vset.pattern.permute.xlu0 6
        %3017 = vperm.xlu0 %3016, %v481
        %v3018 = vpop.permute.xlu0 %3017
        %3020 = vset.pattern.permute.xlu0 6
        %3021 = vperm.xlu0 %3020, %v482
        %v3022 = vpop.permute.xlu0 %3021
        %3024 = vset.pattern.permute.xlu0 6
        %3025 = vperm.xlu0 %3024, %v483
        %v3026 = vpop.permute.xlu0 %3025
        %3028 = vset.pattern.permute.xlu0 6
        %3029 = vperm.xlu0 %3028, %v484
        %v3030 = vpop.permute.xlu0 %3029
        %3032 = vset.pattern.permute.xlu0 6
        %3033 = vperm.xlu0 %3032, %v485
        %v3034 = vpop.permute.xlu0 %3033
        %3036 = vset.pattern.permute.xlu0 6
        %3037 = vperm.xlu0 %3036, %v486
        %v3038 = vpop.permute.xlu0 %3037
        %3040 = vset.pattern.permute.xlu0 6
        %3041 = vperm.xlu0 %3040, %v487
        %v3042 = vpop.permute.xlu0 %3041
        %3044 = vset.pattern.permute.xlu0 6
        %3045 = vperm.xlu0 %3044, %v488
        %v3046 = vpop.permute.xlu0 %3045
        %3048 = vset.pattern.permute.xlu0 6
        %3049 = vperm.xlu0 %3048, %v489
        %v3050 = vpop.permute.xlu0 %3049
        %3052 = vset.pattern.permute.xlu0 6
        %3053 = vperm.xlu0 %3052, %v490
        %v3054 = vpop.permute.xlu0 %3053
        %3056 = vset.pattern.permute.xlu0 6
        %3057 = vperm.xlu0 %3056, %v491
        %v3058 = vpop.permute.xlu0 %3057
        %3060 = vset.pattern.permute.xlu0 6
        %3061 = vperm.xlu0 %3060, %v492
        %v3062 = vpop.permute.xlu0 %3061
        %3064 = vset.pattern.permute.xlu0 6
        %3065 = vperm.xlu0 %3064, %v493
        %v3066 = vpop.permute.xlu0 %3065
        %v3068 = vmul.f32 %v377, %v2942
        %v3069 = vmul.f32 %v379, %v2946
        %v3070 = vmul.f32 %v381, %v2950
        %v3071 = vmul.f32 %v383, %v2954
        %v3072 = vmul.f32 %v385, %v2958
        %v3073 = vmul.f32 %v387, %v2962
        %v3074 = vmul.f32 %v389, %v2966
        %v3075 = vmul.f32 %v391, %v2970
        %v3076 = vmul.f32 %v393, %v2974
        %v3077 = vmul.f32 %v395, %v2978
        %v3078 = vmul.f32 %v397, %v2982
        %v3079 = vmul.f32 %v399, %v2986
        %v3080 = vmul.f32 %v401, %v2990
        %v3081 = vmul.f32 %v403, %v2994
        %v3082 = vmul.f32 %v405, %v2998
        %v3083 = vmul.f32 %v407, %v3002
        %v3084 = vmul.f32 %v409, %v3006
        %v3085 = vmul.f32 %v411, %v3010
        %v3086 = vmul.f32 %v413, %v3014
        %v3087 = vmul.f32 %v415, %v3018
        %v3088 = vmul.f32 %v417, %v3022
        %v3089 = vmul.f32 %v419, %v3026
        %v3090 = vmul.f32 %v421, %v3030
        %v3091 = vmul.f32 %v423, %v3034
        %v3092 = vmul.f32 %v425, %v3038
        %v3093 = vmul.f32 %v427, %v3042
        %v3094 = vmul.f32 %v429, %v3046
        %v3095 = vmul.f32 %v430, %v3050
        %v3096 = vmul.f32 %v338, %v3054
        %v3097 = vmul.f32 %v340, %v3058
        %v3098 = vmul.f32 %v461, %v3062
        %v3099 = vmul.f32 %v375, %v3066
        %v3100 = vpack.c.bf16 %v3069, %v3068
        %v3101 = vpack.c.bf16 %v3071, %v3070
        %v3102 = vpack.c.bf16 %v3073, %v3072
        %v3103 = vpack.c.bf16 %v3075, %v3074
        %v3104 = vpack.c.bf16 %v3077, %v3076
        %v3105 = vpack.c.bf16 %v3079, %v3078
        %v3106 = vpack.c.bf16 %v3081, %v3080
        %v3107 = vpack.c.bf16 %v3083, %v3082
        %v3108 = vpack.c.bf16 %v3085, %v3084
        %v3109 = vpack.c.bf16 %v3087, %v3086
        %v3110 = vpack.c.bf16 %v3089, %v3088
        %v3111 = vpack.c.bf16 %v3091, %v3090
        %v3112 = vpack.c.bf16 %v3093, %v3092
        %v3113 = vpack.c.bf16 %v3095, %v3094
        %v3114 = vpack.c.bf16 %v3097, %v3096
        %v3115 = vpack.c.bf16 %v3099, %v3098
        %v3117 = vsel %vm883, %v3100, 0
        %v3120 = vsel %vm883, %v3101, 0
        %v3123 = vsel %vm883, %v3102, 0
        %v3126 = vsel %vm883, %v3103, 0
        %v3129 = vsel %vm883, %v3104, 0
        %v3132 = vsel %vm883, %v3105, 0
        %v3135 = vsel %vm883, %v3106, 0
        %v3138 = vsel %vm883, %v3107, 0
        %v3141 = vsel %vm883, %v3108, 0
        %v3144 = vsel %vm883, %v3109, 0
        %v3147 = vsel %vm883, %v3110, 0
        %v3150 = vsel %vm883, %v3111, 0
        %v3153 = vsel %vm883, %v3112, 0
        %v3156 = vsel %vm883, %v3113, 0
        %v3159 = vsel %vm883, %v3114, 0
        %v3162 = vsel %vm883, %v3115, 0
        %v3165 = vsel %vm932, %v2939, 0
        %3167 = vmatprep.subr.bf16.mxu0 0
        %3168 = vmatpush1.bf16.msra.mxu0 0
        %3169 = vmatprep.subr.bf16.mxu0 0
        %3170 = vmatpush1.bf16.msra.mxu0 0
        %3171 = vmatprep.subr.bf16.mxu0 0
        %3172 = vmatpush1.bf16.msra.mxu0 0
        %3173 = vmatprep.subr.bf16.mxu0 0
        %3174 = vmatpush1.bf16.msra.mxu0 0
        %3175 = vmatprep.subr.bf16.mxu0 0
        %3176 = vmatpush1.bf16.msra.mxu0 0
        %3177 = vmatprep.subr.bf16.mxu0 0
        %3178 = vmatpush1.bf16.msra.mxu0 0
        %3179 = vmatprep.subr.bf16.mxu0 0
        %3180 = vmatpush1.bf16.msra.mxu0 0
        %3181 = vmatprep.subr.bf16.mxu0 0
        %3182 = vmatpush1.bf16.msra.mxu0 %v3165
        %3183 = vmatprep.subr.bf16.mxu0 0
        %3184 = vmatpush2.bf16.msra.mxu0 0
        %3185 = vmatprep.subr.bf16.mxu0 0
        %3186 = vmatpush2.bf16.msra.mxu0 0
        %3187 = vmatprep.subr.bf16.mxu0 0
        %3188 = vmatpush2.bf16.msra.mxu0 0
        %3189 = vmatprep.subr.bf16.mxu0 0
        %3190 = vmatpush2.bf16.msra.mxu0 0
        %3191 = vmatprep.subr.bf16.mxu0 0
        %3192 = vmatpush2.bf16.msra.mxu0 0
        %3193 = vmatprep.subr.bf16.mxu0 0
        %3194 = vmatpush2.bf16.msra.mxu0 0
        %3195 = vmatprep.subr.bf16.mxu0 0
        %3196 = vmatpush2.bf16.msra.mxu0 0
        %3197 = vmatprep.subr.bf16.mxu0 0
        %3198 = vmatpush2.bf16.msra.mxu0 0
        %3199 = vmatprep.mubr.bf16.mxu0 0
        %3200 = vmatmul.mubr.bf16.gmra.mxu0 %v3117
        %v3201 = vpop.f32.mrf.mxu0
        %v3202 = vadd.f32 0.0, %v3201
        %v3203 = vpop.f32.mrf.mxu0
        %v3204 = vpop.f32.mrf.mxu0
        %v3205 = vadd.f32 0.0, %v3204
        %v3206 = vpop.f32.mrf.mxu0
        %3207 = vmatprep.mubr.bf16.mxu0 0
        %3208 = vmatmul.mubr.bf16.gmra.mxu0 %v3120
        %v3209 = vpop.f32.mrf.mxu0
        %v3210 = vadd.f32 0.0, %v3209
        %v3211 = vpop.f32.mrf.mxu0
        %v3212 = vpop.f32.mrf.mxu0
        %v3213 = vadd.f32 0.0, %v3212
        %v3214 = vpop.f32.mrf.mxu0
        %3215 = vmatprep.mubr.bf16.mxu0 0
        %3216 = vmatmul.mubr.bf16.gmra.mxu0 %v3123
        %v3217 = vpop.f32.mrf.mxu0
        %v3218 = vadd.f32 0.0, %v3217
        %v3219 = vpop.f32.mrf.mxu0
        %v3220 = vpop.f32.mrf.mxu0
        %v3221 = vadd.f32 0.0, %v3220
        %v3222 = vpop.f32.mrf.mxu0
        %3223 = vmatprep.mubr.bf16.mxu0 0
        %3224 = vmatmul.mubr.bf16.gmra.mxu0 %v3126
        %v3225 = vpop.f32.mrf.mxu0
        %v3226 = vadd.f32 0.0, %v3225
        %v3227 = vpop.f32.mrf.mxu0
        %v3228 = vpop.f32.mrf.mxu0
        %v3229 = vadd.f32 0.0, %v3228
        %v3230 = vpop.f32.mrf.mxu0
        %3231 = vmatprep.mubr.bf16.mxu0 0
        %3232 = vmatmul.mubr.bf16.gmra.mxu0 %v3129
        %v3233 = vpop.f32.mrf.mxu0
        %v3234 = vadd.f32 0.0, %v3233
        %v3235 = vpop.f32.mrf.mxu0
        %v3236 = vpop.f32.mrf.mxu0
        %v3237 = vadd.f32 0.0, %v3236
        %v3238 = vpop.f32.mrf.mxu0
        %3239 = vmatprep.mubr.bf16.mxu0 0
        %3240 = vmatmul.mubr.bf16.gmra.mxu0 %v3132
        %v3241 = vpop.f32.mrf.mxu0
        %v3242 = vadd.f32 0.0, %v3241
        %v3243 = vpop.f32.mrf.mxu0
        %v3244 = vpop.f32.mrf.mxu0
        %v3245 = vadd.f32 0.0, %v3244
        %v3246 = vpop.f32.mrf.mxu0
        %3247 = vmatprep.mubr.bf16.mxu0 0
        %3248 = vmatmul.mubr.bf16.gmra.mxu0 %v3135
        %v3249 = vpop.f32.mrf.mxu0
        %v3250 = vadd.f32 0.0, %v3249
        %v3251 = vpop.f32.mrf.mxu0
        %v3252 = vpop.f32.mrf.mxu0
        %v3253 = vadd.f32 0.0, %v3252
        %v3254 = vpop.f32.mrf.mxu0
        %3255 = vmatprep.mubr.bf16.mxu0 0
        %3256 = vmatmul.mubr.bf16.gmra.mxu0 %v3138
        %v3257 = vpop.f32.mrf.mxu0
        %v3258 = vadd.f32 0.0, %v3257
        %v3259 = vpop.f32.mrf.mxu0
        %v3260 = vpop.f32.mrf.mxu0
        %v3261 = vadd.f32 0.0, %v3260
        %v3262 = vpop.f32.mrf.mxu0
        %3263 = vmatprep.mubr.bf16.mxu0 0
        %3264 = vmatmul.mubr.bf16.gmra.mxu0 %v3141
        %v3265 = vpop.f32.mrf.mxu0
        %v3266 = vadd.f32 0.0, %v3265
        %v3267 = vpop.f32.mrf.mxu0
        %v3268 = vpop.f32.mrf.mxu0
        %v3269 = vadd.f32 0.0, %v3268
        %v3270 = vpop.f32.mrf.mxu0
        %3271 = vmatprep.mubr.bf16.mxu0 0
        %3272 = vmatmul.mubr.bf16.gmra.mxu0 %v3144
        %v3273 = vpop.f32.mrf.mxu0
        %v3274 = vadd.f32 0.0, %v3273
        %v3275 = vpop.f32.mrf.mxu0
        %v3276 = vpop.f32.mrf.mxu0
        %v3277 = vadd.f32 0.0, %v3276
        %v3278 = vpop.f32.mrf.mxu0
        %3279 = vmatprep.mubr.bf16.mxu0 0
        %3280 = vmatmul.mubr.bf16.gmra.mxu0 %v3147
        %v3281 = vpop.f32.mrf.mxu0
        %v3282 = vadd.f32 0.0, %v3281
        %v3283 = vpop.f32.mrf.mxu0
        %v3284 = vpop.f32.mrf.mxu0
        %v3285 = vadd.f32 0.0, %v3284
        %v3286 = vpop.f32.mrf.mxu0
        %3287 = vmatprep.mubr.bf16.mxu0 0
        %3288 = vmatmul.mubr.bf16.gmra.mxu0 %v3150
        %v3289 = vpop.f32.mrf.mxu0
        %v3290 = vadd.f32 0.0, %v3289
        %v3291 = vpop.f32.mrf.mxu0
        %v3292 = vpop.f32.mrf.mxu0
        %v3293 = vadd.f32 0.0, %v3292
        %v3294 = vpop.f32.mrf.mxu0
        %3295 = vmatprep.mubr.bf16.mxu0 0
        %3296 = vmatmul.mubr.bf16.gmra.mxu0 %v3153
        %v3297 = vpop.f32.mrf.mxu0
        %v3298 = vadd.f32 0.0, %v3297
        %v3299 = vpop.f32.mrf.mxu0
        %v3300 = vpop.f32.mrf.mxu0
        %v3301 = vadd.f32 0.0, %v3300
        %v3302 = vpop.f32.mrf.mxu0
        %3303 = vmatprep.mubr.bf16.mxu0 0
        %3304 = vmatmul.mubr.bf16.gmra.mxu0 %v3156
        %v3305 = vpop.f32.mrf.mxu0
        %v3306 = vadd.f32 0.0, %v3305
        %v3307 = vpop.f32.mrf.mxu0
        %v3308 = vpop.f32.mrf.mxu0
        %v3309 = vadd.f32 0.0, %v3308
        %v3310 = vpop.f32.mrf.mxu0
        %3311 = vmatprep.mubr.bf16.mxu0 0
        %3312 = vmatmul.mubr.bf16.gmra.mxu0 %v3159
        %v3313 = vpop.f32.mrf.mxu0
        %v3314 = vadd.f32 0.0, %v3313
        %v3315 = vpop.f32.mrf.mxu0
        %v3316 = vpop.f32.mrf.mxu0
        %v3317 = vadd.f32 0.0, %v3316
        %v3318 = vpop.f32.mrf.mxu0
        %3319 = vmatprep.mubr.bf16.mxu0 0
        %3320 = vmatmul.mubr.bf16.gmra.mxu0 %v3162
        %v3321 = vpop.f32.mrf.mxu0
        %v3322 = vadd.f32 0.0, %v3321
        %v3323 = vpop.f32.mrf.mxu0
        %v3324 = vpop.f32.mrf.mxu0
        %v3325 = vadd.f32 0.0, %v3324
        %v3326 = vpop.f32.mrf.mxu0
        %3327 = vdwg.mxu0
        %v3328 = vadd.f32 %v2907, %v3202
        %v3329 = vadd.f32 %v2908, %v3205
        %v3330 = vadd.f32 %v2909, %v3210
        %v3331 = vadd.f32 %v2910, %v3213
        %v3332 = vadd.f32 %v2911, %v3218
        %v3333 = vadd.f32 %v2912, %v3221
        %v3334 = vadd.f32 %v2913, %v3226
        %v3335 = vadd.f32 %v2914, %v3229
        %v3336 = vadd.f32 %v2915, %v3234
        %v3337 = vadd.f32 %v2916, %v3237
        %v3338 = vadd.f32 %v2917, %v3242
        %v3339 = vadd.f32 %v2918, %v3245
        %v3340 = vadd.f32 %v2919, %v3250
        %v3341 = vadd.f32 %v2920, %v3253
        %v3342 = vadd.f32 %v2921, %v3258
        %v3343 = vadd.f32 %v2922, %v3261
        %v3344 = vadd.f32 %v2923, %v3266
        %v3345 = vadd.f32 %v2924, %v3269
        %v3346 = vadd.f32 %v2925, %v3274
        %v3347 = vadd.f32 %v2926, %v3277
        %v3348 = vadd.f32 %v2927, %v3282
        %v3349 = vadd.f32 %v2928, %v3285
        %v3350 = vadd.f32 %v2929, %v3290
        %v3351 = vadd.f32 %v2930, %v3293
        %v3352 = vadd.f32 %v2931, %v3298
        %v3353 = vadd.f32 %v2932, %v3301
        %v3354 = vadd.f32 %v2933, %v3306
        %v3355 = vadd.f32 %v2934, %v3309
        %v3356 = vadd.f32 %v2935, %v3314
        %v3357 = vadd.f32 %v2936, %v3317
        %v3358 = vadd.f32 %v2937, %v3322
        %v3359 = vadd.f32 %v2938, %v3325
        %v3360 = vld [vmem:[%s1 + $0xc] sm:$0xc]
        %3361 = vset.pattern.permute.xlu0 7
        %3362 = vperm.xlu0 %3361, %v462
        %v3363 = vpop.permute.xlu0 %3362
        %3365 = vset.pattern.permute.xlu0 7
        %3366 = vperm.xlu0 %3365, %v463
        %v3367 = vpop.permute.xlu0 %3366
        %3369 = vset.pattern.permute.xlu0 7
        %3370 = vperm.xlu0 %3369, %v464
        %v3371 = vpop.permute.xlu0 %3370
        %3373 = vset.pattern.permute.xlu0 7
        %3374 = vperm.xlu0 %3373, %v465
        %v3375 = vpop.permute.xlu0 %3374
        %3377 = vset.pattern.permute.xlu0 7
        %3378 = vperm.xlu0 %3377, %v466
        %v3379 = vpop.permute.xlu0 %3378
        %3381 = vset.pattern.permute.xlu0 7
        %3382 = vperm.xlu0 %3381, %v467
        %v3383 = vpop.permute.xlu0 %3382
        %3385 = vset.pattern.permute.xlu0 7
        %3386 = vperm.xlu0 %3385, %v468
        %v3387 = vpop.permute.xlu0 %3386
        %3389 = vset.pattern.permute.xlu0 7
        %3390 = vperm.xlu0 %3389, %v469
        %v3391 = vpop.permute.xlu0 %3390
        %3393 = vset.pattern.permute.xlu0 7
        %3394 = vperm.xlu0 %3393, %v470
        %v3395 = vpop.permute.xlu0 %3394
        %3397 = vset.pattern.permute.xlu0 7
        %3398 = vperm.xlu0 %3397, %v471
        %v3399 = vpop.permute.xlu0 %3398
        %3401 = vset.pattern.permute.xlu0 7
        %3402 = vperm.xlu0 %3401, %v472
        %v3403 = vpop.permute.xlu0 %3402
        %3405 = vset.pattern.permute.xlu0 7
        %3406 = vperm.xlu0 %3405, %v473
        %v3407 = vpop.permute.xlu0 %3406
        %3409 = vset.pattern.permute.xlu0 7
        %3410 = vperm.xlu0 %3409, %v474
        %v3411 = vpop.permute.xlu0 %3410
        %3413 = vset.pattern.permute.xlu0 7
        %3414 = vperm.xlu0 %3413, %v475
        %v3415 = vpop.permute.xlu0 %3414
        %3417 = vset.pattern.permute.xlu0 7
        %3418 = vperm.xlu0 %3417, %v476
        %v3419 = vpop.permute.xlu0 %3418
        %3421 = vset.pattern.permute.xlu0 7
        %3422 = vperm.xlu0 %3421, %v477
        %v3423 = vpop.permute.xlu0 %3422
        %3425 = vset.pattern.permute.xlu0 7
        %3426 = vperm.xlu0 %3425, %v478
        %v3427 = vpop.permute.xlu0 %3426
        %3429 = vset.pattern.permute.xlu0 7
        %3430 = vperm.xlu0 %3429, %v479
        %v3431 = vpop.permute.xlu0 %3430
        %3433 = vset.pattern.permute.xlu0 7
        %3434 = vperm.xlu0 %3433, %v480
        %v3435 = vpop.permute.xlu0 %3434
        %3437 = vset.pattern.permute.xlu0 7
        %3438 = vperm.xlu0 %3437, %v481
        %v3439 = vpop.permute.xlu0 %3438
        %3441 = vset.pattern.permute.xlu0 7
        %3442 = vperm.xlu0 %3441, %v482
        %v3443 = vpop.permute.xlu0 %3442
        %3445 = vset.pattern.permute.xlu0 7
        %3446 = vperm.xlu0 %3445, %v483
        %v3447 = vpop.permute.xlu0 %3446
        %3449 = vset.pattern.permute.xlu0 7
        %3450 = vperm.xlu0 %3449, %v484
        %v3451 = vpop.permute.xlu0 %3450
        %3453 = vset.pattern.permute.xlu0 7
        %3454 = vperm.xlu0 %3453, %v485
        %v3455 = vpop.permute.xlu0 %3454
        %3457 = vset.pattern.permute.xlu0 7
        %3458 = vperm.xlu0 %3457, %v486
        %v3459 = vpop.permute.xlu0 %3458
        %3461 = vset.pattern.permute.xlu0 7
        %3462 = vperm.xlu0 %3461, %v487
        %v3463 = vpop.permute.xlu0 %3462
        %3465 = vset.pattern.permute.xlu0 7
        %3466 = vperm.xlu0 %3465, %v488
        %v3467 = vpop.permute.xlu0 %3466
        %3469 = vset.pattern.permute.xlu0 7
        %3470 = vperm.xlu0 %3469, %v489
        %v3471 = vpop.permute.xlu0 %3470
        %3473 = vset.pattern.permute.xlu0 7
        %3474 = vperm.xlu0 %3473, %v490
        %v3475 = vpop.permute.xlu0 %3474
        %3477 = vset.pattern.permute.xlu0 7
        %3478 = vperm.xlu0 %3477, %v491
        %v3479 = vpop.permute.xlu0 %3478
        %3481 = vset.pattern.permute.xlu0 7
        %3482 = vperm.xlu0 %3481, %v492
        %v3483 = vpop.permute.xlu0 %3482
        %3485 = vset.pattern.permute.xlu0 7
        %3486 = vperm.xlu0 %3485, %v493
        %v3487 = vpop.permute.xlu0 %3486
        %v3489 = vmul.f32 %v301, %v3363
        %v3490 = vmul.f32 %v302, %v3367
        %v3491 = vmul.f32 %v303, %v3371
        %v3492 = vmul.f32 %v304, %v3375
        %v3493 = vmul.f32 %v305, %v3379
        %v3494 = vmul.f32 %v306, %v3383
        %v3495 = vmul.f32 %v307, %v3387
        %v3496 = vmul.f32 %v308, %v3391
        %v3497 = vmul.f32 %v309, %v3395
        %v3498 = vmul.f32 %v310, %v3399
        %v3499 = vmul.f32 %v311, %v3403
        %v3500 = vmul.f32 %v312, %v3407
        %v3501 = vmul.f32 %v313, %v3411
        %v3502 = vmul.f32 %v314, %v3415
        %v3503 = vmul.f32 %v315, %v3419
        %v3504 = vmul.f32 %v316, %v3423
        %v3505 = vmul.f32 %v317, %v3427
        %v3506 = vmul.f32 %v318, %v3431
        %v3507 = vmul.f32 %v319, %v3435
        %v3508 = vmul.f32 %v320, %v3439
        %v3509 = vmul.f32 %v321, %v3443
        %v3510 = vmul.f32 %v322, %v3447
        %v3511 = vmul.f32 %v323, %v3451
        %v3512 = vmul.f32 %v324, %v3455
        %v3513 = vmul.f32 %v325, %v3459
        %v3514 = vmul.f32 %v326, %v3463
        %v3515 = vmul.f32 %v327, %v3467
        %v3516 = vmul.f32 %v328, %v3471
        %v3517 = vmul.f32 %v329, %v3475
        %v3518 = vmul.f32 %v330, %v3479
        %v3519 = vmul.f32 %v299, %v3483
        %v3520 = vmul.f32 %v300, %v3487
        %v3521 = vpack.c.bf16 %v3490, %v3489
        %v3522 = vpack.c.bf16 %v3492, %v3491
        %v3523 = vpack.c.bf16 %v3494, %v3493
        %v3524 = vpack.c.bf16 %v3496, %v3495
        %v3525 = vpack.c.bf16 %v3498, %v3497
        %v3526 = vpack.c.bf16 %v3500, %v3499
        %v3527 = vpack.c.bf16 %v3502, %v3501
        %v3528 = vpack.c.bf16 %v3504, %v3503
        %v3529 = vpack.c.bf16 %v3506, %v3505
        %v3530 = vpack.c.bf16 %v3508, %v3507
        %v3531 = vpack.c.bf16 %v3510, %v3509
        %v3532 = vpack.c.bf16 %v3512, %v3511
        %v3533 = vpack.c.bf16 %v3514, %v3513
        %v3534 = vpack.c.bf16 %v3516, %v3515
        %v3535 = vpack.c.bf16 %v3518, %v3517
        %v3536 = vpack.c.bf16 %v3520, %v3519
        %v3538 = vunpack.c.l.b16 %v3360
        %v3539 = vpack.c.b16 %v3538, %v3538
        %v3540 = vrot.slane %v3539, 2
        %v3542 = vsel %vm883, %v3521, 0
        %v3545 = vsel %vm883, %v3522, 0
        %v3548 = vsel %vm883, %v3523, 0
        %v3551 = vsel %vm883, %v3524, 0
        %v3554 = vsel %vm883, %v3525, 0
        %v3557 = vsel %vm883, %v3526, 0
        %v3560 = vsel %vm883, %v3527, 0
        %v3563 = vsel %vm883, %v3528, 0
        %v3566 = vsel %vm883, %v3529, 0
        %v3569 = vsel %vm883, %v3530, 0
        %v3572 = vsel %vm883, %v3531, 0
        %v3575 = vsel %vm883, %v3532, 0
        %v3578 = vsel %vm883, %v3533, 0
        %v3581 = vsel %vm883, %v3534, 0
        %v3584 = vsel %vm883, %v3535, 0
        %v3587 = vsel %vm883, %v3536, 0
        %v3590 = vsel %vm932, %v3540, 0
        %3592 = vmatprep.subr.bf16.mxu0 0
        %3593 = vmatpush1.bf16.msra.mxu0 0
        %3594 = vmatprep.subr.bf16.mxu0 0
        %3595 = vmatpush1.bf16.msra.mxu0 0
        %3596 = vmatprep.subr.bf16.mxu0 0
        %3597 = vmatpush1.bf16.msra.mxu0 0
        %3598 = vmatprep.subr.bf16.mxu0 0
        %3599 = vmatpush1.bf16.msra.mxu0 0
        %3600 = vmatprep.subr.bf16.mxu0 0
        %3601 = vmatpush1.bf16.msra.mxu0 0
        %3602 = vmatprep.subr.bf16.mxu0 0
        %3603 = vmatpush1.bf16.msra.mxu0 0
        %3604 = vmatprep.subr.bf16.mxu0 0
        %3605 = vmatpush1.bf16.msra.mxu0 0
        %3606 = vmatprep.subr.bf16.mxu0 0
        %3607 = vmatpush1.bf16.msra.mxu0 %v3590
        %3608 = vmatprep.subr.bf16.mxu0 0
        %3609 = vmatpush2.bf16.msra.mxu0 0
        %3610 = vmatprep.subr.bf16.mxu0 0
        %3611 = vmatpush2.bf16.msra.mxu0 0
        %3612 = vmatprep.subr.bf16.mxu0 0
        %3613 = vmatpush2.bf16.msra.mxu0 0
        %3614 = vmatprep.subr.bf16.mxu0 0
        %3615 = vmatpush2.bf16.msra.mxu0 0
        %3616 = vmatprep.subr.bf16.mxu0 0
        %3617 = vmatpush2.bf16.msra.mxu0 0
        %3618 = vmatprep.subr.bf16.mxu0 0
        %3619 = vmatpush2.bf16.msra.mxu0 0
        %3620 = vmatprep.subr.bf16.mxu0 0
        %3621 = vmatpush2.bf16.msra.mxu0 0
        %3622 = vmatprep.subr.bf16.mxu0 0
        %3623 = vmatpush2.bf16.msra.mxu0 0
        %3624 = vmatprep.mubr.bf16.mxu0 0
        %3625 = vmatmul.mubr.bf16.gmra.mxu0 %v3542
        %v3626 = vpop.f32.mrf.mxu0
        %v3627 = vadd.f32 0.0, %v3626
        %v3628 = vpop.f32.mrf.mxu0
        %v3629 = vpop.f32.mrf.mxu0
        %v3630 = vadd.f32 0.0, %v3629
        %v3631 = vpop.f32.mrf.mxu0
        %3632 = vmatprep.mubr.bf16.mxu0 0
        %3633 = vmatmul.mubr.bf16.gmra.mxu0 %v3545
        %v3634 = vpop.f32.mrf.mxu0
        %v3635 = vadd.f32 0.0, %v3634
        %v3636 = vpop.f32.mrf.mxu0
        %v3637 = vpop.f32.mrf.mxu0
        %v3638 = vadd.f32 0.0, %v3637
        %v3639 = vpop.f32.mrf.mxu0
        %3640 = vmatprep.mubr.bf16.mxu0 0
        %3641 = vmatmul.mubr.bf16.gmra.mxu0 %v3548
        %v3642 = vpop.f32.mrf.mxu0
        %v3643 = vadd.f32 0.0, %v3642
        %v3644 = vpop.f32.mrf.mxu0
        %v3645 = vpop.f32.mrf.mxu0
        %v3646 = vadd.f32 0.0, %v3645
        %v3647 = vpop.f32.mrf.mxu0
        %3648 = vmatprep.mubr.bf16.mxu0 0
        %3649 = vmatmul.mubr.bf16.gmra.mxu0 %v3551
        %v3650 = vpop.f32.mrf.mxu0
        %v3651 = vadd.f32 0.0, %v3650
        %v3652 = vpop.f32.mrf.mxu0
        %v3653 = vpop.f32.mrf.mxu0
        %v3654 = vadd.f32 0.0, %v3653
        %v3655 = vpop.f32.mrf.mxu0
        %3656 = vmatprep.mubr.bf16.mxu0 0
        %3657 = vmatmul.mubr.bf16.gmra.mxu0 %v3554
        %v3658 = vpop.f32.mrf.mxu0
        %v3659 = vadd.f32 0.0, %v3658
        %v3660 = vpop.f32.mrf.mxu0
        %v3661 = vpop.f32.mrf.mxu0
        %v3662 = vadd.f32 0.0, %v3661
        %v3663 = vpop.f32.mrf.mxu0
        %3664 = vmatprep.mubr.bf16.mxu0 0
        %3665 = vmatmul.mubr.bf16.gmra.mxu0 %v3557
        %v3666 = vpop.f32.mrf.mxu0
        %v3667 = vadd.f32 0.0, %v3666
        %v3668 = vpop.f32.mrf.mxu0
        %v3669 = vpop.f32.mrf.mxu0
        %v3670 = vadd.f32 0.0, %v3669
        %v3671 = vpop.f32.mrf.mxu0
        %3672 = vmatprep.mubr.bf16.mxu0 0
        %3673 = vmatmul.mubr.bf16.gmra.mxu0 %v3560
        %v3674 = vpop.f32.mrf.mxu0
        %v3675 = vadd.f32 0.0, %v3674
        %v3676 = vpop.f32.mrf.mxu0
        %v3677 = vpop.f32.mrf.mxu0
        %v3678 = vadd.f32 0.0, %v3677
        %v3679 = vpop.f32.mrf.mxu0
        %3680 = vmatprep.mubr.bf16.mxu0 0
        %3681 = vmatmul.mubr.bf16.gmra.mxu0 %v3563
        %v3682 = vpop.f32.mrf.mxu0
        %v3683 = vadd.f32 0.0, %v3682
        %v3684 = vpop.f32.mrf.mxu0
        %v3685 = vpop.f32.mrf.mxu0
        %v3686 = vadd.f32 0.0, %v3685
        %v3687 = vpop.f32.mrf.mxu0
        %3688 = vmatprep.mubr.bf16.mxu0 0
        %3689 = vmatmul.mubr.bf16.gmra.mxu0 %v3566
        %v3690 = vpop.f32.mrf.mxu0
        %v3691 = vadd.f32 0.0, %v3690
        %v3692 = vpop.f32.mrf.mxu0
        %v3693 = vpop.f32.mrf.mxu0
        %v3694 = vadd.f32 0.0, %v3693
        %v3695 = vpop.f32.mrf.mxu0
        %3696 = vmatprep.mubr.bf16.mxu0 0
        %3697 = vmatmul.mubr.bf16.gmra.mxu0 %v3569
        %v3698 = vpop.f32.mrf.mxu0
        %v3699 = vadd.f32 0.0, %v3698
        %v3700 = vpop.f32.mrf.mxu0
        %v3701 = vpop.f32.mrf.mxu0
        %v3702 = vadd.f32 0.0, %v3701
        %v3703 = vpop.f32.mrf.mxu0
        %3704 = vmatprep.mubr.bf16.mxu0 0
        %3705 = vmatmul.mubr.bf16.gmra.mxu0 %v3572
        %v3706 = vpop.f32.mrf.mxu0
        %v3707 = vadd.f32 0.0, %v3706
        %v3708 = vpop.f32.mrf.mxu0
        %v3709 = vpop.f32.mrf.mxu0
        %v3710 = vadd.f32 0.0, %v3709
        %v3711 = vpop.f32.mrf.mxu0
        %3712 = vmatprep.mubr.bf16.mxu0 0
        %3713 = vmatmul.mubr.bf16.gmra.mxu0 %v3575
        %v3714 = vpop.f32.mrf.mxu0
        %v3715 = vadd.f32 0.0, %v3714
        %v3716 = vpop.f32.mrf.mxu0
        %v3717 = vpop.f32.mrf.mxu0
        %v3718 = vadd.f32 0.0, %v3717
        %v3719 = vpop.f32.mrf.mxu0
        %3720 = vmatprep.mubr.bf16.mxu0 0
        %3721 = vmatmul.mubr.bf16.gmra.mxu0 %v3578
        %v3722 = vpop.f32.mrf.mxu0
        %v3723 = vadd.f32 0.0, %v3722
        %v3724 = vpop.f32.mrf.mxu0
        %v3725 = vpop.f32.mrf.mxu0
        %v3726 = vadd.f32 0.0, %v3725
        %v3727 = vpop.f32.mrf.mxu0
        %3728 = vmatprep.mubr.bf16.mxu0 0
        %3729 = vmatmul.mubr.bf16.gmra.mxu0 %v3581
        %v3730 = vpop.f32.mrf.mxu0
        %v3731 = vadd.f32 0.0, %v3730
        %v3732 = vpop.f32.mrf.mxu0
        %v3733 = vpop.f32.mrf.mxu0
        %v3734 = vadd.f32 0.0, %v3733
        %v3735 = vpop.f32.mrf.mxu0
        %3736 = vmatprep.mubr.bf16.mxu0 0
        %3737 = vmatmul.mubr.bf16.gmra.mxu0 %v3584
        %v3738 = vpop.f32.mrf.mxu0
        %v3739 = vadd.f32 0.0, %v3738
        %v3740 = vpop.f32.mrf.mxu0
        %v3741 = vpop.f32.mrf.mxu0
        %v3742 = vadd.f32 0.0, %v3741
        %v3743 = vpop.f32.mrf.mxu0
        %3744 = vmatprep.mubr.bf16.mxu0 0
        %3745 = vmatmul.mubr.bf16.gmra.mxu0 %v3587
        %v3746 = vpop.f32.mrf.mxu0
        %v3747 = vadd.f32 0.0, %v3746
        %v3748 = vpop.f32.mrf.mxu0
        %v3749 = vpop.f32.mrf.mxu0
        %v3750 = vadd.f32 0.0, %v3749
        %v3751 = vpop.f32.mrf.mxu0
        %3752 = vdwg.mxu0
        %v3753 = vadd.f32 %v3328, %v3627
        %v3754 = vadd.f32 %v3329, %v3630
        %v3755 = vadd.f32 %v3330, %v3635
        %v3756 = vadd.f32 %v3331, %v3638
        %v3757 = vadd.f32 %v3332, %v3643
        %v3758 = vadd.f32 %v3333, %v3646
        %v3759 = vadd.f32 %v3334, %v3651
        %v3760 = vadd.f32 %v3335, %v3654
        %v3761 = vadd.f32 %v3336, %v3659
        %v3762 = vadd.f32 %v3337, %v3662
        %v3763 = vadd.f32 %v3338, %v3667
        %v3764 = vadd.f32 %v3339, %v3670
        %v3765 = vadd.f32 %v3340, %v3675
        %v3766 = vadd.f32 %v3341, %v3678
        %v3767 = vadd.f32 %v3342, %v3683
        %v3768 = vadd.f32 %v3343, %v3686
        %v3769 = vadd.f32 %v3344, %v3691
        %v3770 = vadd.f32 %v3345, %v3694
        %v3771 = vadd.f32 %v3346, %v3699
        %v3772 = vadd.f32 %v3347, %v3702
        %v3773 = vadd.f32 %v3348, %v3707
        %v3774 = vadd.f32 %v3349, %v3710
        %v3775 = vadd.f32 %v3350, %v3715
        %v3776 = vadd.f32 %v3351, %v3718
        %v3777 = vadd.f32 %v3352, %v3723
        %v3778 = vadd.f32 %v3353, %v3726
        %v3779 = vadd.f32 %v3354, %v3731
        %v3780 = vadd.f32 %v3355, %v3734
        %v3781 = vadd.f32 %v3356, %v3739
        %v3782 = vadd.f32 %v3357, %v3742
        %v3783 = vadd.f32 %v3358, %v3747
        %v3784 = vadd.f32 %v3359, %v3750
        %v3785 = vld [vmem:[%s1 + $0x10] sm:$0x3]
        %3786 = vset.pattern.permute.xlu0 8
        %3787 = vperm.xlu0 %3786, %v462
        %v3788 = vpop.permute.xlu0 %3787
        %3790 = vset.pattern.permute.xlu0 8
        %3791 = vperm.xlu0 %3790, %v463
        %v3792 = vpop.permute.xlu0 %3791
        %3794 = vset.pattern.permute.xlu0 8
        %3795 = vperm.xlu0 %3794, %v464
        %v3796 = vpop.permute.xlu0 %3795
        %3798 = vset.pattern.permute.xlu0 8
        %3799 = vperm.xlu0 %3798, %v465
        %v3800 = vpop.permute.xlu0 %3799
        %3802 = vset.pattern.permute.xlu0 8
        %3803 = vperm.xlu0 %3802, %v466
        %v3804 = vpop.permute.xlu0 %3803
        %3806 = vset.pattern.permute.xlu0 8
        %3807 = vperm.xlu0 %3806, %v467
        %v3808 = vpop.permute.xlu0 %3807
        %3810 = vset.pattern.permute.xlu0 8
        %3811 = vperm.xlu0 %3810, %v468
        %v3812 = vpop.permute.xlu0 %3811
        %3814 = vset.pattern.permute.xlu0 8
        %3815 = vperm.xlu0 %3814, %v469
        %v3816 = vpop.permute.xlu0 %3815
        %3818 = vset.pattern.permute.xlu0 8
        %3819 = vperm.xlu0 %3818, %v470
        %v3820 = vpop.permute.xlu0 %3819
        %3822 = vset.pattern.permute.xlu0 8
        %3823 = vperm.xlu0 %3822, %v471
        %v3824 = vpop.permute.xlu0 %3823
        %3826 = vset.pattern.permute.xlu0 8
        %3827 = vperm.xlu0 %3826, %v472
        %v3828 = vpop.permute.xlu0 %3827
        %3830 = vset.pattern.permute.xlu0 8
        %3831 = vperm.xlu0 %3830, %v473
        %v3832 = vpop.permute.xlu0 %3831
        %3834 = vset.pattern.permute.xlu0 8
        %3835 = vperm.xlu0 %3834, %v474
        %v3836 = vpop.permute.xlu0 %3835
        %3838 = vset.pattern.permute.xlu0 8
        %3839 = vperm.xlu0 %3838, %v475
        %v3840 = vpop.permute.xlu0 %3839
        %3842 = vset.pattern.permute.xlu0 8
        %3843 = vperm.xlu0 %3842, %v476
        %v3844 = vpop.permute.xlu0 %3843
        %3846 = vset.pattern.permute.xlu0 8
        %3847 = vperm.xlu0 %3846, %v477
        %v3848 = vpop.permute.xlu0 %3847
        %3850 = vset.pattern.permute.xlu0 8
        %3851 = vperm.xlu0 %3850, %v478
        %v3852 = vpop.permute.xlu0 %3851
        %3854 = vset.pattern.permute.xlu0 8
        %3855 = vperm.xlu0 %3854, %v479
        %v3856 = vpop.permute.xlu0 %3855
        %3858 = vset.pattern.permute.xlu0 8
        %3859 = vperm.xlu0 %3858, %v480
        %v3860 = vpop.permute.xlu0 %3859
        %3862 = vset.pattern.permute.xlu0 8
        %3863 = vperm.xlu0 %3862, %v481
        %v3864 = vpop.permute.xlu0 %3863
        %3866 = vset.pattern.permute.xlu0 8
        %3867 = vperm.xlu0 %3866, %v482
        %v3868 = vpop.permute.xlu0 %3867
        %3870 = vset.pattern.permute.xlu0 8
        %3871 = vperm.xlu0 %3870, %v483
        %v3872 = vpop.permute.xlu0 %3871
        %3874 = vset.pattern.permute.xlu0 8
        %3875 = vperm.xlu0 %3874, %v484
        %v3876 = vpop.permute.xlu0 %3875
        %3878 = vset.pattern.permute.xlu0 8
        %3879 = vperm.xlu0 %3878, %v485
        %v3880 = vpop.permute.xlu0 %3879
        %3882 = vset.pattern.permute.xlu0 8
        %3883 = vperm.xlu0 %3882, %v486
        %v3884 = vpop.permute.xlu0 %3883
        %3886 = vset.pattern.permute.xlu0 8
        %3887 = vperm.xlu0 %3886, %v487
        %v3888 = vpop.permute.xlu0 %3887
        %3890 = vset.pattern.permute.xlu0 8
        %3891 = vperm.xlu0 %3890, %v488
        %v3892 = vpop.permute.xlu0 %3891
        %3894 = vset.pattern.permute.xlu0 8
        %3895 = vperm.xlu0 %3894, %v489
        %v3896 = vpop.permute.xlu0 %3895
        %3898 = vset.pattern.permute.xlu0 8
        %3899 = vperm.xlu0 %3898, %v490
        %v3900 = vpop.permute.xlu0 %3899
        %3902 = vset.pattern.permute.xlu0 8
        %3903 = vperm.xlu0 %3902, %v491
        %v3904 = vpop.permute.xlu0 %3903
        %3906 = vset.pattern.permute.xlu0 8
        %3907 = vperm.xlu0 %3906, %v492
        %v3908 = vpop.permute.xlu0 %3907
        %3910 = vset.pattern.permute.xlu0 8
        %3911 = vperm.xlu0 %3910, %v493
        %v3912 = vpop.permute.xlu0 %3911
        %v3914 = vmul.f32 %v1322, %v3788
        %v3915 = vmul.f32 %v1324, %v3792
        %v3916 = vmul.f32 %v1326, %v3796
        %v3917 = vmul.f32 %v1328, %v3800
        %v3918 = vmul.f32 %v1330, %v3804
        %v3919 = vmul.f32 %v1332, %v3808
        %v3920 = vmul.f32 %v1334, %v3812
        %v3921 = vmul.f32 %v1336, %v3816
        %v3922 = vmul.f32 %v1338, %v3820
        %v3923 = vmul.f32 %v1340, %v3824
        %v3924 = vmul.f32 %v1342, %v3828
        %v3925 = vmul.f32 %v1344, %v3832
        %v3926 = vmul.f32 %v1346, %v3836
        %v3927 = vmul.f32 %v1348, %v3840
        %v3928 = vmul.f32 %v1350, %v3844
        %v3929 = vmul.f32 %v1352, %v3848
        %v3930 = vmul.f32 %v1354, %v3852
        %v3931 = vmul.f32 %v1356, %v3856
        %v3932 = vmul.f32 %v1358, %v3860
        %v3933 = vmul.f32 %v1360, %v3864
        %v3934 = vmul.f32 %v1362, %v3868
        %v3935 = vmul.f32 %v1364, %v3872
        %v3936 = vmul.f32 %v1366, %v3876
        %v3937 = vmul.f32 %v1368, %v3880
        %v3938 = vmul.f32 %v1370, %v3884
        %v3939 = vmul.f32 %v1372, %v3888
        %v3940 = vmul.f32 %v1374, %v3892
        %v3941 = vmul.f32 %v1375, %v3896
        %v3942 = vmul.f32 %v1313, %v3900
        %v3943 = vmul.f32 %v1407, %v3904
        %v3944 = vmul.f32 %v1318, %v3908
        %v3945 = vmul.f32 %v1320, %v3912
        %v3946 = vpack.c.bf16 %v3915, %v3914
        %v3947 = vpack.c.bf16 %v3917, %v3916
        %v3948 = vpack.c.bf16 %v3919, %v3918
        %v3949 = vpack.c.bf16 %v3921, %v3920
        %v3950 = vpack.c.bf16 %v3923, %v3922
        %v3951 = vpack.c.bf16 %v3925, %v3924
        %v3952 = vpack.c.bf16 %v3927, %v3926
        %v3953 = vpack.c.bf16 %v3929, %v3928
        %v3954 = vpack.c.bf16 %v3931, %v3930
        %v3955 = vpack.c.bf16 %v3933, %v3932
        %v3956 = vpack.c.bf16 %v3935, %v3934
        %v3957 = vpack.c.bf16 %v3937, %v3936
        %v3958 = vpack.c.bf16 %v3939, %v3938
        %v3959 = vpack.c.bf16 %v3941, %v3940
        %v3960 = vpack.c.bf16 %v3943, %v3942
        %v3961 = vpack.c.bf16 %v3945, %v3944
        %v3963 = vsel %vm883, %v3946, 0
        %v3966 = vsel %vm883, %v3947, 0
        %v3969 = vsel %vm883, %v3948, 0
        %v3972 = vsel %vm883, %v3949, 0
        %v3975 = vsel %vm883, %v3950, 0
        %v3978 = vsel %vm883, %v3951, 0
        %v3981 = vsel %vm883, %v3952, 0
        %v3984 = vsel %vm883, %v3953, 0
        %v3987 = vsel %vm883, %v3954, 0
        %v3990 = vsel %vm883, %v3955, 0
        %v3993 = vsel %vm883, %v3956, 0
        %v3996 = vsel %vm883, %v3957, 0
        %v3999 = vsel %vm883, %v3958, 0
        %v4002 = vsel %vm883, %v3959, 0
        %v4005 = vsel %vm883, %v3960, 0
        %v4008 = vsel %vm883, %v3961, 0
        %v4011 = vsel %vm932, %v3785, 0
        %4013 = vmatprep.subr.bf16.mxu0 0
        %4014 = vmatpush1.bf16.msra.mxu0 0
        %4015 = vmatprep.subr.bf16.mxu0 0
        %4016 = vmatpush1.bf16.msra.mxu0 0
        %4017 = vmatprep.subr.bf16.mxu0 0
        %4018 = vmatpush1.bf16.msra.mxu0 0
        %4019 = vmatprep.subr.bf16.mxu0 0
        %4020 = vmatpush1.bf16.msra.mxu0 0
        %4021 = vmatprep.subr.bf16.mxu0 0
        %4022 = vmatpush1.bf16.msra.mxu0 0
        %4023 = vmatprep.subr.bf16.mxu0 0
        %4024 = vmatpush1.bf16.msra.mxu0 0
        %4025 = vmatprep.subr.bf16.mxu0 0
        %4026 = vmatpush1.bf16.msra.mxu0 0
        %4027 = vmatprep.subr.bf16.mxu0 0
        %4028 = vmatpush1.bf16.msra.mxu0 %v4011
        %4029 = vmatprep.subr.bf16.mxu0 0
        %4030 = vmatpush2.bf16.msra.mxu0 0
        %4031 = vmatprep.subr.bf16.mxu0 0
        %4032 = vmatpush2.bf16.msra.mxu0 0
        %4033 = vmatprep.subr.bf16.mxu0 0
        %4034 = vmatpush2.bf16.msra.mxu0 0
        %4035 = vmatprep.subr.bf16.mxu0 0
        %4036 = vmatpush2.bf16.msra.mxu0 0
        %4037 = vmatprep.subr.bf16.mxu0 0
        %4038 = vmatpush2.bf16.msra.mxu0 0
        %4039 = vmatprep.subr.bf16.mxu0 0
        %4040 = vmatpush2.bf16.msra.mxu0 0
        %4041 = vmatprep.subr.bf16.mxu0 0
        %4042 = vmatpush2.bf16.msra.mxu0 0
        %4043 = vmatprep.subr.bf16.mxu0 0
        %4044 = vmatpush2.bf16.msra.mxu0 0
        %4045 = vmatprep.mubr.bf16.mxu0 0
        %4046 = vmatmul.mubr.bf16.gmra.mxu0 %v3963
        %v4047 = vpop.f32.mrf.mxu0
        %v4048 = vadd.f32 0.0, %v4047
        %v4049 = vpop.f32.mrf.mxu0
        %v4050 = vpop.f32.mrf.mxu0
        %v4051 = vadd.f32 0.0, %v4050
        %v4052 = vpop.f32.mrf.mxu0
        %4053 = vmatprep.mubr.bf16.mxu0 0
        %4054 = vmatmul.mubr.bf16.gmra.mxu0 %v3966
        %v4055 = vpop.f32.mrf.mxu0
        %v4056 = vadd.f32 0.0, %v4055
        %v4057 = vpop.f32.mrf.mxu0
        %v4058 = vpop.f32.mrf.mxu0
        %v4059 = vadd.f32 0.0, %v4058
        %v4060 = vpop.f32.mrf.mxu0
        %4061 = vmatprep.mubr.bf16.mxu0 0
        %4062 = vmatmul.mubr.bf16.gmra.mxu0 %v3969
        %v4063 = vpop.f32.mrf.mxu0
        %v4064 = vadd.f32 0.0, %v4063
        %v4065 = vpop.f32.mrf.mxu0
        %v4066 = vpop.f32.mrf.mxu0
        %v4067 = vadd.f32 0.0, %v4066
        %v4068 = vpop.f32.mrf.mxu0
        %4069 = vmatprep.mubr.bf16.mxu0 0
        %4070 = vmatmul.mubr.bf16.gmra.mxu0 %v3972
        %v4071 = vpop.f32.mrf.mxu0
        %v4072 = vadd.f32 0.0, %v4071
        %v4073 = vpop.f32.mrf.mxu0
        %v4074 = vpop.f32.mrf.mxu0
        %v4075 = vadd.f32 0.0, %v4074
        %v4076 = vpop.f32.mrf.mxu0
        %4077 = vmatprep.mubr.bf16.mxu0 0
        %4078 = vmatmul.mubr.bf16.gmra.mxu0 %v3975
        %v4079 = vpop.f32.mrf.mxu0
        %v4080 = vadd.f32 0.0, %v4079
        %v4081 = vpop.f32.mrf.mxu0
        %v4082 = vpop.f32.mrf.mxu0
        %v4083 = vadd.f32 0.0, %v4082
        %v4084 = vpop.f32.mrf.mxu0
        %4085 = vmatprep.mubr.bf16.mxu0 0
        %4086 = vmatmul.mubr.bf16.gmra.mxu0 %v3978
        %v4087 = vpop.f32.mrf.mxu0
        %v4088 = vadd.f32 0.0, %v4087
        %v4089 = vpop.f32.mrf.mxu0
        %v4090 = vpop.f32.mrf.mxu0
        %v4091 = vadd.f32 0.0, %v4090
        %v4092 = vpop.f32.mrf.mxu0
        %4093 = vmatprep.mubr.bf16.mxu0 0
        %4094 = vmatmul.mubr.bf16.gmra.mxu0 %v3981
        %v4095 = vpop.f32.mrf.mxu0
        %v4096 = vadd.f32 0.0, %v4095
        %v4097 = vpop.f32.mrf.mxu0
        %v4098 = vpop.f32.mrf.mxu0
        %v4099 = vadd.f32 0.0, %v4098
        %v4100 = vpop.f32.mrf.mxu0
        %4101 = vmatprep.mubr.bf16.mxu0 0
        %4102 = vmatmul.mubr.bf16.gmra.mxu0 %v3984
        %v4103 = vpop.f32.mrf.mxu0
        %v4104 = vadd.f32 0.0, %v4103
        %v4105 = vpop.f32.mrf.mxu0
        %v4106 = vpop.f32.mrf.mxu0
        %v4107 = vadd.f32 0.0, %v4106
        %v4108 = vpop.f32.mrf.mxu0
        %4109 = vmatprep.mubr.bf16.mxu0 0
        %4110 = vmatmul.mubr.bf16.gmra.mxu0 %v3987
        %v4111 = vpop.f32.mrf.mxu0
        %v4112 = vadd.f32 0.0, %v4111
        %v4113 = vpop.f32.mrf.mxu0
        %v4114 = vpop.f32.mrf.mxu0
        %v4115 = vadd.f32 0.0, %v4114
        %v4116 = vpop.f32.mrf.mxu0
        %4117 = vmatprep.mubr.bf16.mxu0 0
        %4118 = vmatmul.mubr.bf16.gmra.mxu0 %v3990
        %v4119 = vpop.f32.mrf.mxu0
        %v4120 = vadd.f32 0.0, %v4119
        %v4121 = vpop.f32.mrf.mxu0
        %v4122 = vpop.f32.mrf.mxu0
        %v4123 = vadd.f32 0.0, %v4122
        %v4124 = vpop.f32.mrf.mxu0
        %4125 = vmatprep.mubr.bf16.mxu0 0
        %4126 = vmatmul.mubr.bf16.gmra.mxu0 %v3993
        %v4127 = vpop.f32.mrf.mxu0
        %v4128 = vadd.f32 0.0, %v4127
        %v4129 = vpop.f32.mrf.mxu0
        %v4130 = vpop.f32.mrf.mxu0
        %v4131 = vadd.f32 0.0, %v4130
        %v4132 = vpop.f32.mrf.mxu0
        %4133 = vmatprep.mubr.bf16.mxu0 0
        %4134 = vmatmul.mubr.bf16.gmra.mxu0 %v3996
        %v4135 = vpop.f32.mrf.mxu0
        %v4136 = vadd.f32 0.0, %v4135
        %v4137 = vpop.f32.mrf.mxu0
        %v4138 = vpop.f32.mrf.mxu0
        %v4139 = vadd.f32 0.0, %v4138
        %v4140 = vpop.f32.mrf.mxu0
        %4141 = vmatprep.mubr.bf16.mxu0 0
        %4142 = vmatmul.mubr.bf16.gmra.mxu0 %v3999
        %v4143 = vpop.f32.mrf.mxu0
        %v4144 = vadd.f32 0.0, %v4143
        %v4145 = vpop.f32.mrf.mxu0
        %v4146 = vpop.f32.mrf.mxu0
        %v4147 = vadd.f32 0.0, %v4146
        %v4148 = vpop.f32.mrf.mxu0
        %4149 = vmatprep.mubr.bf16.mxu0 0
        %4150 = vmatmul.mubr.bf16.gmra.mxu0 %v4002
        %v4151 = vpop.f32.mrf.mxu0
        %v4152 = vadd.f32 0.0, %v4151
        %v4153 = vpop.f32.mrf.mxu0
        %v4154 = vpop.f32.mrf.mxu0
        %v4155 = vadd.f32 0.0, %v4154
        %v4156 = vpop.f32.mrf.mxu0
        %4157 = vmatprep.mubr.bf16.mxu0 0
        %4158 = vmatmul.mubr.bf16.gmra.mxu0 %v4005
        %v4159 = vpop.f32.mrf.mxu0
        %v4160 = vadd.f32 0.0, %v4159
        %v4161 = vpop.f32.mrf.mxu0
        %v4162 = vpop.f32.mrf.mxu0
        %v4163 = vadd.f32 0.0, %v4162
        %v4164 = vpop.f32.mrf.mxu0
        %4165 = vmatprep.mubr.bf16.mxu0 0
        %4166 = vmatmul.mubr.bf16.gmra.mxu0 %v4008
        %v4167 = vpop.f32.mrf.mxu0
        %v4168 = vadd.f32 0.0, %v4167
        %v4169 = vpop.f32.mrf.mxu0
        %v4170 = vpop.f32.mrf.mxu0
        %v4171 = vadd.f32 0.0, %v4170
        %v4172 = vpop.f32.mrf.mxu0
        %4173 = vdwg.mxu0
        %v4174 = vadd.f32 %v3753, %v4048
        %v4175 = vadd.f32 %v3754, %v4051
        %v4176 = vadd.f32 %v3755, %v4056
        %v4177 = vadd.f32 %v3756, %v4059
        %v4178 = vadd.f32 %v3757, %v4064
        %v4179 = vadd.f32 %v3758, %v4067
        %v4180 = vadd.f32 %v3759, %v4072
        %v4181 = vadd.f32 %v3760, %v4075
        %v4182 = vadd.f32 %v3761, %v4080
        %v4183 = vadd.f32 %v3762, %v4083
        %v4184 = vadd.f32 %v3763, %v4088
        %v4185 = vadd.f32 %v3764, %v4091
        %v4186 = vadd.f32 %v3765, %v4096
        %v4187 = vadd.f32 %v3766, %v4099
        %v4188 = vadd.f32 %v3767, %v4104
        %v4189 = vadd.f32 %v3768, %v4107
        %v4190 = vadd.f32 %v3769, %v4112
        %v4191 = vadd.f32 %v3770, %v4115
        %v4192 = vadd.f32 %v3771, %v4120
        %v4193 = vadd.f32 %v3772, %v4123
        %v4194 = vadd.f32 %v3773, %v4128
        %v4195 = vadd.f32 %v3774, %v4131
        %v4196 = vadd.f32 %v3775, %v4136
        %v4197 = vadd.f32 %v3776, %v4139
        %v4198 = vadd.f32 %v3777, %v4144
        %v4199 = vadd.f32 %v3778, %v4147
        %v4200 = vadd.f32 %v3779, %v4152
        %v4201 = vadd.f32 %v3780, %v4155
        %v4202 = vadd.f32 %v3781, %v4160
        %v4203 = vadd.f32 %v3782, %v4163
        %v4204 = vadd.f32 %v3783, %v4168
        %v4205 = vadd.f32 %v3784, %v4171
        %vm4206 = vcmask 64512
        %4207 = vst.msk [vmem:[%s297] sm:$0xff] %vm4206, %v4174
        %4208 = vst.msk [vmem:[%s297 + $0x8] sm:$0xff] %vm4206, %v4175
        %4209 = vst.msk [vmem:[%s297 + $0x10] sm:$0xff] %vm4206, %v4176
        %4210 = vst.msk [vmem:[%s297 + $0x18] sm:$0xff] %vm4206, %v4177
        %4211 = vst.msk [vmem:[%s297 + $0x20] sm:$0xff] %vm4206, %v4178
        %4212 = vst.msk [vmem:[%s297 + $0x28] sm:$0xff] %vm4206, %v4179
        %4213 = vst.msk [vmem:[%s297 + $0x30] sm:$0xff] %vm4206, %v4180
        %4214 = vst.msk [vmem:[%s297 + $0x38] sm:$0xff] %vm4206, %v4181
        %4215 = vst.msk [vmem:[%s297 + $0x40] sm:$0xff] %vm4206, %v4182
        %4216 = vst.msk [vmem:[%s297 + $0x48] sm:$0xff] %vm4206, %v4183
        %4217 = vst.msk [vmem:[%s297 + $0x50] sm:$0xff] %vm4206, %v4184
        %4218 = vst.msk [vmem:[%s297 + $0x58] sm:$0xff] %vm4206, %v4185
        %4219 = vst.msk [vmem:[%s297 + $0x60] sm:$0xff] %vm4206, %v4186
        %4220 = vst.msk [vmem:[%s297 + $0x68] sm:$0xff] %vm4206, %v4187
        %4221 = vst.msk [vmem:[%s297 + $0x70] sm:$0xff] %vm4206, %v4188
        %4222 = vst.msk [vmem:[%s297 + $0x78] sm:$0xff] %vm4206, %v4189
        %4223 = vst.msk [vmem:[%s297 + $0x80] sm:$0xff] %vm4206, %v4190
        %4224 = vst.msk [vmem:[%s297 + $0x88] sm:$0xff] %vm4206, %v4191
        %4225 = vst.msk [vmem:[%s297 + $0x90] sm:$0xff] %vm4206, %v4192
        %4226 = vst.msk [vmem:[%s297 + $0x98] sm:$0xff] %vm4206, %v4193
        %4227 = vst.msk [vmem:[%s297 + $0xa0] sm:$0xff] %vm4206, %v4194
        %4228 = vst.msk [vmem:[%s297 + $0xa8] sm:$0xff] %vm4206, %v4195
        %4229 = vst.msk [vmem:[%s297 + $0xb0] sm:$0xff] %vm4206, %v4196
        %4230 = vst.msk [vmem:[%s297 + $0xb8] sm:$0xff] %vm4206, %v4197
        %4231 = vst.msk [vmem:[%s297 + $0xc0] sm:$0xff] %vm4206, %v4198
        %4232 = vst.msk [vmem:[%s297 + $0xc8] sm:$0xff] %vm4206, %v4199
        %4233 = vst.msk [vmem:[%s297 + $0xd0] sm:$0xff] %vm4206, %v4200
        %4234 = vst.msk [vmem:[%s297 + $0xd8] sm:$0xff] %vm4206, %v4201
        %4235 = vst.msk [vmem:[%s297 + $0xe0] sm:$0xff] %vm4206, %v4202
        %4236 = vst.msk [vmem:[%s297 + $0xe8] sm:$0xff] %vm4206, %v4203
        %4237 = vst.msk [vmem:[%s297 + $0xf0] sm:$0xff] %vm4206, %v4204
        %4238 = vst.msk [vmem:[%s297 + $0xf8] sm:$0xff] %vm4206, %v4205
        %v4239 = vsel %vm4206, %v4174, 0.0
        %v4240 = vsel %vm4206, %v4175, 0.0
        %v4241 = vadd.f32 %v4239, %v4240
        %v4242 = vsel %vm4206, %v4176, 0.0
        %v4243 = vadd.f32 %v4241, %v4242
        %v4244 = vsel %vm4206, %v4177, 0.0
        %v4245 = vadd.f32 %v4243, %v4244
        %v4246 = vsel %vm4206, %v4178, 0.0
        %v4247 = vadd.f32 %v4245, %v4246
        %v4248 = vsel %vm4206, %v4179, 0.0
        %v4249 = vadd.f32 %v4247, %v4248
        %v4250 = vsel %vm4206, %v4180, 0.0
        %v4251 = vadd.f32 %v4249, %v4250
        %v4252 = vsel %vm4206, %v4181, 0.0
        %v4253 = vadd.f32 %v4251, %v4252
        %v4254 = vsel %vm4206, %v4182, 0.0
        %v4255 = vadd.f32 %v4253, %v4254
        %v4256 = vsel %vm4206, %v4183, 0.0
        %v4257 = vadd.f32 %v4255, %v4256
        %v4258 = vsel %vm4206, %v4184, 0.0
        %v4259 = vadd.f32 %v4257, %v4258
        %v4260 = vsel %vm4206, %v4185, 0.0
        %v4261 = vadd.f32 %v4259, %v4260
        %v4262 = vsel %vm4206, %v4186, 0.0
        %v4263 = vadd.f32 %v4261, %v4262
        %v4264 = vsel %vm4206, %v4187, 0.0
        %v4265 = vadd.f32 %v4263, %v4264
        %v4266 = vsel %vm4206, %v4188, 0.0
        %v4267 = vadd.f32 %v4265, %v4266
        %v4268 = vsel %vm4206, %v4189, 0.0
        %v4269 = vadd.f32 %v4267, %v4268
        %v4270 = vsel %vm4206, %v4190, 0.0
        %v4271 = vadd.f32 %v4269, %v4270
        %v4272 = vsel %vm4206, %v4191, 0.0
        %v4273 = vadd.f32 %v4271, %v4272
        %v4274 = vsel %vm4206, %v4192, 0.0
        %v4275 = vadd.f32 %v4273, %v4274
        %v4276 = vsel %vm4206, %v4193, 0.0
        %v4277 = vadd.f32 %v4275, %v4276
        %v4278 = vsel %vm4206, %v4194, 0.0
        %v4279 = vadd.f32 %v4277, %v4278
        %v4280 = vsel %vm4206, %v4195, 0.0
        %v4281 = vadd.f32 %v4279, %v4280
        %v4282 = vsel %vm4206, %v4196, 0.0
        %v4283 = vadd.f32 %v4281, %v4282
        %v4284 = vsel %vm4206, %v4197, 0.0
        %v4285 = vadd.f32 %v4283, %v4284
        %v4286 = vsel %vm4206, %v4198, 0.0
        %v4287 = vadd.f32 %v4285, %v4286
        %v4288 = vsel %vm4206, %v4199, 0.0
        %v4289 = vadd.f32 %v4287, %v4288
        %v4290 = vsel %vm4206, %v4200, 0.0
        %v4291 = vadd.f32 %v4289, %v4290
        %v4292 = vsel %vm4206, %v4201, 0.0
        %v4293 = vadd.f32 %v4291, %v4292
        %v4294 = vsel %vm4206, %v4202, 0.0
        %v4295 = vadd.f32 %v4293, %v4294
        %v4296 = vsel %vm4206, %v4203, 0.0
        %v4297 = vadd.f32 %v4295, %v4296
        %v4298 = vsel %vm4206, %v4204, 0.0
        %v4299 = vadd.f32 %v4297, %v4298
        %v4300 = vsel %vm4206, %v4205, 0.0
        %v4301 = vadd.f32 %v4299, %v4300
        %v4302 = vrot.slane %v4301, 4
        %v4303 = vadd.f32 %v4301, %v4302
        %v4304 = vrot.slane %v4303, 2
        %v4305 = vadd.f32 %v4303, %v4304
        %v4306 = vrot.slane %v4305, 1
        %v4307 = vadd.f32 %v4305, %v4306
        %vm4308 = vcmask 57344
        %4309 = vst.msk [vmem:[%s281] sm:$0x1] %vm4308, %v4307
        %v4310 = vmul.f32 %v4174, %v4174
        %v4311 = vmul.f32 %v4175, %v4175
        %v4312 = vmul.f32 %v4176, %v4176
        %v4313 = vmul.f32 %v4177, %v4177
        %v4314 = vmul.f32 %v4178, %v4178
        %v4315 = vmul.f32 %v4179, %v4179
        %v4316 = vmul.f32 %v4180, %v4180
        %v4317 = vmul.f32 %v4181, %v4181
        %v4318 = vmul.f32 %v4182, %v4182
        %v4319 = vmul.f32 %v4183, %v4183
        %v4320 = vmul.f32 %v4184, %v4184
        %v4321 = vmul.f32 %v4185, %v4185
        %v4322 = vmul.f32 %v4186, %v4186
        %v4323 = vmul.f32 %v4187, %v4187
        %v4324 = vmul.f32 %v4188, %v4188
        %v4325 = vmul.f32 %v4189, %v4189
        %v4326 = vmul.f32 %v4190, %v4190
        %v4327 = vmul.f32 %v4191, %v4191
        %v4328 = vmul.f32 %v4192, %v4192
        %v4329 = vmul.f32 %v4193, %v4193
        %v4330 = vmul.f32 %v4194, %v4194
        %v4331 = vmul.f32 %v4195, %v4195
        %v4332 = vmul.f32 %v4196, %v4196
        %v4333 = vmul.f32 %v4197, %v4197
        %v4334 = vmul.f32 %v4198, %v4198
        %v4335 = vmul.f32 %v4199, %v4199
        %v4336 = vmul.f32 %v4200, %v4200
        %v4337 = vmul.f32 %v4201, %v4201
        %v4338 = vmul.f32 %v4202, %v4202
        %v4339 = vmul.f32 %v4203, %v4203
        %v4340 = vmul.f32 %v4204, %v4204
        %v4341 = vmul.f32 %v4205, %v4205
        %v4342 = vsel %vm4206, %v4310, 0.0
        %v4343 = vsel %vm4206, %v4311, 0.0
        %v4344 = vadd.f32 %v4342, %v4343
        %v4345 = vsel %vm4206, %v4312, 0.0
        %v4346 = vadd.f32 %v4344, %v4345
        %v4347 = vsel %vm4206, %v4313, 0.0
        %v4348 = vadd.f32 %v4346, %v4347
        %v4349 = vsel %vm4206, %v4314, 0.0
        %v4350 = vadd.f32 %v4348, %v4349
        %v4351 = vsel %vm4206, %v4315, 0.0
        %v4352 = vadd.f32 %v4350, %v4351
        %v4353 = vsel %vm4206, %v4316, 0.0
        %v4354 = vadd.f32 %v4352, %v4353
        %v4355 = vsel %vm4206, %v4317, 0.0
        %v4356 = vadd.f32 %v4354, %v4355
        %v4357 = vsel %vm4206, %v4318, 0.0
        %v4358 = vadd.f32 %v4356, %v4357
        %v4359 = vsel %vm4206, %v4319, 0.0
        %v4360 = vadd.f32 %v4358, %v4359
        %v4361 = vsel %vm4206, %v4320, 0.0
        %v4362 = vadd.f32 %v4360, %v4361
        %v4363 = vsel %vm4206, %v4321, 0.0
        %v4364 = vadd.f32 %v4362, %v4363
        %v4365 = vsel %vm4206, %v4322, 0.0
        %v4366 = vadd.f32 %v4364, %v4365
        %v4367 = vsel %vm4206, %v4323, 0.0
        %v4368 = vadd.f32 %v4366, %v4367
        %v4369 = vsel %vm4206, %v4324, 0.0
        %v4370 = vadd.f32 %v4368, %v4369
        %v4371 = vsel %vm4206, %v4325, 0.0
        %v4372 = vadd.f32 %v4370, %v4371
        %v4373 = vsel %vm4206, %v4326, 0.0
        %v4374 = vadd.f32 %v4372, %v4373
        %v4375 = vsel %vm4206, %v4327, 0.0
        %v4376 = vadd.f32 %v4374, %v4375
        %v4377 = vsel %vm4206, %v4328, 0.0
        %v4378 = vadd.f32 %v4376, %v4377
        %v4379 = vsel %vm4206, %v4329, 0.0
        %v4380 = vadd.f32 %v4378, %v4379
        %v4381 = vsel %vm4206, %v4330, 0.0
        %v4382 = vadd.f32 %v4380, %v4381
        %v4383 = vsel %vm4206, %v4331, 0.0
        %v4384 = vadd.f32 %v4382, %v4383
        %v4385 = vsel %vm4206, %v4332, 0.0
        %v4386 = vadd.f32 %v4384, %v4385
        %v4387 = vsel %vm4206, %v4333, 0.0
        %v4388 = vadd.f32 %v4386, %v4387
        %v4389 = vsel %vm4206, %v4334, 0.0
        %v4390 = vadd.f32 %v4388, %v4389
        %v4391 = vsel %vm4206, %v4335, 0.0
        %v4392 = vadd.f32 %v4390, %v4391
        %v4393 = vsel %vm4206, %v4336, 0.0
        %v4394 = vadd.f32 %v4392, %v4393
        %v4395 = vsel %vm4206, %v4337, 0.0
        %v4396 = vadd.f32 %v4394, %v4395
        %v4397 = vsel %vm4206, %v4338, 0.0
        %v4398 = vadd.f32 %v4396, %v4397
        %v4399 = vsel %vm4206, %v4339, 0.0
        %v4400 = vadd.f32 %v4398, %v4399
        %v4401 = vsel %vm4206, %v4340, 0.0
        %v4402 = vadd.f32 %v4400, %v4401
        %v4403 = vsel %vm4206, %v4341, 0.0
        %v4404 = vadd.f32 %v4402, %v4403
        %v4405 = vrot.slane %v4404, 4
        %v4406 = vadd.f32 %v4404, %v4405
        %v4407 = vrot.slane %v4406, 2
        %v4408 = vadd.f32 %v4406, %v4407
        %v4409 = vrot.slane %v4408, 1
        %v4410 = vadd.f32 %v4408, %v4409
        %4411 = vst.msk [vmem:[%s287] sm:$0x1] %vm4308, %v4410
        %p4412 = scmp.lt.s32.totalorder %s25, 1
        %s4413 = scalar_select %p4412, %s25, 1
        %s4414 = smul.addr %s4413, 32
        %s4415 = smul.addr %s4414, 8
        %s4416 = scalar_lea.vmem %s5, %s4415
        %s4417 = sand.u32 %s169, 1
        %s4418 = scalar_lea.sflag [#allocation3], %s4417
        %s4419 = sand.u32 %s169, 1
        %s4420 = scalar_lea.vmem [#allocation2], %s4419
        %s4421 = sand.u32 %s195, 1
        %s4422 = scalar_lea.sflag [#allocation5], %s4421
        %s4423 = sand.u32 %s195, 1
        %s4424 = scalar_lea.vmem [#allocation4], %s4423
        // Predicated region
        $region41: #{tpu_custom_call.1} parent=39 // pred_check
          %p4425 = pneg %p153
        $region42: #{tpu_custom_call.1} parent=39 // pred_check_branch
          %4427 = sbr.rel (%p4425) target = $region44
        $region43: #{tpu_custom_call.1} parent=39 // pred_region
          _
        $region44: #{tpu_custom_call.1} parent=39 // pred_fallthru
          _
        // Predicated region
        $region45: #{tpu_custom_call.1} parent=39 // pred_check
          %p4428 = pneg %p179
        $region46: #{tpu_custom_call.1} parent=39 // pred_check_branch
          %4430 = sbr.rel (%p4428) target = $region48
        $region47: #{tpu_custom_call.1} parent=39 // pred_region
          %s4432 = ssub.s32 16, 16
          %4433 = vsyncadd %s4418, %s4432
          %s4434 = smul.addr %s25, 16
          %s4435 = scalar_lea.hbm %s6, %s4434
          %s4437 = sshll.u32 %s4420, 4
          %s4438 = int_to_ptr.vmem [resolvable:$true] %s4437
          %4440 = dma.vmem_to_hbm [thread:$0]  %s4438, 16, %s4435, %s4418
        $region48: #{tpu_custom_call.1} parent=39 // pred_fallthru
          _
        // Predicated region
        $region49: #{tpu_custom_call.1} parent=39 // pred_check
          %p4441 = pneg %p205
        $region50: #{tpu_custom_call.1} parent=39 // pred_check_branch
          %4443 = sbr.rel (%p4441) target = $region52
        $region51: #{tpu_custom_call.1} parent=39 // pred_region
          %s4445 = ssub.s32 16, 16
          %4446 = vsyncadd %s4422, %s4445
          %s4447 = smul.addr %s25, 16
          %s4448 = scalar_lea.hbm %s7, %s4447
          %s4450 = sshll.u32 %s4424, 4
          %s4451 = int_to_ptr.vmem [resolvable:$true] %s4450
          %4453 = dma.vmem_to_hbm [thread:$0]  %s4451, 16, %s4448, %s4422
        $region52: #{tpu_custom_call.1} parent=39 // pred_fallthru
          _
      $region40: #{tpu_custom_call.1} parent=5 // pred_fallthru
        _
      %p4454 = scmp.le.s32.totalorder 2, %s20
      // Predicated region
      $region53: #{tpu_custom_call.1} parent=5 // pred_check
        %p4455 = pneg %p4454
      $region54: #{tpu_custom_call.1} parent=5 // pred_check_branch
        %4457 = sbr.rel (%p4455) target = $region56
      $region55: #{tpu_custom_call.1} parent=5 // pred_region
        %s4458 = ssub.s32 %s20, 2
        // Predicated region
        $region57: #{tpu_custom_call.1} parent=55 // pred_check
          %p4459 = pneg %p159
        $region58: #{tpu_custom_call.1} parent=55 // pred_check_branch
          %4461 = sbr.rel (%p4459) target = $region60
        $region59: #{tpu_custom_call.1} parent=55 // pred_region
          %p4462 = scmp.lt.s32.totalorder %s26, 1
          %s4463 = scalar_select %p4462, %s26, 1
          %s4464 = smul.addr %s4463, 32
          %s4465 = smul.addr %s4464, 8
          %s4466 = scalar_lea.vmem %s5, %s4465
        $region60: #{tpu_custom_call.1} parent=55 // pred_fallthru
          _
        // Predicated region
        $region61: #{tpu_custom_call.1} parent=55 // pred_check
          %p4467 = pneg %p185
        $region62: #{tpu_custom_call.1} parent=55 // pred_check_branch
          %4469 = sbr.rel (%p4467) target = $region64
        $region63: #{tpu_custom_call.1} parent=55 // pred_region
          %s4470 = sand.u32 %s170, 1
          %s4471 = scalar_lea.sflag [#allocation3], %s4470
          %s4472 = sand.u32 %s170, 1
          %s4473 = scalar_lea.vmem [#allocation2], %s4472
          %4474 = dma.done %s4471, 16
        $region64: #{tpu_custom_call.1} parent=55 // pred_fallthru
          _
        // Predicated region
        $region65: #{tpu_custom_call.1} parent=55 // pred_check
          %p4475 = pneg %p211
        $region66: #{tpu_custom_call.1} parent=55 // pred_check_branch
          %4477 = sbr.rel (%p4475) target = $region68
        $region67: #{tpu_custom_call.1} parent=55 // pred_region
          %s4478 = sand.u32 %s196, 1
          %s4479 = scalar_lea.sflag [#allocation5], %s4478
          %s4480 = sand.u32 %s196, 1
          %s4481 = scalar_lea.vmem [#allocation4], %s4480
          %4482 = dma.done %s4479, 16
        $region68: #{tpu_custom_call.1} parent=55 // pred_fallthru
          _
      $region56: #{tpu_custom_call.1} parent=5 // pred_fallthru
        _
    $region6: #{tpu_custom_call.1} parent=1 // loop_footer
      %s24 = sadd.s32 1, %s20
    $region7: #{tpu_custom_call.1} parent=1 // loop_footer_branch
      %19 = sbr.rel target = $region3
    $region8: #{tpu_custom_call.1} parent=1 // loop_exit
      _
    %4483 = vsyncpa [#allocation3], 1
    %s4484 = scalar_lea.sflag [#allocation3], 1
    %4485 = vsyncpa %s4484, 1
    %4486 = vsyncpa [#allocation5], 1
    %s4487 = scalar_lea.sflag [#allocation5], 1
    %4488 = vsyncpa %s4487, 1

</llo_original>
